<compile_context>
chip_gen: v7x
topology: tpu7x:2x2x1
jax: 0.10.0
libtpu: 0.0.40
codegen_flags: <defaults>
</compile_context>

<pallas_src>
import jax
import jax.numpy as jnp
from jax import lax
from jax.experimental import pallas as pl
from jax.experimental.pallas import tpu as pltpu

BN_EPS = 1e-5


def _make_basic_block_kernel(H, W, Wp, M, C):
    """One grid step handles M = images_per_step * H * Wp flattened rows."""

    def kernel(x_ref, yrow_ref, xcol_ref, w1_ref, s1_ref, b1_ref,
               w2_ref, s2_ref, b2_ref, o_ref, col_ref):
        f32 = jnp.float32
        x = x_ref[...].astype(f32)          # (M, C): conv1 input + residual
        yi = yrow_ref[...]                  # (M, 1) int32: row index within image
        xi = xcol_ref[...]                  # (M, 1) int32: column index within row

        # "SAME"-padding boundary masks; they also kill the circular-wrap rows
        # introduced by the rolls below (wrap rows are exactly boundary rows).
        m_top = yi >= 1                     # a row above exists    (dy = -1)
        m_bot = yi < (H - 1)                # a row below exists    (dy = +1)
        m_left = xi >= 1                    # a column to the left  (dx = -1)
        m_right = xi < (Wp - 1)             # a column to the right (dx = +1)

        def conv3x3(act_f32, w_ref):
            # im2col: stage the 9 shifted windows side-by-side along lanes (bf16),
            # then one MXU dot with contraction depth 9*C.
            k = 0
            for dy in (-1, 0, 1):
                for dx in (-1, 0, 1):
                    s = dy * Wp + dx        # window[r] = act[r + s]
                    win = act_f32 if s == 0 else pltpu.roll(
                        act_f32, shift=(-s) % M, axis=0)
                    mask = None
                    if dy == -1:
                        mask = m_top
                    elif dy == 1:
                        mask = m_bot
                    if dx == -1:
                        mask = m_left if mask is None else (mask & m_left)
                    elif dx == 1:
                        mask = m_right if mask is None else (mask & m_right)
                    if mask is not None:
                        win = jnp.where(mask, win, 0.0)
                    col_ref[:, k * C:(k + 1) * C] = win.astype(jnp.bfloat16)
                    k += 1
            return jnp.dot(col_ref[...], w_ref[...], preferred_element_type=f32)

        # conv1 -> folded BN1 (eval) -> ReLU
        h = conv3x3(x, w1_ref)
        h = jnp.maximum(h * s1_ref[...] + b1_ref[...], 0.0)
        if Wp > W:                          # keep width-pad columns zero for conv2
            h = jnp.where(xi < W, h, 0.0)

        # conv2 -> folded BN2 (eval)
        y = conv3x3(h, w2_ref)
        y = y * s2_ref[...] + b2_ref[...]

        # residual add (stride=1, downsample=None) + final ReLU
        o_ref[...] = jnp.maximum(y + x, 0.0).astype(o_ref.dtype)

    return kernel


def _images_per_step(B, HWp):
    """Images stacked along the matmul M axis per grid step: big enough to
    amortize per-step pipeline overhead, but keep >= 2 grid steps when we can
    afford it (v7x megacore)."""
    best = 1
    for d in range(1, B + 1):
        if B % d:
            continue
        if d * HWp > 4096:                  # keep the per-step block modest (v7x VMEM)
            break
        if d * HWp >= 512:
            if (B // d) < 2 and best * HWp >= 256:
                return best
            return d
        best = d
    return best


@jax.jit
def basic_block(x_nchw, params):
    """BasicBlock forward (eval-mode BN, stride=1, downsample=None).
    x_nchw: [B, C, H, W] -> [B, C, H, W]."""
    w1, s1, b1, w2, s2, b2 = params
    B, Cin, H, W = x_nchw.shape
    Cout = w1.shape[1]
    assert Cin == Cout, "downsample=None requires in_channels == out_channels"
    assert w1.shape[0] == 9 * Cin and w2.shape[0] == 9 * Cout

    Wp = int(8 * pl.cdiv(W, 8))             # row stride multiple of 8 -> aligned dy shifts
    HWp = H * Wp
    Bb = _images_per_step(B, HWp)
    M = Bb * HWp

    # NCHW -> channels-last, width zero-padded to Wp, spatial flattened to rows,
    # activations stored bf16 (halves HBM<->VMEM traffic).  No halo rows: "SAME"
    # zero padding is handled entirely by the in-kernel masks.
    x_rows = jnp.transpose(x_nchw, (0, 2, 3, 1))
    if Wp != W:
        x_rows = jnp.pad(x_rows, ((0, 0), (0, 0), (0, Wp - W), (0, 0)))
    x_rows = x_rows.reshape(B * HWp, Cin).astype(jnp.bfloat16)

    # Per-row image coordinates.  The pattern is identical for every grid block
    # (blocks always hold whole images) -> constant index_map, fetched once.
    flat = jnp.arange(M, dtype=jnp.int32)
    y_idx = ((flat % HWp) // Wp).reshape(M, 1)
    x_idx = (flat % Wp).reshape(M, 1)

    def const_spec(shape):
        zeros = (0,) * len(shape)
        return pl.BlockSpec(shape, lambda i: zeros)

    out = pl.pallas_call(
        _make_basic_block_kernel(H, W, Wp, M, Cout),
        out_shape=jax.ShapeDtypeStruct((B * HWp, Cout), x_nchw.dtype),
        grid=(B // Bb,),
        in_specs=[
            pl.BlockSpec((M, Cin), lambda i: (i, 0)),   # activation rows (bf16)
            const_spec((M, 1)),                         # image row index
            const_spec((M, 1)),                         # image column index
            const_spec((9 * Cin, Cout)),                # conv1 weight, im2col-packed bf16
            const_spec((1, Cout)),                      # BN1 scale (folded)
            const_spec((1, Cout)),                      # BN1 bias
            const_spec((9 * Cout, Cout)),               # conv2 weight, im2col-packed bf16
            const_spec((1, Cout)),                      # BN2 scale
            const_spec((1, Cout)),                      # BN2 bias
        ],
        out_specs=pl.BlockSpec((M, Cout), lambda i: (i, 0)),
        scratch_shapes=[pltpu.VMEM((M, 9 * Cout), jnp.bfloat16)],  # shared im2col buffer
        compiler_params=pltpu.CompilerParams(
            dimension_semantics=("parallel",),          # independent row blocks
            vmem_limit_bytes=32 * 1024 * 1024),
    )(x_rows, y_idx, x_idx, w1, s1, b1, w2, s2, b2)

    out = out.reshape(B, H, Wp, Cout)[:, :, :W, :]
    return jnp.transpose(out, (0, 3, 1, 2))


# ------------------------- parameters / reference --------------------------------

def init_raw_params(key, c):
    """Deterministic conv weights (HWIO, f32) and BatchNorm eval-mode statistics."""
    ks = jax.random.split(key, 10)
    std = jnp.sqrt(2.0 / (9 * c))
    w1 = (jax.random.normal(ks[0], (3, 3, c, c)) * std).astype(jnp.float32)
    w2 = (jax.random.normal(ks[1], (3, 3, c, c)) * std).astype(jnp.float32)
    bn1 = (1.0 + 0.1 * jax.random.normal(ks[2], (c,)),   # gamma
           0.1 * jax.random.normal(ks[3], (c,)),         # beta
           0.1 * jax.random.normal(ks[4], (c,)),         # running mean
           0.5 + jax.random.uniform(ks[5], (c,)))        # running var
    bn2 = (1.0 + 0.1 * jax.random.normal(ks[6], (c,)),
           0.1 * jax.random.normal(ks[7], (c,)),
           0.1 * jax.random.normal(ks[8], (c,)),
           0.5 + jax.random.uniform(ks[9], (c,)))
    return w1, bn1, w2, bn2


def _fold_bn(bn):
    gamma, beta, mean, var = bn
    scale = gamma / jnp.sqrt(var + BN_EPS)
    bias = beta - mean * scale
    return (scale.reshape(1, -1).astype(jnp.float32),
            bias.reshape(1, -1).astype(jnp.float32))


def pack_kernel_params(raw):
    """Fold eval-mode BN into scale/bias; pack conv weights to (9*Cin, Cout) bf16
    matching the kernel's im2col lane order (ky-major, kx, then input channel)."""
    w1, bn1, w2, bn2 = raw
    s1, b1 = _fold_bn(bn1)
    s2, b2 = _fold_bn(bn2)
    cin, cout = w1.shape[2], w1.shape[3]
    w1p = w1.reshape(9 * cin, cout).astype(jnp.bfloat16)
    w2p = w2.reshape(9 * cout, cout).astype(jnp.bfloat16)
    return (w1p, s1, b1, w2p, s2, b2)


def reference_basic_block(x_nchw, raw):
    """Pure-JAX f32 reference matching PyTorch BasicBlock.forward (eval mode)."""
    w1, bn1, w2, bn2 = raw
    dn = ('NHWC', 'HWIO', 'NHWC')
    pad = ((1, 1), (1, 1))
    x = jnp.transpose(x_nchw, (0, 2, 3, 1)).astype(jnp.float32)

    def bn(y, p):
        gamma, beta, mean, var = p
        return (y - mean) / jnp.sqrt(var + BN_EPS) * gamma + beta

    y = lax.conv_general_dilated(x, w1, (1, 1), pad, dimension_numbers=dn)
    y = jnp.maximum(bn(y, bn1), 0.0)
    y = lax.conv_general_dilated(y, w2, (1, 1), pad, dimension_numbers=dn)
    y = jnp.maximum(bn(y, bn2) + x, 0.0)
    return jnp.transpose(y, (0, 3, 1, 2))


if __name__ == "__main__":
    B, C, H, W = 2, 8, 16, 16

    key = jax.random.PRNGKey(0)
    kx, kp = jax.random.split(key)
    x = jax.random.normal(kx, (B, C, H, W), jnp.float32)

    raw = init_raw_params(kp, C)
    params = pack_kernel_params(raw)

    out = basic_block(x, params)
    out = jax.block_until_ready(out)

    ref = reference_basic_block(x, raw)
    assert out.shape == (B, C, H, W)
    # bf16 MXU operands / bf16-stored activations vs f32 reference -> loose tolerance.
    max_err = float(jnp.max(jnp.abs(out - ref)))
    assert jnp.allclose(out, ref, atol=5e-2, rtol=5e-2), f"mismatch, max abs err={max_err}"

    print("KERNEL_OK")
</pallas_src>

<mosaic_0001>
module attributes {stable_mosaic.version = 11 : i64} {
  func.func @kernel(%arg0: i32, %arg1: memref<256x8xbf16, #tpu.memory_space<vmem>>, %arg2: memref<256x1xi32, #tpu.memory_space<vmem>>, %arg3: memref<256x1xi32, #tpu.memory_space<vmem>>, %arg4: memref<72x8xbf16, #tpu.memory_space<vmem>>, %arg5: memref<1x8xf32, #tpu.memory_space<vmem>>, %arg6: memref<1x8xf32, #tpu.memory_space<vmem>>, %arg7: memref<72x8xbf16, #tpu.memory_space<vmem>>, %arg8: memref<1x8xf32, #tpu.memory_space<vmem>>, %arg9: memref<1x8xf32, #tpu.memory_space<vmem>>, %arg10: memref<256x8xf32, #tpu.memory_space<vmem>>, %arg11: memref<256x72xbf16, #tpu.memory_space<vmem>>) attributes {dimension_semantics = [#tpu.dimension_semantics<parallel>], iteration_bounds = array<i64: 2>, scalar_prefetch = 0 : i64, scratch_operands = 1 : i64, tpu.core_type = #tpu.core_type<tc>, window_params = [{transform_indices = @transform_0, window_bounds = array<i64: 256, 8>}, {pipeline_mode = #tpu.pipeline_mode<synchronous>, transform_indices = @transform_1, window_bounds = array<i64: 256, 1>}, {pipeline_mode = #tpu.pipeline_mode<synchronous>, transform_indices = @transform_2, window_bounds = array<i64: 256, 1>}, {pipeline_mode = #tpu.pipeline_mode<synchronous>, transform_indices = @transform_3, window_bounds = array<i64: 72, 8>}, {pipeline_mode = #tpu.pipeline_mode<synchronous>, transform_indices = @transform_4, window_bounds = array<i64: 1, 8>}, {pipeline_mode = #tpu.pipeline_mode<synchronous>, transform_indices = @transform_5, window_bounds = array<i64: 1, 8>}, {pipeline_mode = #tpu.pipeline_mode<synchronous>, transform_indices = @transform_6, window_bounds = array<i64: 72, 8>}, {pipeline_mode = #tpu.pipeline_mode<synchronous>, transform_indices = @transform_7, window_bounds = array<i64: 1, 8>}, {pipeline_mode = #tpu.pipeline_mode<synchronous>, transform_indices = @transform_8, window_bounds = array<i64: 1, 8>}, {transform_indices = @transform_9, window_bounds = array<i64: 256, 8>}]} {
    %c0 = arith.constant 0 : index
    %c0_0 = arith.constant 0 : index
    %0 = vector.load %arg1[%c0, %c0_0] : memref<256x8xbf16, #tpu.memory_space<vmem>>, vector<256x8xbf16>
    %1 = arith.extf %0 : vector<256x8xbf16> to vector<256x8xf32>
    %c0_1 = arith.constant 0 : index
    %c0_2 = arith.constant 0 : index
    %2 = vector.load %arg2[%c0_1, %c0_2] : memref<256x1xi32, #tpu.memory_space<vmem>>, vector<256x1xi32>
    %c0_3 = arith.constant 0 : index
    %c0_4 = arith.constant 0 : index
    %3 = vector.load %arg3[%c0_3, %c0_4] : memref<256x1xi32, #tpu.memory_space<vmem>>, vector<256x1xi32>
    %c1_i32 = arith.constant 1 : i32
    %4 = vector.broadcast %c1_i32 : i32 to vector<256x1xi32>
    %5 = arith.cmpi sge, %2, %4 : vector<256x1xi32>
    %c15_i32 = arith.constant 15 : i32
    %6 = vector.broadcast %c15_i32 : i32 to vector<256x1xi32>
    %7 = arith.cmpi slt, %2, %6 : vector<256x1xi32>
    %c1_i32_5 = arith.constant 1 : i32
    %8 = vector.broadcast %c1_i32_5 : i32 to vector<256x1xi32>
    %9 = arith.cmpi sge, %3, %8 : vector<256x1xi32>
    %c15_i32_6 = arith.constant 15 : i32
    %10 = vector.broadcast %c15_i32_6 : i32 to vector<256x1xi32>
    %11 = arith.cmpi slt, %3, %10 : vector<256x1xi32>
    %c17_i32 = arith.constant 17 : i32
    %12 = tpu.dynamic_rotate %1 by %c17_i32 dim 0 : vector<256x8xf32>, i32 -> vector<256x8xf32>
    %13 = arith.andi %5, %9 : vector<256x1xi1>
    %cst = arith.constant 0.000000e+00 : f32
    %14 = vector.shape_cast %13 : vector<256x1xi1> to vector<256x1xi1>
    %15 = vector.broadcast %14 : vector<256x1xi1> to vector<256x8xi1>
    %16 = vector.broadcast %cst : f32 to vector<256x8xf32>
    %17 = arith.select %15, %12, %16 : vector<256x8xi1>, vector<256x8xf32>
    %18 = arith.truncf %17 : vector<256x8xf32> to vector<256x8xbf16>
    %c0_7 = arith.constant 0 : index
    %c0_8 = arith.constant 0 : index
    %19 = vector.load %arg11[%c0_7, %c0_8] : memref<256x72xbf16, #tpu.memory_space<vmem>>, vector<256x8xbf16>
    tpu.vector_store %arg11[%c0_7, %c0_8], %18 {strides = array<i32>} : memref<256x72xbf16, #tpu.memory_space<vmem>>, vector<256x8xbf16>,
    %c16_i32 = arith.constant 16 : i32
    %20 = tpu.dynamic_rotate %1 by %c16_i32 dim 0 : vector<256x8xf32>, i32 -> vector<256x8xf32>
    %cst_9 = arith.constant 0.000000e+00 : f32
    %21 = vector.shape_cast %5 : vector<256x1xi1> to vector<256x1xi1>
    %22 = vector.broadcast %21 : vector<256x1xi1> to vector<256x8xi1>
    %23 = vector.broadcast %cst_9 : f32 to vector<256x8xf32>
    %24 = arith.select %22, %20, %23 : vector<256x8xi1>, vector<256x8xf32>
    %25 = arith.truncf %24 : vector<256x8xf32> to vector<256x8xbf16>
    %c0_10 = arith.constant 0 : index
    %c8 = arith.constant 8 : index
    %26 = vector.load %arg11[%c0_10, %c8] : memref<256x72xbf16, #tpu.memory_space<vmem>>, vector<256x8xbf16>
    tpu.vector_store %arg11[%c0_10, %c8], %25 {strides = array<i32>} : memref<256x72xbf16, #tpu.memory_space<vmem>>, vector<256x8xbf16>,
    %c15_i32_11 = arith.constant 15 : i32
    %27 = tpu.dynamic_rotate %1 by %c15_i32_11 dim 0 : vector<256x8xf32>, i32 -> vector<256x8xf32>
    %28 = arith.andi %5, %11 : vector<256x1xi1>
    %cst_12 = arith.constant 0.000000e+00 : f32
    %29 = vector.shape_cast %28 : vector<256x1xi1> to vector<256x1xi1>
    %30 = vector.broadcast %29 : vector<256x1xi1> to vector<256x8xi1>
    %31 = vector.broadcast %cst_12 : f32 to vector<256x8xf32>
    %32 = arith.select %30, %27, %31 : vector<256x8xi1>, vector<256x8xf32>
    %33 = arith.truncf %32 : vector<256x8xf32> to vector<256x8xbf16>
    %c0_13 = arith.constant 0 : index
    %c16 = arith.constant 16 : index
    %34 = vector.load %arg11[%c0_13, %c16] : memref<256x72xbf16, #tpu.memory_space<vmem>>, vector<256x8xbf16>
    tpu.vector_store %arg11[%c0_13, %c16], %33 {strides = array<i32>} : memref<256x72xbf16, #tpu.memory_space<vmem>>, vector<256x8xbf16>,
    %c1_i32_14 = arith.constant 1 : i32
    %35 = tpu.dynamic_rotate %1 by %c1_i32_14 dim 0 : vector<256x8xf32>, i32 -> vector<256x8xf32>
    %cst_15 = arith.constant 0.000000e+00 : f32
    %36 = vector.shape_cast %9 : vector<256x1xi1> to vector<256x1xi1>
    %37 = vector.broadcast %36 : vector<256x1xi1> to vector<256x8xi1>
    %38 = vector.broadcast %cst_15 : f32 to vector<256x8xf32>
    %39 = arith.select %37, %35, %38 : vector<256x8xi1>, vector<256x8xf32>
    %40 = arith.truncf %39 : vector<256x8xf32> to vector<256x8xbf16>
    %c0_16 = arith.constant 0 : index
    %c24 = arith.constant 24 : index
    %41 = vector.load %arg11[%c0_16, %c24] : memref<256x72xbf16, #tpu.memory_space<vmem>>, vector<256x8xbf16>
    tpu.vector_store %arg11[%c0_16, %c24], %40 {strides = array<i32>} : memref<256x72xbf16, #tpu.memory_space<vmem>>, vector<256x8xbf16>,
    %42 = arith.truncf %1 : vector<256x8xf32> to vector<256x8xbf16>
    %c0_17 = arith.constant 0 : index
    %c32 = arith.constant 32 : index
    %43 = vector.load %arg11[%c0_17, %c32] : memref<256x72xbf16, #tpu.memory_space<vmem>>, vector<256x8xbf16>
    tpu.vector_store %arg11[%c0_17, %c32], %42 {strides = array<i32>} : memref<256x72xbf16, #tpu.memory_space<vmem>>, vector<256x8xbf16>,
    %c255_i32 = arith.constant 255 : i32
    %44 = tpu.dynamic_rotate %1 by %c255_i32 dim 0 : vector<256x8xf32>, i32 -> vector<256x8xf32>
    %cst_18 = arith.constant 0.000000e+00 : f32
    %45 = vector.shape_cast %11 : vector<256x1xi1> to vector<256x1xi1>
    %46 = vector.broadcast %45 : vector<256x1xi1> to vector<256x8xi1>
    %47 = vector.broadcast %cst_18 : f32 to vector<256x8xf32>
    %48 = arith.select %46, %44, %47 : vector<256x8xi1>, vector<256x8xf32>
    %49 = arith.truncf %48 : vector<256x8xf32> to vector<256x8xbf16>
    %c0_19 = arith.constant 0 : index
    %c40 = arith.constant 40 : index
    %50 = vector.load %arg11[%c0_19, %c40] : memref<256x72xbf16, #tpu.memory_space<vmem>>, vector<256x8xbf16>
    tpu.vector_store %arg11[%c0_19, %c40], %49 {strides = array<i32>} : memref<256x72xbf16, #tpu.memory_space<vmem>>, vector<256x8xbf16>,
    %c241_i32 = arith.constant 241 : i32
    %51 = tpu.dynamic_rotate %1 by %c241_i32 dim 0 : vector<256x8xf32>, i32 -> vector<256x8xf32>
    %52 = arith.andi %7, %9 : vector<256x1xi1>
    %cst_20 = arith.constant 0.000000e+00 : f32
    %53 = vector.shape_cast %52 : vector<256x1xi1> to vector<256x1xi1>
    %54 = vector.broadcast %53 : vector<256x1xi1> to vector<256x8xi1>
    %55 = vector.broadcast %cst_20 : f32 to vector<256x8xf32>
    %56 = arith.select %54, %51, %55 : vector<256x8xi1>, vector<256x8xf32>
    %57 = arith.truncf %56 : vector<256x8xf32> to vector<256x8xbf16>
    %c0_21 = arith.constant 0 : index
    %c48 = arith.constant 48 : index
    %58 = vector.load %arg11[%c0_21, %c48] : memref<256x72xbf16, #tpu.memory_space<vmem>>, vector<256x8xbf16>
    tpu.vector_store %arg11[%c0_21, %c48], %57 {strides = array<i32>} : memref<256x72xbf16, #tpu.memory_space<vmem>>, vector<256x8xbf16>,
    %c240_i32 = arith.constant 240 : i32
    %59 = tpu.dynamic_rotate %1 by %c240_i32 dim 0 : vector<256x8xf32>, i32 -> vector<256x8xf32>
    %cst_22 = arith.constant 0.000000e+00 : f32
    %60 = vector.shape_cast %7 : vector<256x1xi1> to vector<256x1xi1>
    %61 = vector.broadcast %60 : vector<256x1xi1> to vector<256x8xi1>
    %62 = vector.broadcast %cst_22 : f32 to vector<256x8xf32>
    %63 = arith.select %61, %59, %62 : vector<256x8xi1>, vector<256x8xf32>
    %64 = arith.truncf %63 : vector<256x8xf32> to vector<256x8xbf16>
    %c0_23 = arith.constant 0 : index
    %c56 = arith.constant 56 : index
    %65 = vector.load %arg11[%c0_23, %c56] : memref<256x72xbf16, #tpu.memory_space<vmem>>, vector<256x8xbf16>
    tpu.vector_store %arg11[%c0_23, %c56], %64 {strides = array<i32>} : memref<256x72xbf16, #tpu.memory_space<vmem>>, vector<256x8xbf16>,
    %c239_i32 = arith.constant 239 : i32
    %66 = tpu.dynamic_rotate %1 by %c239_i32 dim 0 : vector<256x8xf32>, i32 -> vector<256x8xf32>
    %67 = arith.andi %7, %11 : vector<256x1xi1>
    %cst_24 = arith.constant 0.000000e+00 : f32
    %68 = vector.shape_cast %67 : vector<256x1xi1> to vector<256x1xi1>
    %69 = vector.broadcast %68 : vector<256x1xi1> to vector<256x8xi1>
    %70 = vector.broadcast %cst_24 : f32 to vector<256x8xf32>
    %71 = arith.select %69, %66, %70 : vector<256x8xi1>, vector<256x8xf32>
    %72 = arith.truncf %71 : vector<256x8xf32> to vector<256x8xbf16>
    %c0_25 = arith.constant 0 : index
    %c64 = arith.constant 64 : index
    %73 = vector.load %arg11[%c0_25, %c64] : memref<256x72xbf16, #tpu.memory_space<vmem>>, vector<256x8xbf16>
    tpu.vector_store %arg11[%c0_25, %c64], %72 {strides = array<i32>} : memref<256x72xbf16, #tpu.memory_space<vmem>>, vector<256x8xbf16>,
    %c0_26 = arith.constant 0 : index
    %c0_27 = arith.constant 0 : index
    %74 = vector.load %arg11[%c0_26, %c0_27] : memref<256x72xbf16, #tpu.memory_space<vmem>>, vector<256x72xbf16>
    %c0_28 = arith.constant 0 : index
    %c0_29 = arith.constant 0 : index
    %75 = vector.load %arg4[%c0_28, %c0_29] : memref<72x8xbf16, #tpu.memory_space<vmem>>, vector<72x8xbf16>
    %cst_30 = arith.constant dense<0.000000e+00> : vector<256x8xf32>
    %76 = tpu.matmul %74, %75, %cst_30 {dimension_numbers = #tpu.dot_dimension_numbers<[1], [0], [0], [1], [0, 0, 1, 1], [], []>} : vector<256x72xbf16>, vector<72x8xbf16>, vector<256x8xf32> -> vector<256x8xf32>
    %c0_31 = arith.constant 0 : index
    %c0_32 = arith.constant 0 : index
    %77 = vector.load %arg5[%c0_31, %c0_32] : memref<1x8xf32, #tpu.memory_space<vmem>>, vector<1x8xf32>
    %78 = vector.broadcast %77 : vector<1x8xf32> to vector<256x8xf32>
    %79 = arith.mulf %76, %78 : vector<256x8xf32>
    %c0_33 = arith.constant 0 : index
    %c0_34 = arith.constant 0 : index
    %80 = vector.load %arg6[%c0_33, %c0_34] : memref<1x8xf32, #tpu.memory_space<vmem>>, vector<1x8xf32>
    %81 = vector.broadcast %80 : vector<1x8xf32> to vector<256x8xf32>
    %82 = arith.addf %79, %81 : vector<256x8xf32>
    %cst_35 = arith.constant 0.000000e+00 : f32
    %83 = vector.broadcast %cst_35 : f32 to vector<256x8xf32>
    %84 = arith.maximumf %82, %83 : vector<256x8xf32>
    %c17_i32_36 = arith.constant 17 : i32
    %85 = tpu.dynamic_rotate %84 by %c17_i32_36 dim 0 : vector<256x8xf32>, i32 -> vector<256x8xf32>
    %86 = arith.andi %5, %9 : vector<256x1xi1>
    %cst_37 = arith.constant 0.000000e+00 : f32
    %87 = vector.shape_cast %86 : vector<256x1xi1> to vector<256x1xi1>
    %88 = vector.broadcast %87 : vector<256x1xi1> to vector<256x8xi1>
    %89 = vector.broadcast %cst_37 : f32 to vector<256x8xf32>
    %90 = arith.select %88, %85, %89 : vector<256x8xi1>, vector<256x8xf32>
    %91 = arith.truncf %90 : vector<256x8xf32> to vector<256x8xbf16>
    %c0_38 = arith.constant 0 : index
    %c0_39 = arith.constant 0 : index
    %92 = vector.load %arg11[%c0_38, %c0_39] : memref<256x72xbf16, #tpu.memory_space<vmem>>, vector<256x8xbf16>
    tpu.vector_store %arg11[%c0_38, %c0_39], %91 {strides = array<i32>} : memref<256x72xbf16, #tpu.memory_space<vmem>>, vector<256x8xbf16>,
    %c16_i32_40 = arith.constant 16 : i32
    %93 = tpu.dynamic_rotate %84 by %c16_i32_40 dim 0 : vector<256x8xf32>, i32 -> vector<256x8xf32>
    %cst_41 = arith.constant 0.000000e+00 : f32
    %94 = vector.shape_cast %5 : vector<256x1xi1> to vector<256x1xi1>
    %95 = vector.broadcast %94 : vector<256x1xi1> to vector<256x8xi1>
    %96 = vector.broadcast %cst_41 : f32 to vector<256x8xf32>
    %97 = arith.select %95, %93, %96 : vector<256x8xi1>, vector<256x8xf32>
    %98 = arith.truncf %97 : vector<256x8xf32> to vector<256x8xbf16>
    %c0_42 = arith.constant 0 : index
    %c8_43 = arith.constant 8 : index
    %99 = vector.load %arg11[%c0_42, %c8_43] : memref<256x72xbf16, #tpu.memory_space<vmem>>, vector<256x8xbf16>
    tpu.vector_store %arg11[%c0_42, %c8_43], %98 {strides = array<i32>} : memref<256x72xbf16, #tpu.memory_space<vmem>>, vector<256x8xbf16>,
    %c15_i32_44 = arith.constant 15 : i32
    %100 = tpu.dynamic_rotate %84 by %c15_i32_44 dim 0 : vector<256x8xf32>, i32 -> vector<256x8xf32>
    %101 = arith.andi %5, %11 : vector<256x1xi1>
    %cst_45 = arith.constant 0.000000e+00 : f32
    %102 = vector.shape_cast %101 : vector<256x1xi1> to vector<256x1xi1>
    %103 = vector.broadcast %102 : vector<256x1xi1> to vector<256x8xi1>
    %104 = vector.broadcast %cst_45 : f32 to vector<256x8xf32>
    %105 = arith.select %103, %100, %104 : vector<256x8xi1>, vector<256x8xf32>
    %106 = arith.truncf %105 : vector<256x8xf32> to vector<256x8xbf16>
    %c0_46 = arith.constant 0 : index
    %c16_47 = arith.constant 16 : index
    %107 = vector.load %arg11[%c0_46, %c16_47] : memref<256x72xbf16, #tpu.memory_space<vmem>>, vector<256x8xbf16>
    tpu.vector_store %arg11[%c0_46, %c16_47], %106 {strides = array<i32>} : memref<256x72xbf16, #tpu.memory_space<vmem>>, vector<256x8xbf16>,
    %c1_i32_48 = arith.constant 1 : i32
    %108 = tpu.dynamic_rotate %84 by %c1_i32_48 dim 0 : vector<256x8xf32>, i32 -> vector<256x8xf32>
    %cst_49 = arith.constant 0.000000e+00 : f32
    %109 = vector.shape_cast %9 : vector<256x1xi1> to vector<256x1xi1>
    %110 = vector.broadcast %109 : vector<256x1xi1> to vector<256x8xi1>
    %111 = vector.broadcast %cst_49 : f32 to vector<256x8xf32>
    %112 = arith.select %110, %108, %111 : vector<256x8xi1>, vector<256x8xf32>
    %113 = arith.truncf %112 : vector<256x8xf32> to vector<256x8xbf16>
    %c0_50 = arith.constant 0 : index
    %c24_51 = arith.constant 24 : index
    %114 = vector.load %arg11[%c0_50, %c24_51] : memref<256x72xbf16, #tpu.memory_space<vmem>>, vector<256x8xbf16>
    tpu.vector_store %arg11[%c0_50, %c24_51], %113 {strides = array<i32>} : memref<256x72xbf16, #tpu.memory_space<vmem>>, vector<256x8xbf16>,
    %115 = arith.truncf %84 : vector<256x8xf32> to vector<256x8xbf16>
    %c0_52 = arith.constant 0 : index
    %c32_53 = arith.constant 32 : index
    %116 = vector.load %arg11[%c0_52, %c32_53] : memref<256x72xbf16, #tpu.memory_space<vmem>>, vector<256x8xbf16>
    tpu.vector_store %arg11[%c0_52, %c32_53], %115 {strides = array<i32>} : memref<256x72xbf16, #tpu.memory_space<vmem>>, vector<256x8xbf16>,
    %c255_i32_54 = arith.constant 255 : i32
    %117 = tpu.dynamic_rotate %84 by %c255_i32_54 dim 0 : vector<256x8xf32>, i32 -> vector<256x8xf32>
    %cst_55 = arith.constant 0.000000e+00 : f32
    %118 = vector.shape_cast %11 : vector<256x1xi1> to vector<256x1xi1>
    %119 = vector.broadcast %118 : vector<256x1xi1> to vector<256x8xi1>
    %120 = vector.broadcast %cst_55 : f32 to vector<256x8xf32>
    %121 = arith.select %119, %117, %120 : vector<256x8xi1>, vector<256x8xf32>
    %122 = arith.truncf %121 : vector<256x8xf32> to vector<256x8xbf16>
    %c0_56 = arith.constant 0 : index
    %c40_57 = arith.constant 40 : index
    %123 = vector.load %arg11[%c0_56, %c40_57] : memref<256x72xbf16, #tpu.memory_space<vmem>>, vector<256x8xbf16>
    tpu.vector_store %arg11[%c0_56, %c40_57], %122 {strides = array<i32>} : memref<256x72xbf16, #tpu.memory_space<vmem>>, vector<256x8xbf16>,
    %c241_i32_58 = arith.constant 241 : i32
    %124 = tpu.dynamic_rotate %84 by %c241_i32_58 dim 0 : vector<256x8xf32>, i32 -> vector<256x8xf32>
    %125 = arith.andi %7, %9 : vector<256x1xi1>
    %cst_59 = arith.constant 0.000000e+00 : f32
    %126 = vector.shape_cast %125 : vector<256x1xi1> to vector<256x1xi1>
    %127 = vector.broadcast %126 : vector<256x1xi1> to vector<256x8xi1>
    %128 = vector.broadcast %cst_59 : f32 to vector<256x8xf32>
    %129 = arith.select %127, %124, %128 : vector<256x8xi1>, vector<256x8xf32>
    %130 = arith.truncf %129 : vector<256x8xf32> to vector<256x8xbf16>
    %c0_60 = arith.constant 0 : index
    %c48_61 = arith.constant 48 : index
    %131 = vector.load %arg11[%c0_60, %c48_61] : memref<256x72xbf16, #tpu.memory_space<vmem>>, vector<256x8xbf16>
    tpu.vector_store %arg11[%c0_60, %c48_61], %130 {strides = array<i32>} : memref<256x72xbf16, #tpu.memory_space<vmem>>, vector<256x8xbf16>,
    %c240_i32_62 = arith.constant 240 : i32
    %132 = tpu.dynamic_rotate %84 by %c240_i32_62 dim 0 : vector<256x8xf32>, i32 -> vector<256x8xf32>
    %cst_63 = arith.constant 0.000000e+00 : f32
    %133 = vector.shape_cast %7 : vector<256x1xi1> to vector<256x1xi1>
    %134 = vector.broadcast %133 : vector<256x1xi1> to vector<256x8xi1>
    %135 = vector.broadcast %cst_63 : f32 to vector<256x8xf32>
    %136 = arith.select %134, %132, %135 : vector<256x8xi1>, vector<256x8xf32>
    %137 = arith.truncf %136 : vector<256x8xf32> to vector<256x8xbf16>
    %c0_64 = arith.constant 0 : index
    %c56_65 = arith.constant 56 : index
    %138 = vector.load %arg11[%c0_64, %c56_65] : memref<256x72xbf16, #tpu.memory_space<vmem>>, vector<256x8xbf16>
    tpu.vector_store %arg11[%c0_64, %c56_65], %137 {strides = array<i32>} : memref<256x72xbf16, #tpu.memory_space<vmem>>, vector<256x8xbf16>,
    %c239_i32_66 = arith.constant 239 : i32
    %139 = tpu.dynamic_rotate %84 by %c239_i32_66 dim 0 : vector<256x8xf32>, i32 -> vector<256x8xf32>
    %140 = arith.andi %7, %11 : vector<256x1xi1>
    %cst_67 = arith.constant 0.000000e+00 : f32
    %141 = vector.shape_cast %140 : vector<256x1xi1> to vector<256x1xi1>
    %142 = vector.broadcast %141 : vector<256x1xi1> to vector<256x8xi1>
    %143 = vector.broadcast %cst_67 : f32 to vector<256x8xf32>
    %144 = arith.select %142, %139, %143 : vector<256x8xi1>, vector<256x8xf32>
    %145 = arith.truncf %144 : vector<256x8xf32> to vector<256x8xbf16>
    %c0_68 = arith.constant 0 : index
    %c64_69 = arith.constant 64 : index
    %146 = vector.load %arg11[%c0_68, %c64_69] : memref<256x72xbf16, #tpu.memory_space<vmem>>, vector<256x8xbf16>
    tpu.vector_store %arg11[%c0_68, %c64_69], %145 {strides = array<i32>} : memref<256x72xbf16, #tpu.memory_space<vmem>>, vector<256x8xbf16>,
    %c0_70 = arith.constant 0 : index
    %c0_71 = arith.constant 0 : index
    %147 = vector.load %arg11[%c0_70, %c0_71] : memref<256x72xbf16, #tpu.memory_space<vmem>>, vector<256x72xbf16>
    %c0_72 = arith.constant 0 : index
    %c0_73 = arith.constant 0 : index
    %148 = vector.load %arg7[%c0_72, %c0_73] : memref<72x8xbf16, #tpu.memory_space<vmem>>, vector<72x8xbf16>
    %cst_74 = arith.constant dense<0.000000e+00> : vector<256x8xf32>
    %149 = tpu.matmul %147, %148, %cst_74 {dimension_numbers = #tpu.dot_dimension_numbers<[1], [0], [0], [1], [0, 0, 1, 1], [], []>} : vector<256x72xbf16>, vector<72x8xbf16>, vector<256x8xf32> -> vector<256x8xf32>
    %c0_75 = arith.constant 0 : index
    %c0_76 = arith.constant 0 : index
    %150 = vector.load %arg8[%c0_75, %c0_76] : memref<1x8xf32, #tpu.memory_space<vmem>>, vector<1x8xf32>
    %151 = vector.broadcast %150 : vector<1x8xf32> to vector<256x8xf32>
    %152 = arith.mulf %149, %151 : vector<256x8xf32>
    %c0_77 = arith.constant 0 : index
    %c0_78 = arith.constant 0 : index
    %153 = vector.load %arg9[%c0_77, %c0_78] : memref<1x8xf32, #tpu.memory_space<vmem>>, vector<1x8xf32>
    %154 = vector.broadcast %153 : vector<1x8xf32> to vector<256x8xf32>
    %155 = arith.addf %152, %154 : vector<256x8xf32>
    %156 = arith.addf %155, %1 : vector<256x8xf32>
    %cst_79 = arith.constant 0.000000e+00 : f32
    %157 = vector.broadcast %cst_79 : f32 to vector<256x8xf32>
    %158 = arith.maximumf %156, %157 : vector<256x8xf32>
    %c0_80 = arith.constant 0 : index
    %c0_81 = arith.constant 0 : index
    %159 = vector.load %arg10[%c0_80, %c0_81] : memref<256x8xf32, #tpu.memory_space<vmem>>, vector<256x8xf32>
    tpu.vector_store %arg10[%c0_80, %c0_81], %158 {strides = array<i32>} : memref<256x8xf32, #tpu.memory_space<vmem>>, vector<256x8xf32>,
    return
  }
  func.func @transform_0(%arg0: i32) -> (i32, i32) {
    %c0_i32 = arith.constant 0 : i32
    %c0_i32_0 = arith.constant 0 : i32
    return %arg0, %c0_i32 : i32, i32
  }
  func.func @transform_1(%arg0: i32) -> (i32, i32) {
    %c0_i32 = arith.constant 0 : i32
    %c0_i32_0 = arith.constant 0 : i32
    %c0_i32_1 = arith.constant 0 : i32
    return %c0_i32, %c0_i32_0 : i32, i32
  }
  func.func @transform_2(%arg0: i32) -> (i32, i32) {
    %c0_i32 = arith.constant 0 : i32
    %c0_i32_0 = arith.constant 0 : i32
    %c0_i32_1 = arith.constant 0 : i32
    return %c0_i32, %c0_i32_0 : i32, i32
  }
  func.func @transform_3(%arg0: i32) -> (i32, i32) {
    %c0_i32 = arith.constant 0 : i32
    %c0_i32_0 = arith.constant 0 : i32
    %c0_i32_1 = arith.constant 0 : i32
    return %c0_i32, %c0_i32_0 : i32, i32
  }
  func.func @transform_4(%arg0: i32) -> (i32, i32) {
    %c0_i32 = arith.constant 0 : i32
    %c0_i32_0 = arith.constant 0 : i32
    %c0_i32_1 = arith.constant 0 : i32
    return %c0_i32, %c0_i32_0 : i32, i32
  }
  func.func @transform_5(%arg0: i32) -> (i32, i32) {
    %c0_i32 = arith.constant 0 : i32
    %c0_i32_0 = arith.constant 0 : i32
    %c0_i32_1 = arith.constant 0 : i32
    return %c0_i32, %c0_i32_0 : i32, i32
  }
  func.func @transform_6(%arg0: i32) -> (i32, i32) {
    %c0_i32 = arith.constant 0 : i32
    %c0_i32_0 = arith.constant 0 : i32
    %c0_i32_1 = arith.constant 0 : i32
    return %c0_i32, %c0_i32_0 : i32, i32
  }
  func.func @transform_7(%arg0: i32) -> (i32, i32) {
    %c0_i32 = arith.constant 0 : i32
    %c0_i32_0 = arith.constant 0 : i32
    %c0_i32_1 = arith.constant 0 : i32
    return %c0_i32, %c0_i32_0 : i32, i32
  }
  func.func @transform_8(%arg0: i32) -> (i32, i32) {
    %c0_i32 = arith.constant 0 : i32
    %c0_i32_0 = arith.constant 0 : i32
    %c0_i32_1 = arith.constant 0 : i32
    return %c0_i32, %c0_i32_0 : i32, i32
  }
  func.func @transform_9(%arg0: i32) -> (i32, i32) {
    %c0_i32 = arith.constant 0 : i32
    %c0_i32_0 = arith.constant 0 : i32
    return %arg0, %c0_i32 : i32, i32
  }
}

</mosaic_0001>

<llo_original>
// kernel: basic_block.1
$region0: #{basic_block.1}
  #allocation0 [shape = 'u32[]', space=smem, size = 0x4, offset = 0x4, fixed_abs, tag = 'smem constant byte address 0x4 - core index']
  #allocation1 [shape = 'u32[144,128]{1,0:T(1,128)}', space=vmem, size = 0x12000, scoped, tag = 'internal scratch']
  #allocation2 [shape = 'bf16[256,72]{1,0:T(16,128)(2,1)}', space=vmem, size = 0x10000, scoped, tag = 'scratch operand']
  %s0 = inlined_call_operand.vmem [shape: bf16[512,8], index: 0, kind: input, shape index: {}]
  %s1 = inlined_call_operand.vmem [shape: s32[256,1], index: 1, kind: input, shape index: {}]
  %s2 = inlined_call_operand.vmem [shape: s32[256,1], index: 2, kind: input, shape index: {}]
  %s3 = inlined_call_operand.vmem [shape: bf16[72,8], index: 3, kind: input, shape index: {}]
  %s4 = inlined_call_operand.vmem [shape: f32[1,8], index: 4, kind: input, shape index: {}]
  %s5 = inlined_call_operand.vmem [shape: f32[1,8], index: 5, kind: input, shape index: {}]
  %s6 = inlined_call_operand.vmem [shape: bf16[72,8], index: 6, kind: input, shape index: {}]
  %s7 = inlined_call_operand.vmem [shape: f32[1,8], index: 7, kind: input, shape index: {}]
  %s8 = inlined_call_operand.vmem [shape: f32[1,8], index: 8, kind: input, shape index: {}]
  %s9 = inlined_call_operand.vmem [shape: f32[512,8], index: 9, kind: output, shape index: {}]
  %s10 = sld [smem:[#allocation0]]
  $region69: #{basic_block.1} parent=0
    _
  %s12 = ssub.s32 1, %s10
  %s13 = scalar_select 0, %s12, %s10
  loop: start=0, step=1, limit=4
  $region2: #{basic_block.1} parent=0 // loop_pre_header
    _
  $region3: #{basic_block.1} parent=0 // loop_header
    %s15 = sphi 0, %s19
    %p16 = scmp.ge.s32.totalorder %s15, 4
    %s25 = sphi 0, %s27
    %s28 = sphi 0, %s25
    %s29 = sphi 0, %s28
    %s45 = sphi 0, %s29
    %s49 = sphi 0, %s49
    %s51 = sphi 0, %s49
    %s52 = sphi 0, %s51
    %s66 = sphi 0, %s52
    %s70 = sphi 0, %s70
    %s72 = sphi 0, %s70
    %s73 = sphi 0, %s72
    %s87 = sphi 0, %s73
    %s91 = sphi 0, %s91
    %s93 = sphi 0, %s91
    %s94 = sphi 0, %s93
    %s108 = sphi 0, %s94
    %s112 = sphi 0, %s112
    %s114 = sphi 0, %s112
    %s115 = sphi 0, %s114
    %s129 = sphi 0, %s115
    %s133 = sphi 0, %s133
    %s135 = sphi 0, %s133
    %s136 = sphi 0, %s135
    %s150 = sphi 0, %s136
    %s154 = sphi 0, %s154
    %s156 = sphi 0, %s154
    %s157 = sphi 0, %s156
    %s171 = sphi 0, %s157
    %s175 = sphi 0, %s175
    %s177 = sphi 0, %s175
    %s178 = sphi 0, %s177
    %s192 = sphi 0, %s178
    %s196 = sphi 0, %s196
    %s198 = sphi 0, %s196
    %s199 = sphi 0, %s198
    %s213 = sphi 0, %s199
    %s219 = sphi 0, %s221
    %s222 = sphi 0, %s219
    %s223 = sphi 0, %s222
    %s239 = sphi 0, %s223
  $region4: #{basic_block.1} parent=0 // loop_header_branch
    %18 = sbr.rel (%p16) target = $region8
  $region5: #{basic_block.1} parent=0 // loop_body
    %s20 = ssub.s32 %s15, 1
    %s21 = ssub.s32 %s15, 2
    %s22 = sadd.s32 %s15, 1
    %s23 = ssub.s32 %s15, %s22
    %p24 = scmp.eq.s32.totalorder %s23, 0
    %s26 = sadd.s32 %s25, 1
    %s27 = scalar_select %p24, %s25, %s26
    %p30 = pneg %p24
    %p31 = scmp.eq.s32.totalorder %s15, 1
    %p32 = por %p30, %p31
    %p33 = scmp.ne.s32.totalorder %s25, %s28
    %p34 = scmp.eq.s32.totalorder %s15, 0
    %p35 = por %p33, %p34
    %p36 = scmp.ne.s32.totalorder %s25, %s28
    %p37 = scmp.eq.s32.totalorder %s20, 1
    %p38 = por %p36, %p37
    %p39 = scmp.ne.s32.totalorder %s28, %s29
    %p40 = scmp.eq.s32.totalorder %s20, 0
    %p41 = por %p39, %p40
    %p42 = scmp.ne.s32.totalorder %s28, %s29
    %p43 = scmp.eq.s32.totalorder %s21, 1
    %p44 = por %p42, %p43
    %p46 = scmp.ne.s32.totalorder %s29, %s45
    %p47 = scmp.eq.s32.totalorder %s21, 0
    %p48 = por %p46, %p47
    %s50 = sadd.s32 %s49, 1
    %p53 = scmp.eq.s32.totalorder %s15, 1
    %p54 = scmp.ne.s32.totalorder %s49, %s51
    %p55 = scmp.eq.s32.totalorder %s15, 0
    %p56 = por %p54, %p55
    %p57 = scmp.ne.s32.totalorder %s49, %s51
    %p58 = scmp.eq.s32.totalorder %s20, 1
    %p59 = por %p57, %p58
    %p60 = scmp.ne.s32.totalorder %s51, %s52
    %p61 = scmp.eq.s32.totalorder %s20, 0
    %p62 = por %p60, %p61
    %p63 = scmp.ne.s32.totalorder %s51, %s52
    %p64 = scmp.eq.s32.totalorder %s21, 1
    %p65 = por %p63, %p64
    %p67 = scmp.ne.s32.totalorder %s52, %s66
    %p68 = scmp.eq.s32.totalorder %s21, 0
    %p69 = por %p67, %p68
    %s71 = sadd.s32 %s70, 1
    %p74 = scmp.eq.s32.totalorder %s15, 1
    %p75 = scmp.ne.s32.totalorder %s70, %s72
    %p76 = scmp.eq.s32.totalorder %s15, 0
    %p77 = por %p75, %p76
    %p78 = scmp.ne.s32.totalorder %s70, %s72
    %p79 = scmp.eq.s32.totalorder %s20, 1
    %p80 = por %p78, %p79
    %p81 = scmp.ne.s32.totalorder %s72, %s73
    %p82 = scmp.eq.s32.totalorder %s20, 0
    %p83 = por %p81, %p82
    %p84 = scmp.ne.s32.totalorder %s72, %s73
    %p85 = scmp.eq.s32.totalorder %s21, 1
    %p86 = por %p84, %p85
    %p88 = scmp.ne.s32.totalorder %s73, %s87
    %p89 = scmp.eq.s32.totalorder %s21, 0
    %p90 = por %p88, %p89
    %s92 = sadd.s32 %s91, 1
    %p95 = scmp.eq.s32.totalorder %s15, 1
    %p96 = scmp.ne.s32.totalorder %s91, %s93
    %p97 = scmp.eq.s32.totalorder %s15, 0
    %p98 = por %p96, %p97
    %p99 = scmp.ne.s32.totalorder %s91, %s93
    %p100 = scmp.eq.s32.totalorder %s20, 1
    %p101 = por %p99, %p100
    %p102 = scmp.ne.s32.totalorder %s93, %s94
    %p103 = scmp.eq.s32.totalorder %s20, 0
    %p104 = por %p102, %p103
    %p105 = scmp.ne.s32.totalorder %s93, %s94
    %p106 = scmp.eq.s32.totalorder %s21, 1
    %p107 = por %p105, %p106
    %p109 = scmp.ne.s32.totalorder %s94, %s108
    %p110 = scmp.eq.s32.totalorder %s21, 0
    %p111 = por %p109, %p110
    %s113 = sadd.s32 %s112, 1
    %p116 = scmp.eq.s32.totalorder %s15, 1
    %p117 = scmp.ne.s32.totalorder %s112, %s114
    %p118 = scmp.eq.s32.totalorder %s15, 0
    %p119 = por %p117, %p118
    %p120 = scmp.ne.s32.totalorder %s112, %s114
    %p121 = scmp.eq.s32.totalorder %s20, 1
    %p122 = por %p120, %p121
    %p123 = scmp.ne.s32.totalorder %s114, %s115
    %p124 = scmp.eq.s32.totalorder %s20, 0
    %p125 = por %p123, %p124
    %p126 = scmp.ne.s32.totalorder %s114, %s115
    %p127 = scmp.eq.s32.totalorder %s21, 1
    %p128 = por %p126, %p127
    %p130 = scmp.ne.s32.totalorder %s115, %s129
    %p131 = scmp.eq.s32.totalorder %s21, 0
    %p132 = por %p130, %p131
    %s134 = sadd.s32 %s133, 1
    %p137 = scmp.eq.s32.totalorder %s15, 1
    %p138 = scmp.ne.s32.totalorder %s133, %s135
    %p139 = scmp.eq.s32.totalorder %s15, 0
    %p140 = por %p138, %p139
    %p141 = scmp.ne.s32.totalorder %s133, %s135
    %p142 = scmp.eq.s32.totalorder %s20, 1
    %p143 = por %p141, %p142
    %p144 = scmp.ne.s32.totalorder %s135, %s136
    %p145 = scmp.eq.s32.totalorder %s20, 0
    %p146 = por %p144, %p145
    %p147 = scmp.ne.s32.totalorder %s135, %s136
    %p148 = scmp.eq.s32.totalorder %s21, 1
    %p149 = por %p147, %p148
    %p151 = scmp.ne.s32.totalorder %s136, %s150
    %p152 = scmp.eq.s32.totalorder %s21, 0
    %p153 = por %p151, %p152
    %s155 = sadd.s32 %s154, 1
    %p158 = scmp.eq.s32.totalorder %s15, 1
    %p159 = scmp.ne.s32.totalorder %s154, %s156
    %p160 = scmp.eq.s32.totalorder %s15, 0
    %p161 = por %p159, %p160
    %p162 = scmp.ne.s32.totalorder %s154, %s156
    %p163 = scmp.eq.s32.totalorder %s20, 1
    %p164 = por %p162, %p163
    %p165 = scmp.ne.s32.totalorder %s156, %s157
    %p166 = scmp.eq.s32.totalorder %s20, 0
    %p167 = por %p165, %p166
    %p168 = scmp.ne.s32.totalorder %s156, %s157
    %p169 = scmp.eq.s32.totalorder %s21, 1
    %p170 = por %p168, %p169
    %p172 = scmp.ne.s32.totalorder %s157, %s171
    %p173 = scmp.eq.s32.totalorder %s21, 0
    %p174 = por %p172, %p173
    %s176 = sadd.s32 %s175, 1
    %p179 = scmp.eq.s32.totalorder %s15, 1
    %p180 = scmp.ne.s32.totalorder %s175, %s177
    %p181 = scmp.eq.s32.totalorder %s15, 0
    %p182 = por %p180, %p181
    %p183 = scmp.ne.s32.totalorder %s175, %s177
    %p184 = scmp.eq.s32.totalorder %s20, 1
    %p185 = por %p183, %p184
    %p186 = scmp.ne.s32.totalorder %s177, %s178
    %p187 = scmp.eq.s32.totalorder %s20, 0
    %p188 = por %p186, %p187
    %p189 = scmp.ne.s32.totalorder %s177, %s178
    %p190 = scmp.eq.s32.totalorder %s21, 1
    %p191 = por %p189, %p190
    %p193 = scmp.ne.s32.totalorder %s178, %s192
    %p194 = scmp.eq.s32.totalorder %s21, 0
    %p195 = por %p193, %p194
    %s197 = sadd.s32 %s196, 1
    %p200 = scmp.eq.s32.totalorder %s15, 1
    %p201 = scmp.ne.s32.totalorder %s196, %s198
    %p202 = scmp.eq.s32.totalorder %s15, 0
    %p203 = por %p201, %p202
    %p204 = scmp.ne.s32.totalorder %s196, %s198
    %p205 = scmp.eq.s32.totalorder %s20, 1
    %p206 = por %p204, %p205
    %p207 = scmp.ne.s32.totalorder %s198, %s199
    %p208 = scmp.eq.s32.totalorder %s20, 0
    %p209 = por %p207, %p208
    %p210 = scmp.ne.s32.totalorder %s198, %s199
    %p211 = scmp.eq.s32.totalorder %s21, 1
    %p212 = por %p210, %p211
    %p214 = scmp.ne.s32.totalorder %s199, %s213
    %p215 = scmp.eq.s32.totalorder %s21, 0
    %p216 = por %p214, %p215
    %s217 = ssub.s32 %s15, %s22
    %p218 = scmp.eq.s32.totalorder %s217, 0
    %s220 = sadd.s32 %s219, 1
    %s221 = scalar_select %p218, %s219, %s220
    %p224 = pneg %p218
    %p225 = scmp.eq.s32.totalorder %s15, 1
    %p226 = por %p224, %p225
    %p227 = scmp.ne.s32.totalorder %s219, %s222
    %p228 = scmp.eq.s32.totalorder %s15, 0
    %p229 = por %p227, %p228
    %p230 = scmp.ne.s32.totalorder %s219, %s222
    %p231 = scmp.eq.s32.totalorder %s20, 1
    %p232 = por %p230, %p231
    %p233 = scmp.ne.s32.totalorder %s222, %s223
    %p234 = scmp.eq.s32.totalorder %s20, 0
    %p235 = por %p233, %p234
    %p236 = scmp.ne.s32.totalorder %s222, %s223
    %p237 = scmp.eq.s32.totalorder %s21, 1
    %p238 = por %p236, %p237
    %p240 = scmp.ne.s32.totalorder %s223, %s239
    %p241 = scmp.eq.s32.totalorder %s21, 0
    %p242 = por %p240, %p241
    %p243 = scmp.le.s32.totalorder 1, %s15
    %p244 = scmp.lt.s32.totalorder %s15, 3
    %p245 = pnand %p243, %p244
    %p246 = pneg %p245
    // Predicated region
    $region9: #{basic_block.1} parent=5 // pred_check
      _
    $region10: #{basic_block.1} parent=5 // pred_check_branch
      %248 = sbr.rel (%p245) target = $region12
    $region11: #{basic_block.1} parent=5 // pred_region
      %s249 = ssub.s32 %s15, 1
      // Predicated region
      $region13: #{basic_block.1} parent=11 // pred_check
        %p250 = pneg %p62
      $region14: #{basic_block.1} parent=11 // pred_check_branch
        %252 = sbr.rel (%p250) target = $region16
      $region15: #{basic_block.1} parent=11 // pred_region
        _
      $region16: #{basic_block.1} parent=11 // pred_fallthru
        _
      // Predicated region
      $region17: #{basic_block.1} parent=11 // pred_check
        %p253 = pneg %p83
      $region18: #{basic_block.1} parent=11 // pred_check_branch
        %255 = sbr.rel (%p253) target = $region20
      $region19: #{basic_block.1} parent=11 // pred_region
        _
      $region20: #{basic_block.1} parent=11 // pred_fallthru
        _
      // Predicated region
      $region21: #{basic_block.1} parent=11 // pred_check
        %p256 = pneg %p104
      $region22: #{basic_block.1} parent=11 // pred_check_branch
        %258 = sbr.rel (%p256) target = $region24
      $region23: #{basic_block.1} parent=11 // pred_region
        _
      $region24: #{basic_block.1} parent=11 // pred_fallthru
        _
      // Predicated region
      $region25: #{basic_block.1} parent=11 // pred_check
        %p259 = pneg %p125
      $region26: #{basic_block.1} parent=11 // pred_check_branch
        %261 = sbr.rel (%p259) target = $region28
      $region27: #{basic_block.1} parent=11 // pred_region
        _
      $region28: #{basic_block.1} parent=11 // pred_fallthru
        _
      // Predicated region
      $region29: #{basic_block.1} parent=11 // pred_check
        %p262 = pneg %p146
      $region30: #{basic_block.1} parent=11 // pred_check_branch
        %264 = sbr.rel (%p262) target = $region32
      $region31: #{basic_block.1} parent=11 // pred_region
        _
      $region32: #{basic_block.1} parent=11 // pred_fallthru
        _
      // Predicated region
      $region33: #{basic_block.1} parent=11 // pred_check
        %p265 = pneg %p167
      $region34: #{basic_block.1} parent=11 // pred_check_branch
        %267 = sbr.rel (%p265) target = $region36
      $region35: #{basic_block.1} parent=11 // pred_region
        _
      $region36: #{basic_block.1} parent=11 // pred_fallthru
        _
      // Predicated region
      $region37: #{basic_block.1} parent=11 // pred_check
        %p268 = pneg %p188
      $region38: #{basic_block.1} parent=11 // pred_check_branch
        %270 = sbr.rel (%p268) target = $region40
      $region39: #{basic_block.1} parent=11 // pred_region
        _
      $region40: #{basic_block.1} parent=11 // pred_fallthru
        _
      // Predicated region
      $region41: #{basic_block.1} parent=11 // pred_check
        %p271 = pneg %p209
      $region42: #{basic_block.1} parent=11 // pred_check_branch
        %273 = sbr.rel (%p271) target = $region44
      $region43: #{basic_block.1} parent=11 // pred_region
        _
      $region44: #{basic_block.1} parent=11 // pred_fallthru
        _
    $region12: #{basic_block.1} parent=5 // pred_fallthru
      _
    %p274 = scmp.lt.s32.totalorder %s15, 2
    // Predicated region
    $region45: #{basic_block.1} parent=5 // pred_check
      %p275 = pneg %p274
    $region46: #{basic_block.1} parent=5 // pred_check_branch
      %277 = sbr.rel (%p275) target = $region48
    $region47: #{basic_block.1} parent=5 // pred_region
      // Predicated region
      $region49: #{basic_block.1} parent=47 // pred_check
        %p278 = pneg %p35
      $region50: #{basic_block.1} parent=47 // pred_check_branch
        %280 = sbr.rel (%p278) target = $region52
      $region51: #{basic_block.1} parent=47 // pred_region
        %s281 = smul.u32 32, %s15
        %p282 = scmp.lt.s32.totalorder %s281, 63
        %s283 = scalar_select %p282, %s281, 63
        %s284 = smul.addr %s283, 4
        %s285 = scalar_lea.vmem %s0, %s284
        %s286 = smul.u32 32, %s15
      $region52: #{basic_block.1} parent=47 // pred_fallthru
        _
    $region48: #{basic_block.1} parent=5 // pred_fallthru
      _
    %p287 = scmp.le.s32.totalorder 1, %s15
    %p288 = scmp.lt.s32.totalorder %s15, 3
    %p289 = pnand %p287, %p288
    %p290 = pneg %p289
    // Predicated region
    $region53: #{basic_block.1} parent=5 // pred_check
      _
    $region54: #{basic_block.1} parent=5 // pred_check_branch
      %292 = sbr.rel (%p289) target = $region56
    $region55: #{basic_block.1} parent=5 // pred_region
      %s293 = ssub.s32 %s15, 1
      %s294 = smul.u32 32, %s20
      %p295 = scmp.lt.s32.totalorder %s294, 63
      %s296 = scalar_select %p295, %s294, 63
      %s297 = smul.addr %s296, 4
      %s298 = scalar_lea.vmem %s0, %s297
      %p299 = pneg %p41
      %p300 = pneg %p38
      %p301 = pneg %p62
      %p302 = pneg %p59
      %p303 = pneg %p83
      %p304 = pneg %p80
      %p305 = pneg %p104
      %p306 = pneg %p101
      %p307 = pneg %p125
      %p308 = pneg %p122
      %p309 = pneg %p146
      %p310 = pneg %p143
      %p311 = pneg %p167
      %p312 = pneg %p164
      %p313 = pneg %p188
      %p314 = pneg %p185
      %p315 = pneg %p209
      %p316 = pneg %p206
      %p317 = pneg %p235
      %p318 = pneg %p232
      %s319 = smul.u32 32, %s20
      %p320 = scmp.lt.s32.totalorder %s319, 63
      %s321 = scalar_select %p320, %s319, 63
      %s322 = smul.addr %s321, 8
      %s323 = scalar_lea.vmem %s9, %s322
      %s324 = smul.u32 32, %s20
      %p325 = scmp.lt.s32.totalorder %s324, 63
      %s326 = scalar_select %p325, %s324, 63
      %s327 = smul.addr %s326, 4
      %s328 = scalar_lea.vmem %s0, %s327
      %s329 = smul.u32 32, %s20
      %s330 = smul.u32 32, %s20
      %p331 = scmp.lt.s32.totalorder %s330, 63
      %s332 = scalar_select %p331, %s330, 63
      %s333 = smul.addr %s332, 8
      %s334 = scalar_lea.vmem %s9, %s333
      %s335 = smul.u32 32, %s20
      %v337 = vld [vmem:[%s328] sm:$0xf]
      %v338 = vld [vmem:[%s328 + $0x4] sm:$0xf]
      %v339 = vld [vmem:[%s328 + $0x8] sm:$0xf]
      %v340 = vld [vmem:[%s328 + $0xc] sm:$0xf]
      %v341 = vld [vmem:[%s328 + $0x10] sm:$0xf]
      %v342 = vld [vmem:[%s328 + $0x14] sm:$0xf]
      %v343 = vld [vmem:[%s328 + $0x18] sm:$0xf]
      %v344 = vld [vmem:[%s328 + $0x1c] sm:$0xf]
      %v345 = vld [vmem:[%s328 + $0x20] sm:$0xf]
      %v346 = vld [vmem:[%s328 + $0x24] sm:$0xf]
      %v347 = vld [vmem:[%s328 + $0x28] sm:$0xf]
      %v348 = vld [vmem:[%s328 + $0x2c] sm:$0xf]
      %v349 = vld [vmem:[%s328 + $0x30] sm:$0xf]
      %v350 = vld [vmem:[%s328 + $0x34] sm:$0xf]
      %v351 = vld [vmem:[%s328 + $0x38] sm:$0xf]
      %v352 = vld [vmem:[%s328 + $0x3c] sm:$0xf]
      %v353 = vld [vmem:[%s328 + $0x40] sm:$0xf]
      %v354 = vld [vmem:[%s328 + $0x44] sm:$0xf]
      %v355 = vld [vmem:[%s328 + $0x48] sm:$0xf]
      %v356 = vld [vmem:[%s328 + $0x4c] sm:$0xf]
      %v357 = vld [vmem:[%s328 + $0x50] sm:$0xf]
      %v358 = vld [vmem:[%s328 + $0x54] sm:$0xf]
      %v359 = vld [vmem:[%s328 + $0x58] sm:$0xf]
      %v360 = vld [vmem:[%s328 + $0x5c] sm:$0xf]
      %v361 = vld [vmem:[%s328 + $0x60] sm:$0xf]
      %v362 = vld [vmem:[%s328 + $0x64] sm:$0xf]
      %v363 = vld [vmem:[%s328 + $0x68] sm:$0xf]
      %v364 = vld [vmem:[%s328 + $0x6c] sm:$0xf]
      %v365 = vld [vmem:[%s328 + $0x70] sm:$0xf]
      %v366 = vld [vmem:[%s328 + $0x74] sm:$0xf]
      %v367 = vld [vmem:[%s328 + $0x78] sm:$0xf]
      %v368 = vld [vmem:[%s328 + $0x7c] sm:$0xf]
      %v369 = vunpack.c.l.bf16 %v337
      %v370 = vunpack.c.l.bf16 %v338
      %v371 = vunpack.c.l.bf16 %v339
      %v372 = vunpack.c.l.bf16 %v340
      %v373 = vunpack.c.l.bf16 %v341
      %v374 = vunpack.c.l.bf16 %v342
      %v375 = vunpack.c.l.bf16 %v343
      %v376 = vunpack.c.l.bf16 %v344
      %v377 = vunpack.c.l.bf16 %v345
      %v378 = vunpack.c.l.bf16 %v346
      %v379 = vunpack.c.l.bf16 %v347
      %v380 = vunpack.c.l.bf16 %v348
      %v381 = vunpack.c.l.bf16 %v349
      %v382 = vunpack.c.l.bf16 %v350
      %v383 = vunpack.c.l.bf16 %v351
      %v384 = vunpack.c.l.bf16 %v352
      %v385 = vunpack.c.l.bf16 %v353
      %v386 = vunpack.c.l.bf16 %v354
      %v387 = vunpack.c.l.bf16 %v355
      %v388 = vunpack.c.l.bf16 %v356
      %v389 = vunpack.c.l.bf16 %v357
      %v390 = vunpack.c.l.bf16 %v358
      %v391 = vunpack.c.l.bf16 %v359
      %v392 = vunpack.c.l.bf16 %v360
      %v393 = vunpack.c.l.bf16 %v361
      %v394 = vunpack.c.l.bf16 %v362
      %v395 = vunpack.c.l.bf16 %v363
      %v396 = vunpack.c.l.bf16 %v364
      %v397 = vunpack.c.l.bf16 %v365
      %v398 = vunpack.c.l.bf16 %v366
      %v399 = vunpack.c.l.bf16 %v367
      %v400 = vunpack.c.l.bf16 %v368
      %v401 = vld [vmem:[%s1] sm:$0xff]
      %v402 = vld [vmem:[%s1 + $0x8] sm:$0xff]
      %v403 = vld [vmem:[%s1 + $0x10] sm:$0xff]
      %v404 = vld [vmem:[%s1 + $0x18] sm:$0xff]
      %v405 = vld [vmem:[%s1 + $0x20] sm:$0xff]
      %v406 = vld [vmem:[%s1 + $0x28] sm:$0xff]
      %v407 = vld [vmem:[%s1 + $0x30] sm:$0xff]
      %v408 = vld [vmem:[%s1 + $0x38] sm:$0xff]
      %v409 = vld [vmem:[%s1 + $0x40] sm:$0xff]
      %v410 = vld [vmem:[%s1 + $0x48] sm:$0xff]
      %v411 = vld [vmem:[%s1 + $0x50] sm:$0xff]
      %v412 = vld [vmem:[%s1 + $0x58] sm:$0xff]
      %v413 = vld [vmem:[%s1 + $0x60] sm:$0xff]
      %v414 = vld [vmem:[%s1 + $0x68] sm:$0xff]
      %v415 = vld [vmem:[%s1 + $0x70] sm:$0xff]
      %v416 = vld [vmem:[%s1 + $0x78] sm:$0xff]
      %v417 = vld [vmem:[%s1 + $0x80] sm:$0xff]
      %v418 = vld [vmem:[%s1 + $0x88] sm:$0xff]
      %v419 = vld [vmem:[%s1 + $0x90] sm:$0xff]
      %v420 = vld [vmem:[%s1 + $0x98] sm:$0xff]
      %v421 = vld [vmem:[%s1 + $0xa0] sm:$0xff]
      %v422 = vld [vmem:[%s1 + $0xa8] sm:$0xff]
      %v423 = vld [vmem:[%s1 + $0xb0] sm:$0xff]
      %v424 = vld [vmem:[%s1 + $0xb8] sm:$0xff]
      %v425 = vld [vmem:[%s1 + $0xc0] sm:$0xff]
      %v426 = vld [vmem:[%s1 + $0xc8] sm:$0xff]
      %v427 = vld [vmem:[%s1 + $0xd0] sm:$0xff]
      %v428 = vld [vmem:[%s1 + $0xd8] sm:$0xff]
      %v429 = vld [vmem:[%s1 + $0xe0] sm:$0xff]
      %v430 = vld [vmem:[%s1 + $0xe8] sm:$0xff]
      %v431 = vld [vmem:[%s1 + $0xf0] sm:$0xff]
      %v432 = vld [vmem:[%s1 + $0xf8] sm:$0xff]
      %v433 = vld [vmem:[%s2] sm:$0xff]
      %v434 = vld [vmem:[%s2 + $0x8] sm:$0xff]
      %v435 = vld [vmem:[%s2 + $0x10] sm:$0xff]
      %v436 = vld [vmem:[%s2 + $0x18] sm:$0xff]
      %v437 = vld [vmem:[%s2 + $0x20] sm:$0xff]
      %v438 = vld [vmem:[%s2 + $0x28] sm:$0xff]
      %v439 = vld [vmem:[%s2 + $0x30] sm:$0xff]
      %v440 = vld [vmem:[%s2 + $0x38] sm:$0xff]
      %v441 = vld [vmem:[%s2 + $0x40] sm:$0xff]
      %v442 = vld [vmem:[%s2 + $0x48] sm:$0xff]
      %v443 = vld [vmem:[%s2 + $0x50] sm:$0xff]
      %v444 = vld [vmem:[%s2 + $0x58] sm:$0xff]
      %v445 = vld [vmem:[%s2 + $0x60] sm:$0xff]
      %v446 = vld [vmem:[%s2 + $0x68] sm:$0xff]
      %v447 = vld [vmem:[%s2 + $0x70] sm:$0xff]
      %v448 = vld [vmem:[%s2 + $0x78] sm:$0xff]
      %v449 = vld [vmem:[%s2 + $0x80] sm:$0xff]
      %v450 = vld [vmem:[%s2 + $0x88] sm:$0xff]
      %v451 = vld [vmem:[%s2 + $0x90] sm:$0xff]
      %v452 = vld [vmem:[%s2 + $0x98] sm:$0xff]
      %v453 = vld [vmem:[%s2 + $0xa0] sm:$0xff]
      %v454 = vld [vmem:[%s2 + $0xa8] sm:$0xff]
      %v455 = vld [vmem:[%s2 + $0xb0] sm:$0xff]
      %v456 = vld [vmem:[%s2 + $0xb8] sm:$0xff]
      %v457 = vld [vmem:[%s2 + $0xc0] sm:$0xff]
      %v458 = vld [vmem:[%s2 + $0xc8] sm:$0xff]
      %v459 = vld [vmem:[%s2 + $0xd0] sm:$0xff]
      %v460 = vld [vmem:[%s2 + $0xd8] sm:$0xff]
      %v461 = vld [vmem:[%s2 + $0xe0] sm:$0xff]
      %v462 = vld [vmem:[%s2 + $0xe8] sm:$0xff]
      %v463 = vld [vmem:[%s2 + $0xf0] sm:$0xff]
      %v464 = vld [vmem:[%s2 + $0xf8] sm:$0xff]
      %vm465 = vcmp.ge.s32.totalorder %v401, 1
      %vm466 = vcmp.ge.s32.totalorder %v402, 1
      %vm467 = vcmp.ge.s32.totalorder %v403, 1
      %vm468 = vcmp.ge.s32.totalorder %v404, 1
      %vm469 = vcmp.ge.s32.totalorder %v405, 1
      %vm470 = vcmp.ge.s32.totalorder %v406, 1
      %vm471 = vcmp.ge.s32.totalorder %v407, 1
      %vm472 = vcmp.ge.s32.totalorder %v408, 1
      %vm473 = vcmp.ge.s32.totalorder %v409, 1
      %vm474 = vcmp.ge.s32.totalorder %v410, 1
      %vm475 = vcmp.ge.s32.totalorder %v411, 1
      %vm476 = vcmp.ge.s32.totalorder %v412, 1
      %vm477 = vcmp.ge.s32.totalorder %v413, 1
      %vm478 = vcmp.ge.s32.totalorder %v414, 1
      %vm479 = vcmp.ge.s32.totalorder %v415, 1
      %vm480 = vcmp.ge.s32.totalorder %v416, 1
      %vm481 = vcmp.ge.s32.totalorder %v417, 1
      %vm482 = vcmp.ge.s32.totalorder %v418, 1
      %vm483 = vcmp.ge.s32.totalorder %v419, 1
      %vm484 = vcmp.ge.s32.totalorder %v420, 1
      %vm485 = vcmp.ge.s32.totalorder %v421, 1
      %vm486 = vcmp.ge.s32.totalorder %v422, 1
      %vm487 = vcmp.ge.s32.totalorder %v423, 1
      %vm488 = vcmp.ge.s32.totalorder %v424, 1
      %vm489 = vcmp.ge.s32.totalorder %v425, 1
      %vm490 = vcmp.ge.s32.totalorder %v426, 1
      %vm491 = vcmp.ge.s32.totalorder %v427, 1
      %vm492 = vcmp.ge.s32.totalorder %v428, 1
      %vm493 = vcmp.ge.s32.totalorder %v429, 1
      %vm494 = vcmp.ge.s32.totalorder %v430, 1
      %vm495 = vcmp.ge.s32.totalorder %v431, 1
      %vm496 = vcmp.ge.s32.totalorder %v432, 1
      %vm497 = vcmp.lt.s32.totalorder %v401, 15
      %vm498 = vcmp.lt.s32.totalorder %v402, 15
      %vm499 = vcmp.lt.s32.totalorder %v403, 15
      %vm500 = vcmp.lt.s32.totalorder %v404, 15
      %vm501 = vcmp.lt.s32.totalorder %v405, 15
      %vm502 = vcmp.lt.s32.totalorder %v406, 15
      %vm503 = vcmp.lt.s32.totalorder %v407, 15
      %vm504 = vcmp.lt.s32.totalorder %v408, 15
      %vm505 = vcmp.lt.s32.totalorder %v409, 15
      %vm506 = vcmp.lt.s32.totalorder %v410, 15
      %vm507 = vcmp.lt.s32.totalorder %v411, 15
      %vm508 = vcmp.lt.s32.totalorder %v412, 15
      %vm509 = vcmp.lt.s32.totalorder %v413, 15
      %vm510 = vcmp.lt.s32.totalorder %v414, 15
      %vm511 = vcmp.lt.s32.totalorder %v415, 15
      %vm512 = vcmp.lt.s32.totalorder %v416, 15
      %vm513 = vcmp.lt.s32.totalorder %v417, 15
      %vm514 = vcmp.lt.s32.totalorder %v418, 15
      %vm515 = vcmp.lt.s32.totalorder %v419, 15
      %vm516 = vcmp.lt.s32.totalorder %v420, 15
      %vm517 = vcmp.lt.s32.totalorder %v421, 15
      %vm518 = vcmp.lt.s32.totalorder %v422, 15
      %vm519 = vcmp.lt.s32.totalorder %v423, 15
      %vm520 = vcmp.lt.s32.totalorder %v424, 15
      %vm521 = vcmp.lt.s32.totalorder %v425, 15
      %vm522 = vcmp.lt.s32.totalorder %v426, 15
      %vm523 = vcmp.lt.s32.totalorder %v427, 15
      %vm524 = vcmp.lt.s32.totalorder %v428, 15
      %vm525 = vcmp.lt.s32.totalorder %v429, 15
      %vm526 = vcmp.lt.s32.totalorder %v430, 15
      %vm527 = vcmp.lt.s32.totalorder %v431, 15
      %vm528 = vcmp.lt.s32.totalorder %v432, 15
      %vm529 = vcmp.ge.s32.totalorder %v433, 1
      %vm530 = vcmp.ge.s32.totalorder %v434, 1
      %vm531 = vcmp.ge.s32.totalorder %v435, 1
      %vm532 = vcmp.ge.s32.totalorder %v436, 1
      %vm533 = vcmp.ge.s32.totalorder %v437, 1
      %vm534 = vcmp.ge.s32.totalorder %v438, 1
      %vm535 = vcmp.ge.s32.totalorder %v439, 1
      %vm536 = vcmp.ge.s32.totalorder %v440, 1
      %vm537 = vcmp.ge.s32.totalorder %v441, 1
      %vm538 = vcmp.ge.s32.totalorder %v442, 1
      %vm539 = vcmp.ge.s32.totalorder %v443, 1
      %vm540 = vcmp.ge.s32.totalorder %v444, 1
      %vm541 = vcmp.ge.s32.totalorder %v445, 1
      %vm542 = vcmp.ge.s32.totalorder %v446, 1
      %vm543 = vcmp.ge.s32.totalorder %v447, 1
      %vm544 = vcmp.ge.s32.totalorder %v448, 1
      %vm545 = vcmp.ge.s32.totalorder %v449, 1
      %vm546 = vcmp.ge.s32.totalorder %v450, 1
      %vm547 = vcmp.ge.s32.totalorder %v451, 1
      %vm548 = vcmp.ge.s32.totalorder %v452, 1
      %vm549 = vcmp.ge.s32.totalorder %v453, 1
      %vm550 = vcmp.ge.s32.totalorder %v454, 1
      %vm551 = vcmp.ge.s32.totalorder %v455, 1
      %vm552 = vcmp.ge.s32.totalorder %v456, 1
      %vm553 = vcmp.ge.s32.totalorder %v457, 1
      %vm554 = vcmp.ge.s32.totalorder %v458, 1
      %vm555 = vcmp.ge.s32.totalorder %v459, 1
      %vm556 = vcmp.ge.s32.totalorder %v460, 1
      %vm557 = vcmp.ge.s32.totalorder %v461, 1
      %vm558 = vcmp.ge.s32.totalorder %v462, 1
      %vm559 = vcmp.ge.s32.totalorder %v463, 1
      %vm560 = vcmp.ge.s32.totalorder %v464, 1
      %vm561 = vcmp.lt.s32.totalorder %v433, 15
      %vm562 = vcmp.lt.s32.totalorder %v434, 15
      %vm563 = vcmp.lt.s32.totalorder %v435, 15
      %vm564 = vcmp.lt.s32.totalorder %v436, 15
      %vm565 = vcmp.lt.s32.totalorder %v437, 15
      %vm566 = vcmp.lt.s32.totalorder %v438, 15
      %vm567 = vcmp.lt.s32.totalorder %v439, 15
      %vm568 = vcmp.lt.s32.totalorder %v440, 15
      %vm569 = vcmp.lt.s32.totalorder %v441, 15
      %vm570 = vcmp.lt.s32.totalorder %v442, 15
      %vm571 = vcmp.lt.s32.totalorder %v443, 15
      %vm572 = vcmp.lt.s32.totalorder %v444, 15
      %vm573 = vcmp.lt.s32.totalorder %v445, 15
      %vm574 = vcmp.lt.s32.totalorder %v446, 15
      %vm575 = vcmp.lt.s32.totalorder %v447, 15
      %vm576 = vcmp.lt.s32.totalorder %v448, 15
      %vm577 = vcmp.lt.s32.totalorder %v449, 15
      %vm578 = vcmp.lt.s32.totalorder %v450, 15
      %vm579 = vcmp.lt.s32.totalorder %v451, 15
      %vm580 = vcmp.lt.s32.totalorder %v452, 15
      %vm581 = vcmp.lt.s32.totalorder %v453, 15
      %vm582 = vcmp.lt.s32.totalorder %v454, 15
      %vm583 = vcmp.lt.s32.totalorder %v455, 15
      %vm584 = vcmp.lt.s32.totalorder %v456, 15
      %vm585 = vcmp.lt.s32.totalorder %v457, 15
      %vm586 = vcmp.lt.s32.totalorder %v458, 15
      %vm587 = vcmp.lt.s32.totalorder %v459, 15
      %vm588 = vcmp.lt.s32.totalorder %v460, 15
      %vm589 = vcmp.lt.s32.totalorder %v461, 15
      %vm590 = vcmp.lt.s32.totalorder %v462, 15
      %vm591 = vcmp.lt.s32.totalorder %v463, 15
      %vm592 = vcmp.lt.s32.totalorder %v464, 15
      %v593 = vrot.slane %v369, 7
      %v594 = vrot.slane %v370, 7
      %v595 = vrot.slane %v371, 7
      %v596 = vrot.slane %v372, 7
      %v597 = vrot.slane %v373, 7
      %v598 = vrot.slane %v374, 7
      %v599 = vrot.slane %v375, 7
      %v600 = vrot.slane %v376, 7
      %v601 = vrot.slane %v377, 7
      %v602 = vrot.slane %v378, 7
      %v603 = vrot.slane %v379, 7
      %v604 = vrot.slane %v380, 7
      %v605 = vrot.slane %v381, 7
      %v606 = vrot.slane %v382, 7
      %v607 = vrot.slane %v383, 7
      %v608 = vrot.slane %v384, 7
      %v609 = vrot.slane %v385, 7
      %v610 = vrot.slane %v386, 7
      %v611 = vrot.slane %v387, 7
      %v612 = vrot.slane %v388, 7
      %v613 = vrot.slane %v389, 7
      %v614 = vrot.slane %v390, 7
      %v615 = vrot.slane %v391, 7
      %v616 = vrot.slane %v392, 7
      %v617 = vrot.slane %v393, 7
      %v618 = vrot.slane %v394, 7
      %v619 = vrot.slane %v395, 7
      %v620 = vrot.slane %v396, 7
      %v621 = vrot.slane %v397, 7
      %v622 = vrot.slane %v398, 7
      %v623 = vrot.slane %v399, 7
      %v624 = vrot.slane %v400, 7
      %v625 = vlaneseq
      %v626 = vshrl.u32 %v625, 7
      %vm627 = vcmp.lt.s32.totalorder %v626, 1
      %v628 = vsel %vm627, %v623, %v624
      %v629 = vsel %vm627, %v622, %v623
      %v630 = vsel %vm627, %v621, %v622
      %v631 = vsel %vm627, %v620, %v621
      %v632 = vsel %vm627, %v619, %v620
      %v633 = vsel %vm627, %v618, %v619
      %v634 = vsel %vm627, %v617, %v618
      %v635 = vsel %vm627, %v616, %v617
      %v636 = vsel %vm627, %v615, %v616
      %v637 = vsel %vm627, %v614, %v615
      %v638 = vsel %vm627, %v613, %v614
      %v639 = vsel %vm627, %v612, %v613
      %v640 = vsel %vm627, %v611, %v612
      %v641 = vsel %vm627, %v610, %v611
      %v642 = vsel %vm627, %v609, %v610
      %v643 = vsel %vm627, %v608, %v609
      %v644 = vsel %vm627, %v607, %v608
      %v645 = vsel %vm627, %v606, %v607
      %v646 = vsel %vm627, %v605, %v606
      %v647 = vsel %vm627, %v604, %v605
      %v648 = vsel %vm627, %v603, %v604
      %v649 = vsel %vm627, %v602, %v603
      %v650 = vsel %vm627, %v601, %v602
      %v651 = vsel %vm627, %v600, %v601
      %v652 = vsel %vm627, %v599, %v600
      %v653 = vsel %vm627, %v598, %v599
      %v654 = vsel %vm627, %v597, %v598
      %v655 = vsel %vm627, %v596, %v597
      %v656 = vsel %vm627, %v595, %v596
      %v657 = vsel %vm627, %v594, %v595
      %v658 = vsel %vm627, %v593, %v594
      %v659 = vsel %vm627, %v624, %v593
      %vm660 = vmand %vm465, %vm529
      %vm661 = vmand %vm466, %vm530
      %vm662 = vmand %vm467, %vm531
      %vm663 = vmand %vm468, %vm532
      %vm664 = vmand %vm469, %vm533
      %vm665 = vmand %vm470, %vm534
      %vm666 = vmand %vm471, %vm535
      %vm667 = vmand %vm472, %vm536
      %vm668 = vmand %vm473, %vm537
      %vm669 = vmand %vm474, %vm538
      %vm670 = vmand %vm475, %vm539
      %vm671 = vmand %vm476, %vm540
      %vm672 = vmand %vm477, %vm541
      %vm673 = vmand %vm478, %vm542
      %vm674 = vmand %vm479, %vm543
      %vm675 = vmand %vm480, %vm544
      %vm676 = vmand %vm481, %vm545
      %vm677 = vmand %vm482, %vm546
      %vm678 = vmand %vm483, %vm547
      %vm679 = vmand %vm484, %vm548
      %vm680 = vmand %vm485, %vm549
      %vm681 = vmand %vm486, %vm550
      %vm682 = vmand %vm487, %vm551
      %vm683 = vmand %vm488, %vm552
      %vm684 = vmand %vm489, %vm553
      %vm685 = vmand %vm490, %vm554
      %vm686 = vmand %vm491, %vm555
      %vm687 = vmand %vm492, %vm556
      %vm688 = vmand %vm493, %vm557
      %vm689 = vmand %vm494, %vm558
      %vm690 = vmand %vm495, %vm559
      %vm691 = vmand %vm496, %vm560
      %v692 = vsel %vm660, 1, 0
      %v693 = vsel %vm661, 1, 0
      %v694 = vsel %vm662, 1, 0
      %v695 = vsel %vm663, 1, 0
      %v696 = vsel %vm664, 1, 0
      %v697 = vsel %vm665, 1, 0
      %v698 = vsel %vm666, 1, 0
      %v699 = vsel %vm667, 1, 0
      %v700 = vsel %vm668, 1, 0
      %v701 = vsel %vm669, 1, 0
      %v702 = vsel %vm670, 1, 0
      %v703 = vsel %vm671, 1, 0
      %v704 = vsel %vm672, 1, 0
      %v705 = vsel %vm673, 1, 0
      %v706 = vsel %vm674, 1, 0
      %v707 = vsel %vm675, 1, 0
      %v708 = vsel %vm676, 1, 0
      %v709 = vsel %vm677, 1, 0
      %v710 = vsel %vm678, 1, 0
      %v711 = vsel %vm679, 1, 0
      %v712 = vsel %vm680, 1, 0
      %v713 = vsel %vm681, 1, 0
      %v714 = vsel %vm682, 1, 0
      %v715 = vsel %vm683, 1, 0
      %v716 = vsel %vm684, 1, 0
      %v717 = vsel %vm685, 1, 0
      %v718 = vsel %vm686, 1, 0
      %v719 = vsel %vm687, 1, 0
      %v720 = vsel %vm688, 1, 0
      %v721 = vsel %vm689, 1, 0
      %v722 = vsel %vm690, 1, 0
      %v723 = vsel %vm691, 1, 0
      %724 = vset.pattern.permute.xlu0 0
      %725 = vperm.xlu0 %724, %v692
      %v726 = vpop.permute.xlu0 %725
      %727 = vset.pattern.permute.xlu0 0
      %728 = vperm.xlu0 %727, %v693
      %v729 = vpop.permute.xlu0 %728
      %730 = vset.pattern.permute.xlu0 0
      %731 = vperm.xlu0 %730, %v694
      %v732 = vpop.permute.xlu0 %731
      %733 = vset.pattern.permute.xlu0 0
      %734 = vperm.xlu0 %733, %v695
      %v735 = vpop.permute.xlu0 %734
      %736 = vset.pattern.permute.xlu0 0
      %737 = vperm.xlu0 %736, %v696
      %v738 = vpop.permute.xlu0 %737
      %739 = vset.pattern.permute.xlu0 0
      %740 = vperm.xlu0 %739, %v697
      %v741 = vpop.permute.xlu0 %740
      %742 = vset.pattern.permute.xlu0 0
      %743 = vperm.xlu0 %742, %v698
      %v744 = vpop.permute.xlu0 %743
      %745 = vset.pattern.permute.xlu0 0
      %746 = vperm.xlu0 %745, %v699
      %v747 = vpop.permute.xlu0 %746
      %748 = vset.pattern.permute.xlu0 0
      %749 = vperm.xlu0 %748, %v700
      %v750 = vpop.permute.xlu0 %749
      %751 = vset.pattern.permute.xlu0 0
      %752 = vperm.xlu0 %751, %v701
      %v753 = vpop.permute.xlu0 %752
      %754 = vset.pattern.permute.xlu0 0
      %755 = vperm.xlu0 %754, %v702
      %v756 = vpop.permute.xlu0 %755
      %757 = vset.pattern.permute.xlu0 0
      %758 = vperm.xlu0 %757, %v703
      %v759 = vpop.permute.xlu0 %758
      %760 = vset.pattern.permute.xlu0 0
      %761 = vperm.xlu0 %760, %v704
      %v762 = vpop.permute.xlu0 %761
      %763 = vset.pattern.permute.xlu0 0
      %764 = vperm.xlu0 %763, %v705
      %v765 = vpop.permute.xlu0 %764
      %766 = vset.pattern.permute.xlu0 0
      %767 = vperm.xlu0 %766, %v706
      %v768 = vpop.permute.xlu0 %767
      %769 = vset.pattern.permute.xlu0 0
      %770 = vperm.xlu0 %769, %v707
      %v771 = vpop.permute.xlu0 %770
      %772 = vset.pattern.permute.xlu0 0
      %773 = vperm.xlu0 %772, %v708
      %v774 = vpop.permute.xlu0 %773
      %775 = vset.pattern.permute.xlu0 0
      %776 = vperm.xlu0 %775, %v709
      %v777 = vpop.permute.xlu0 %776
      %778 = vset.pattern.permute.xlu0 0
      %779 = vperm.xlu0 %778, %v710
      %v780 = vpop.permute.xlu0 %779
      %781 = vset.pattern.permute.xlu0 0
      %782 = vperm.xlu0 %781, %v711
      %v783 = vpop.permute.xlu0 %782
      %784 = vset.pattern.permute.xlu0 0
      %785 = vperm.xlu0 %784, %v712
      %v786 = vpop.permute.xlu0 %785
      %787 = vset.pattern.permute.xlu0 0
      %788 = vperm.xlu0 %787, %v713
      %v789 = vpop.permute.xlu0 %788
      %790 = vset.pattern.permute.xlu0 0
      %791 = vperm.xlu0 %790, %v714
      %v792 = vpop.permute.xlu0 %791
      %793 = vset.pattern.permute.xlu0 0
      %794 = vperm.xlu0 %793, %v715
      %v795 = vpop.permute.xlu0 %794
      %796 = vset.pattern.permute.xlu0 0
      %797 = vperm.xlu0 %796, %v716
      %v798 = vpop.permute.xlu0 %797
      %799 = vset.pattern.permute.xlu0 0
      %800 = vperm.xlu0 %799, %v717
      %v801 = vpop.permute.xlu0 %800
      %802 = vset.pattern.permute.xlu0 0
      %803 = vperm.xlu0 %802, %v718
      %v804 = vpop.permute.xlu0 %803
      %805 = vset.pattern.permute.xlu0 0
      %806 = vperm.xlu0 %805, %v719
      %v807 = vpop.permute.xlu0 %806
      %808 = vset.pattern.permute.xlu0 0
      %809 = vperm.xlu0 %808, %v720
      %v810 = vpop.permute.xlu0 %809
      %811 = vset.pattern.permute.xlu0 0
      %812 = vperm.xlu0 %811, %v721
      %v813 = vpop.permute.xlu0 %812
      %814 = vset.pattern.permute.xlu0 0
      %815 = vperm.xlu0 %814, %v722
      %v816 = vpop.permute.xlu0 %815
      %817 = vset.pattern.permute.xlu0 0
      %818 = vperm.xlu0 %817, %v723
      %v819 = vpop.permute.xlu0 %818
      %vm820 = vcmp.eq.s32.totalorder %v726, 1
      %vm821 = vcmp.eq.s32.totalorder %v729, 1
      %vm822 = vcmp.eq.s32.totalorder %v732, 1
      %vm823 = vcmp.eq.s32.totalorder %v735, 1
      %vm824 = vcmp.eq.s32.totalorder %v738, 1
      %vm825 = vcmp.eq.s32.totalorder %v741, 1
      %vm826 = vcmp.eq.s32.totalorder %v744, 1
      %vm827 = vcmp.eq.s32.totalorder %v747, 1
      %vm828 = vcmp.eq.s32.totalorder %v750, 1
      %vm829 = vcmp.eq.s32.totalorder %v753, 1
      %vm830 = vcmp.eq.s32.totalorder %v756, 1
      %vm831 = vcmp.eq.s32.totalorder %v759, 1
      %vm832 = vcmp.eq.s32.totalorder %v762, 1
      %vm833 = vcmp.eq.s32.totalorder %v765, 1
      %vm834 = vcmp.eq.s32.totalorder %v768, 1
      %vm835 = vcmp.eq.s32.totalorder %v771, 1
      %vm836 = vcmp.eq.s32.totalorder %v774, 1
      %vm837 = vcmp.eq.s32.totalorder %v777, 1
      %vm838 = vcmp.eq.s32.totalorder %v780, 1
      %vm839 = vcmp.eq.s32.totalorder %v783, 1
      %vm840 = vcmp.eq.s32.totalorder %v786, 1
      %vm841 = vcmp.eq.s32.totalorder %v789, 1
      %vm842 = vcmp.eq.s32.totalorder %v792, 1
      %vm843 = vcmp.eq.s32.totalorder %v795, 1
      %vm844 = vcmp.eq.s32.totalorder %v798, 1
      %vm845 = vcmp.eq.s32.totalorder %v801, 1
      %vm846 = vcmp.eq.s32.totalorder %v804, 1
      %vm847 = vcmp.eq.s32.totalorder %v807, 1
      %vm848 = vcmp.eq.s32.totalorder %v810, 1
      %vm849 = vcmp.eq.s32.totalorder %v813, 1
      %vm850 = vcmp.eq.s32.totalorder %v816, 1
      %vm851 = vcmp.eq.s32.totalorder %v819, 1
      %v852 = vsel %vm820, %v629, 0.0
      %v853 = vsel %vm821, %v628, 0.0
      %v854 = vsel %vm822, %v659, 0.0
      %v855 = vsel %vm823, %v658, 0.0
      %v856 = vsel %vm824, %v657, 0.0
      %v857 = vsel %vm825, %v656, 0.0
      %v858 = vsel %vm826, %v655, 0.0
      %v859 = vsel %vm827, %v654, 0.0
      %v860 = vsel %vm828, %v653, 0.0
      %v861 = vsel %vm829, %v652, 0.0
      %v862 = vsel %vm830, %v651, 0.0
      %v863 = vsel %vm831, %v650, 0.0
      %v864 = vsel %vm832, %v649, 0.0
      %v865 = vsel %vm833, %v648, 0.0
      %v866 = vsel %vm834, %v647, 0.0
      %v867 = vsel %vm835, %v646, 0.0
      %v868 = vsel %vm836, %v645, 0.0
      %v869 = vsel %vm837, %v644, 0.0
      %v870 = vsel %vm838, %v643, 0.0
      %v871 = vsel %vm839, %v642, 0.0
      %v872 = vsel %vm840, %v641, 0.0
      %v873 = vsel %vm841, %v640, 0.0
      %v874 = vsel %vm842, %v639, 0.0
      %v875 = vsel %vm843, %v638, 0.0
      %v876 = vsel %vm844, %v637, 0.0
      %v877 = vsel %vm845, %v636, 0.0
      %v878 = vsel %vm846, %v635, 0.0
      %v879 = vsel %vm847, %v634, 0.0
      %v880 = vsel %vm848, %v633, 0.0
      %v881 = vsel %vm849, %v632, 0.0
      %v882 = vsel %vm850, %v631, 0.0
      %v883 = vsel %vm851, %v630, 0.0
      %v884 = vpack.c.bf16 %v853, %v852
      %v885 = vpack.c.bf16 %v855, %v854
      %v886 = vpack.c.bf16 %v857, %v856
      %v887 = vpack.c.bf16 %v859, %v858
      %v888 = vpack.c.bf16 %v861, %v860
      %v889 = vpack.c.bf16 %v863, %v862
      %v890 = vpack.c.bf16 %v865, %v864
      %v891 = vpack.c.bf16 %v867, %v866
      %v892 = vpack.c.bf16 %v869, %v868
      %v893 = vpack.c.bf16 %v871, %v870
      %v894 = vpack.c.bf16 %v873, %v872
      %v895 = vpack.c.bf16 %v875, %v874
      %v896 = vpack.c.bf16 %v877, %v876
      %v897 = vpack.c.bf16 %v879, %v878
      %v898 = vpack.c.bf16 %v881, %v880
      %v899 = vpack.c.bf16 %v883, %v882
      %vm900 = vcmask 64512
      %901 = vst.msk [vmem:[#allocation2] sm:$0xff] %vm900, %v884
      %902 = vst.msk [vmem:[#allocation2 + $0x8] sm:$0xff] %vm900, %v885
      %903 = vst.msk [vmem:[#allocation2 + $0x10] sm:$0xff] %vm900, %v886
      %904 = vst.msk [vmem:[#allocation2 + $0x18] sm:$0xff] %vm900, %v887
      %905 = vst.msk [vmem:[#allocation2 + $0x20] sm:$0xff] %vm900, %v888
      %906 = vst.msk [vmem:[#allocation2 + $0x28] sm:$0xff] %vm900, %v889
      %907 = vst.msk [vmem:[#allocation2 + $0x30] sm:$0xff] %vm900, %v890
      %908 = vst.msk [vmem:[#allocation2 + $0x38] sm:$0xff] %vm900, %v891
      %909 = vst.msk [vmem:[#allocation2 + $0x40] sm:$0xff] %vm900, %v892
      %910 = vst.msk [vmem:[#allocation2 + $0x48] sm:$0xff] %vm900, %v893
      %911 = vst.msk [vmem:[#allocation2 + $0x50] sm:$0xff] %vm900, %v894
      %912 = vst.msk [vmem:[#allocation2 + $0x58] sm:$0xff] %vm900, %v895
      %913 = vst.msk [vmem:[#allocation2 + $0x60] sm:$0xff] %vm900, %v896
      %914 = vst.msk [vmem:[#allocation2 + $0x68] sm:$0xff] %vm900, %v897
      %915 = vst.msk [vmem:[#allocation2 + $0x70] sm:$0xff] %vm900, %v898
      %916 = vst.msk [vmem:[#allocation2 + $0x78] sm:$0xff] %vm900, %v899
      %v917 = vsel %vm465, 1, 0
      %v918 = vsel %vm466, 1, 0
      %v919 = vsel %vm467, 1, 0
      %v920 = vsel %vm468, 1, 0
      %v921 = vsel %vm469, 1, 0
      %v922 = vsel %vm470, 1, 0
      %v923 = vsel %vm471, 1, 0
      %v924 = vsel %vm472, 1, 0
      %v925 = vsel %vm473, 1, 0
      %v926 = vsel %vm474, 1, 0
      %v927 = vsel %vm475, 1, 0
      %v928 = vsel %vm476, 1, 0
      %v929 = vsel %vm477, 1, 0
      %v930 = vsel %vm478, 1, 0
      %v931 = vsel %vm479, 1, 0
      %v932 = vsel %vm480, 1, 0
      %v933 = vsel %vm481, 1, 0
      %v934 = vsel %vm482, 1, 0
      %v935 = vsel %vm483, 1, 0
      %v936 = vsel %vm484, 1, 0
      %v937 = vsel %vm485, 1, 0
      %v938 = vsel %vm486, 1, 0
      %v939 = vsel %vm487, 1, 0
      %v940 = vsel %vm488, 1, 0
      %v941 = vsel %vm489, 1, 0
      %v942 = vsel %vm490, 1, 0
      %v943 = vsel %vm491, 1, 0
      %v944 = vsel %vm492, 1, 0
      %v945 = vsel %vm493, 1, 0
      %v946 = vsel %vm494, 1, 0
      %v947 = vsel %vm495, 1, 0
      %v948 = vsel %vm496, 1, 0
      %949 = vset.pattern.permute.xlu0 0
      %950 = vperm.xlu0 %949, %v917
      %v951 = vpop.permute.xlu0 %950
      %952 = vset.pattern.permute.xlu0 0
      %953 = vperm.xlu0 %952, %v918
      %v954 = vpop.permute.xlu0 %953
      %955 = vset.pattern.permute.xlu0 0
      %956 = vperm.xlu0 %955, %v919
      %v957 = vpop.permute.xlu0 %956
      %958 = vset.pattern.permute.xlu0 0
      %959 = vperm.xlu0 %958, %v920
      %v960 = vpop.permute.xlu0 %959
      %961 = vset.pattern.permute.xlu0 0
      %962 = vperm.xlu0 %961, %v921
      %v963 = vpop.permute.xlu0 %962
      %964 = vset.pattern.permute.xlu0 0
      %965 = vperm.xlu0 %964, %v922
      %v966 = vpop.permute.xlu0 %965
      %967 = vset.pattern.permute.xlu0 0
      %968 = vperm.xlu0 %967, %v923
      %v969 = vpop.permute.xlu0 %968
      %970 = vset.pattern.permute.xlu0 0
      %971 = vperm.xlu0 %970, %v924
      %v972 = vpop.permute.xlu0 %971
      %973 = vset.pattern.permute.xlu0 0
      %974 = vperm.xlu0 %973, %v925
      %v975 = vpop.permute.xlu0 %974
      %976 = vset.pattern.permute.xlu0 0
      %977 = vperm.xlu0 %976, %v926
      %v978 = vpop.permute.xlu0 %977
      %979 = vset.pattern.permute.xlu0 0
      %980 = vperm.xlu0 %979, %v927
      %v981 = vpop.permute.xlu0 %980
      %982 = vset.pattern.permute.xlu0 0
      %983 = vperm.xlu0 %982, %v928
      %v984 = vpop.permute.xlu0 %983
      %985 = vset.pattern.permute.xlu0 0
      %986 = vperm.xlu0 %985, %v929
      %v987 = vpop.permute.xlu0 %986
      %988 = vset.pattern.permute.xlu0 0
      %989 = vperm.xlu0 %988, %v930
      %v990 = vpop.permute.xlu0 %989
      %991 = vset.pattern.permute.xlu0 0
      %992 = vperm.xlu0 %991, %v931
      %v993 = vpop.permute.xlu0 %992
      %994 = vset.pattern.permute.xlu0 0
      %995 = vperm.xlu0 %994, %v932
      %v996 = vpop.permute.xlu0 %995
      %997 = vset.pattern.permute.xlu0 0
      %998 = vperm.xlu0 %997, %v933
      %v999 = vpop.permute.xlu0 %998
      %1000 = vset.pattern.permute.xlu0 0
      %1001 = vperm.xlu0 %1000, %v934
      %v1002 = vpop.permute.xlu0 %1001
      %1003 = vset.pattern.permute.xlu0 0
      %1004 = vperm.xlu0 %1003, %v935
      %v1005 = vpop.permute.xlu0 %1004
      %1006 = vset.pattern.permute.xlu0 0
      %1007 = vperm.xlu0 %1006, %v936
      %v1008 = vpop.permute.xlu0 %1007
      %1009 = vset.pattern.permute.xlu0 0
      %1010 = vperm.xlu0 %1009, %v937
      %v1011 = vpop.permute.xlu0 %1010
      %1012 = vset.pattern.permute.xlu0 0
      %1013 = vperm.xlu0 %1012, %v938
      %v1014 = vpop.permute.xlu0 %1013
      %1015 = vset.pattern.permute.xlu0 0
      %1016 = vperm.xlu0 %1015, %v939
      %v1017 = vpop.permute.xlu0 %1016
      %1018 = vset.pattern.permute.xlu0 0
      %1019 = vperm.xlu0 %1018, %v940
      %v1020 = vpop.permute.xlu0 %1019
      %1021 = vset.pattern.permute.xlu0 0
      %1022 = vperm.xlu0 %1021, %v941
      %v1023 = vpop.permute.xlu0 %1022
      %1024 = vset.pattern.permute.xlu0 0
      %1025 = vperm.xlu0 %1024, %v942
      %v1026 = vpop.permute.xlu0 %1025
      %1027 = vset.pattern.permute.xlu0 0
      %1028 = vperm.xlu0 %1027, %v943
      %v1029 = vpop.permute.xlu0 %1028
      %1030 = vset.pattern.permute.xlu0 0
      %1031 = vperm.xlu0 %1030, %v944
      %v1032 = vpop.permute.xlu0 %1031
      %1033 = vset.pattern.permute.xlu0 0
      %1034 = vperm.xlu0 %1033, %v945
      %v1035 = vpop.permute.xlu0 %1034
      %1036 = vset.pattern.permute.xlu0 0
      %1037 = vperm.xlu0 %1036, %v946
      %v1038 = vpop.permute.xlu0 %1037
      %1039 = vset.pattern.permute.xlu0 0
      %1040 = vperm.xlu0 %1039, %v947
      %v1041 = vpop.permute.xlu0 %1040
      %1042 = vset.pattern.permute.xlu0 0
      %1043 = vperm.xlu0 %1042, %v948
      %v1044 = vpop.permute.xlu0 %1043
      %vm1045 = vcmp.eq.s32.totalorder %v951, 1
      %vm1046 = vcmp.eq.s32.totalorder %v954, 1
      %vm1047 = vcmp.eq.s32.totalorder %v957, 1
      %vm1048 = vcmp.eq.s32.totalorder %v960, 1
      %vm1049 = vcmp.eq.s32.totalorder %v963, 1
      %vm1050 = vcmp.eq.s32.totalorder %v966, 1
      %vm1051 = vcmp.eq.s32.totalorder %v969, 1
      %vm1052 = vcmp.eq.s32.totalorder %v972, 1
      %vm1053 = vcmp.eq.s32.totalorder %v975, 1
      %vm1054 = vcmp.eq.s32.totalorder %v978, 1
      %vm1055 = vcmp.eq.s32.totalorder %v981, 1
      %vm1056 = vcmp.eq.s32.totalorder %v984, 1
      %vm1057 = vcmp.eq.s32.totalorder %v987, 1
      %vm1058 = vcmp.eq.s32.totalorder %v990, 1
      %vm1059 = vcmp.eq.s32.totalorder %v993, 1
      %vm1060 = vcmp.eq.s32.totalorder %v996, 1
      %vm1061 = vcmp.eq.s32.totalorder %v999, 1
      %vm1062 = vcmp.eq.s32.totalorder %v1002, 1
      %vm1063 = vcmp.eq.s32.totalorder %v1005, 1
      %vm1064 = vcmp.eq.s32.totalorder %v1008, 1
      %vm1065 = vcmp.eq.s32.totalorder %v1011, 1
      %vm1066 = vcmp.eq.s32.totalorder %v1014, 1
      %vm1067 = vcmp.eq.s32.totalorder %v1017, 1
      %vm1068 = vcmp.eq.s32.totalorder %v1020, 1
      %vm1069 = vcmp.eq.s32.totalorder %v1023, 1
      %vm1070 = vcmp.eq.s32.totalorder %v1026, 1
      %vm1071 = vcmp.eq.s32.totalorder %v1029, 1
      %vm1072 = vcmp.eq.s32.totalorder %v1032, 1
      %vm1073 = vcmp.eq.s32.totalorder %v1035, 1
      %vm1074 = vcmp.eq.s32.totalorder %v1038, 1
      %vm1075 = vcmp.eq.s32.totalorder %v1041, 1
      %vm1076 = vcmp.eq.s32.totalorder %v1044, 1
      %v1077 = vsel %vm1045, %v399, 0.0
      %v1078 = vsel %vm1046, %v400, 0.0
      %v1079 = vsel %vm1047, %v369, 0.0
      %v1080 = vsel %vm1048, %v370, 0.0
      %v1081 = vsel %vm1049, %v371, 0.0
      %v1082 = vsel %vm1050, %v372, 0.0
      %v1083 = vsel %vm1051, %v373, 0.0
      %v1084 = vsel %vm1052, %v374, 0.0
      %v1085 = vsel %vm1053, %v375, 0.0
      %v1086 = vsel %vm1054, %v376, 0.0
      %v1087 = vsel %vm1055, %v377, 0.0
      %v1088 = vsel %vm1056, %v378, 0.0
      %v1089 = vsel %vm1057, %v379, 0.0
      %v1090 = vsel %vm1058, %v380, 0.0
      %v1091 = vsel %vm1059, %v381, 0.0
      %v1092 = vsel %vm1060, %v382, 0.0
      %v1093 = vsel %vm1061, %v383, 0.0
      %v1094 = vsel %vm1062, %v384, 0.0
      %v1095 = vsel %vm1063, %v385, 0.0
      %v1096 = vsel %vm1064, %v386, 0.0
      %v1097 = vsel %vm1065, %v387, 0.0
      %v1098 = vsel %vm1066, %v388, 0.0
      %v1099 = vsel %vm1067, %v389, 0.0
      %v1100 = vsel %vm1068, %v390, 0.0
      %v1101 = vsel %vm1069, %v391, 0.0
      %v1102 = vsel %vm1070, %v392, 0.0
      %v1103 = vsel %vm1071, %v393, 0.0
      %v1104 = vsel %vm1072, %v394, 0.0
      %v1105 = vsel %vm1073, %v395, 0.0
      %v1106 = vsel %vm1074, %v396, 0.0
      %v1107 = vsel %vm1075, %v397, 0.0
      %v1108 = vsel %vm1076, %v398, 0.0
      %v1109 = vpack.c.bf16 %v1078, %v1077
      %v1110 = vpack.c.bf16 %v1080, %v1079
      %v1111 = vpack.c.bf16 %v1082, %v1081
      %v1112 = vpack.c.bf16 %v1084, %v1083
      %v1113 = vpack.c.bf16 %v1086, %v1085
      %v1114 = vpack.c.bf16 %v1088, %v1087
      %v1115 = vpack.c.bf16 %v1090, %v1089
      %v1116 = vpack.c.bf16 %v1092, %v1091
      %v1117 = vpack.c.bf16 %v1094, %v1093
      %v1118 = vpack.c.bf16 %v1096, %v1095
      %v1119 = vpack.c.bf16 %v1098, %v1097
      %v1120 = vpack.c.bf16 %v1100, %v1099
      %v1121 = vpack.c.bf16 %v1102, %v1101
      %v1122 = vpack.c.bf16 %v1104, %v1103
      %v1123 = vpack.c.bf16 %v1106, %v1105
      %v1124 = vpack.c.bf16 %v1108, %v1107
      %1141 = vrot.lane.b32.xlu0 %v1109, 8
      %v1142 = vpop.permute.xlu0 %1141
      %1143 = vrot.lane.b32.xlu0 %v1110, 8
      %v1144 = vpop.permute.xlu0 %1143
      %1145 = vrot.lane.b32.xlu0 %v1111, 8
      %v1146 = vpop.permute.xlu0 %1145
      %1147 = vrot.lane.b32.xlu0 %v1112, 8
      %v1148 = vpop.permute.xlu0 %1147
      %1149 = vrot.lane.b32.xlu0 %v1113, 8
      %v1150 = vpop.permute.xlu0 %1149
      %1151 = vrot.lane.b32.xlu0 %v1114, 8
      %v1152 = vpop.permute.xlu0 %1151
      %1153 = vrot.lane.b32.xlu0 %v1115, 8
      %v1154 = vpop.permute.xlu0 %1153
      %1155 = vrot.lane.b32.xlu0 %v1116, 8
      %v1156 = vpop.permute.xlu0 %1155
      %1157 = vrot.lane.b32.xlu0 %v1117, 8
      %v1158 = vpop.permute.xlu0 %1157
      %1159 = vrot.lane.b32.xlu0 %v1118, 8
      %v1160 = vpop.permute.xlu0 %1159
      %1161 = vrot.lane.b32.xlu0 %v1119, 8
      %v1162 = vpop.permute.xlu0 %1161
      %1163 = vrot.lane.b32.xlu0 %v1120, 8
      %v1164 = vpop.permute.xlu0 %1163
      %1165 = vrot.lane.b32.xlu0 %v1121, 8
      %v1166 = vpop.permute.xlu0 %1165
      %1167 = vrot.lane.b32.xlu0 %v1122, 8
      %v1168 = vpop.permute.xlu0 %1167
      %1169 = vrot.lane.b32.xlu0 %v1123, 8
      %v1170 = vpop.permute.xlu0 %1169
      %1171 = vrot.lane.b32.xlu0 %v1124, 8
      %v1172 = vpop.permute.xlu0 %1171
      %vm1189 = vcmask 130112
      %1190 = vst.msk [vmem:[#allocation2] sm:$0xff] %vm1189, %v1142
      %1191 = vst.msk [vmem:[#allocation2 + $0x8] sm:$0xff] %vm1189, %v1144
      %1192 = vst.msk [vmem:[#allocation2 + $0x10] sm:$0xff] %vm1189, %v1146
      %1193 = vst.msk [vmem:[#allocation2 + $0x18] sm:$0xff] %vm1189, %v1148
      %1194 = vst.msk [vmem:[#allocation2 + $0x20] sm:$0xff] %vm1189, %v1150
      %1195 = vst.msk [vmem:[#allocation2 + $0x28] sm:$0xff] %vm1189, %v1152
      %1196 = vst.msk [vmem:[#allocation2 + $0x30] sm:$0xff] %vm1189, %v1154
      %1197 = vst.msk [vmem:[#allocation2 + $0x38] sm:$0xff] %vm1189, %v1156
      %1198 = vst.msk [vmem:[#allocation2 + $0x40] sm:$0xff] %vm1189, %v1158
      %1199 = vst.msk [vmem:[#allocation2 + $0x48] sm:$0xff] %vm1189, %v1160
      %1200 = vst.msk [vmem:[#allocation2 + $0x50] sm:$0xff] %vm1189, %v1162
      %1201 = vst.msk [vmem:[#allocation2 + $0x58] sm:$0xff] %vm1189, %v1164
      %1202 = vst.msk [vmem:[#allocation2 + $0x60] sm:$0xff] %vm1189, %v1166
      %1203 = vst.msk [vmem:[#allocation2 + $0x68] sm:$0xff] %vm1189, %v1168
      %1204 = vst.msk [vmem:[#allocation2 + $0x70] sm:$0xff] %vm1189, %v1170
      %1205 = vst.msk [vmem:[#allocation2 + $0x78] sm:$0xff] %vm1189, %v1172
      %v1206 = vrot.slane %v369, 1
      %v1207 = vrot.slane %v370, 1
      %v1208 = vrot.slane %v371, 1
      %v1209 = vrot.slane %v372, 1
      %v1210 = vrot.slane %v373, 1
      %v1211 = vrot.slane %v374, 1
      %v1212 = vrot.slane %v375, 1
      %v1213 = vrot.slane %v376, 1
      %v1214 = vrot.slane %v377, 1
      %v1215 = vrot.slane %v378, 1
      %v1216 = vrot.slane %v379, 1
      %v1217 = vrot.slane %v380, 1
      %v1218 = vrot.slane %v381, 1
      %v1219 = vrot.slane %v382, 1
      %v1220 = vrot.slane %v383, 1
      %v1221 = vrot.slane %v384, 1
      %v1222 = vrot.slane %v385, 1
      %v1223 = vrot.slane %v386, 1
      %v1224 = vrot.slane %v387, 1
      %v1225 = vrot.slane %v388, 1
      %v1226 = vrot.slane %v389, 1
      %v1227 = vrot.slane %v390, 1
      %v1228 = vrot.slane %v391, 1
      %v1229 = vrot.slane %v392, 1
      %v1230 = vrot.slane %v393, 1
      %v1231 = vrot.slane %v394, 1
      %v1232 = vrot.slane %v395, 1
      %v1233 = vrot.slane %v396, 1
      %v1234 = vrot.slane %v397, 1
      %v1235 = vrot.slane %v398, 1
      %v1236 = vrot.slane %v399, 1
      %v1237 = vrot.slane %v400, 1
      %vm1238 = vcmp.lt.s32.totalorder %v626, 7
      %v1239 = vsel %vm1238, %v1236, %v1237
      %v1240 = vsel %vm1238, %v1235, %v1236
      %v1241 = vsel %vm1238, %v1234, %v1235
      %v1242 = vsel %vm1238, %v1233, %v1234
      %v1243 = vsel %vm1238, %v1232, %v1233
      %v1244 = vsel %vm1238, %v1231, %v1232
      %v1245 = vsel %vm1238, %v1230, %v1231
      %v1246 = vsel %vm1238, %v1229, %v1230
      %v1247 = vsel %vm1238, %v1228, %v1229
      %v1248 = vsel %vm1238, %v1227, %v1228
      %v1249 = vsel %vm1238, %v1226, %v1227
      %v1250 = vsel %vm1238, %v1225, %v1226
      %v1251 = vsel %vm1238, %v1224, %v1225
      %v1252 = vsel %vm1238, %v1223, %v1224
      %v1253 = vsel %vm1238, %v1222, %v1223
      %v1254 = vsel %vm1238, %v1221, %v1222
      %v1255 = vsel %vm1238, %v1220, %v1221
      %v1256 = vsel %vm1238, %v1219, %v1220
      %v1257 = vsel %vm1238, %v1218, %v1219
      %v1258 = vsel %vm1238, %v1217, %v1218
      %v1259 = vsel %vm1238, %v1216, %v1217
      %v1260 = vsel %vm1238, %v1215, %v1216
      %v1261 = vsel %vm1238, %v1214, %v1215
      %v1262 = vsel %vm1238, %v1213, %v1214
      %v1263 = vsel %vm1238, %v1212, %v1213
      %v1264 = vsel %vm1238, %v1211, %v1212
      %v1265 = vsel %vm1238, %v1210, %v1211
      %v1266 = vsel %vm1238, %v1209, %v1210
      %v1267 = vsel %vm1238, %v1208, %v1209
      %v1268 = vsel %vm1238, %v1207, %v1208
      %v1269 = vsel %vm1238, %v1206, %v1207
      %v1270 = vsel %vm1238, %v1237, %v1206
      %vm1271 = vmand %vm465, %vm561
      %vm1272 = vmand %vm466, %vm562
      %vm1273 = vmand %vm467, %vm563
      %vm1274 = vmand %vm468, %vm564
      %vm1275 = vmand %vm469, %vm565
      %vm1276 = vmand %vm470, %vm566
      %vm1277 = vmand %vm471, %vm567
      %vm1278 = vmand %vm472, %vm568
      %vm1279 = vmand %vm473, %vm569
      %vm1280 = vmand %vm474, %vm570
      %vm1281 = vmand %vm475, %vm571
      %vm1282 = vmand %vm476, %vm572
      %vm1283 = vmand %vm477, %vm573
      %vm1284 = vmand %vm478, %vm574
      %vm1285 = vmand %vm479, %vm575
      %vm1286 = vmand %vm480, %vm576
      %vm1287 = vmand %vm481, %vm577
      %vm1288 = vmand %vm482, %vm578
      %vm1289 = vmand %vm483, %vm579
      %vm1290 = vmand %vm484, %vm580
      %vm1291 = vmand %vm485, %vm581
      %vm1292 = vmand %vm486, %vm582
      %vm1293 = vmand %vm487, %vm583
      %vm1294 = vmand %vm488, %vm584
      %vm1295 = vmand %vm489, %vm585
      %vm1296 = vmand %vm490, %vm586
      %vm1297 = vmand %vm491, %vm587
      %vm1298 = vmand %vm492, %vm588
      %vm1299 = vmand %vm493, %vm589
      %vm1300 = vmand %vm494, %vm590
      %vm1301 = vmand %vm495, %vm591
      %vm1302 = vmand %vm496, %vm592
      %v1303 = vsel %vm1271, 1, 0
      %v1304 = vsel %vm1272, 1, 0
      %v1305 = vsel %vm1273, 1, 0
      %v1306 = vsel %vm1274, 1, 0
      %v1307 = vsel %vm1275, 1, 0
      %v1308 = vsel %vm1276, 1, 0
      %v1309 = vsel %vm1277, 1, 0
      %v1310 = vsel %vm1278, 1, 0
      %v1311 = vsel %vm1279, 1, 0
      %v1312 = vsel %vm1280, 1, 0
      %v1313 = vsel %vm1281, 1, 0
      %v1314 = vsel %vm1282, 1, 0
      %v1315 = vsel %vm1283, 1, 0
      %v1316 = vsel %vm1284, 1, 0
      %v1317 = vsel %vm1285, 1, 0
      %v1318 = vsel %vm1286, 1, 0
      %v1319 = vsel %vm1287, 1, 0
      %v1320 = vsel %vm1288, 1, 0
      %v1321 = vsel %vm1289, 1, 0
      %v1322 = vsel %vm1290, 1, 0
      %v1323 = vsel %vm1291, 1, 0
      %v1324 = vsel %vm1292, 1, 0
      %v1325 = vsel %vm1293, 1, 0
      %v1326 = vsel %vm1294, 1, 0
      %v1327 = vsel %vm1295, 1, 0
      %v1328 = vsel %vm1296, 1, 0
      %v1329 = vsel %vm1297, 1, 0
      %v1330 = vsel %vm1298, 1, 0
      %v1331 = vsel %vm1299, 1, 0
      %v1332 = vsel %vm1300, 1, 0
      %v1333 = vsel %vm1301, 1, 0
      %v1334 = vsel %vm1302, 1, 0
      %1335 = vset.pattern.permute.xlu0 0
      %1336 = vperm.xlu0 %1335, %v1303
      %v1337 = vpop.permute.xlu0 %1336
      %1338 = vset.pattern.permute.xlu0 0
      %1339 = vperm.xlu0 %1338, %v1304
      %v1340 = vpop.permute.xlu0 %1339
      %1341 = vset.pattern.permute.xlu0 0
      %1342 = vperm.xlu0 %1341, %v1305
      %v1343 = vpop.permute.xlu0 %1342
      %1344 = vset.pattern.permute.xlu0 0
      %1345 = vperm.xlu0 %1344, %v1306
      %v1346 = vpop.permute.xlu0 %1345
      %1347 = vset.pattern.permute.xlu0 0
      %1348 = vperm.xlu0 %1347, %v1307
      %v1349 = vpop.permute.xlu0 %1348
      %1350 = vset.pattern.permute.xlu0 0
      %1351 = vperm.xlu0 %1350, %v1308
      %v1352 = vpop.permute.xlu0 %1351
      %1353 = vset.pattern.permute.xlu0 0
      %1354 = vperm.xlu0 %1353, %v1309
      %v1355 = vpop.permute.xlu0 %1354
      %1356 = vset.pattern.permute.xlu0 0
      %1357 = vperm.xlu0 %1356, %v1310
      %v1358 = vpop.permute.xlu0 %1357
      %1359 = vset.pattern.permute.xlu0 0
      %1360 = vperm.xlu0 %1359, %v1311
      %v1361 = vpop.permute.xlu0 %1360
      %1362 = vset.pattern.permute.xlu0 0
      %1363 = vperm.xlu0 %1362, %v1312
      %v1364 = vpop.permute.xlu0 %1363
      %1365 = vset.pattern.permute.xlu0 0
      %1366 = vperm.xlu0 %1365, %v1313
      %v1367 = vpop.permute.xlu0 %1366
      %1368 = vset.pattern.permute.xlu0 0
      %1369 = vperm.xlu0 %1368, %v1314
      %v1370 = vpop.permute.xlu0 %1369
      %1371 = vset.pattern.permute.xlu0 0
      %1372 = vperm.xlu0 %1371, %v1315
      %v1373 = vpop.permute.xlu0 %1372
      %1374 = vset.pattern.permute.xlu0 0
      %1375 = vperm.xlu0 %1374, %v1316
      %v1376 = vpop.permute.xlu0 %1375
      %1377 = vset.pattern.permute.xlu0 0
      %1378 = vperm.xlu0 %1377, %v1317
      %v1379 = vpop.permute.xlu0 %1378
      %1380 = vset.pattern.permute.xlu0 0
      %1381 = vperm.xlu0 %1380, %v1318
      %v1382 = vpop.permute.xlu0 %1381
      %1383 = vset.pattern.permute.xlu0 0
      %1384 = vperm.xlu0 %1383, %v1319
      %v1385 = vpop.permute.xlu0 %1384
      %1386 = vset.pattern.permute.xlu0 0
      %1387 = vperm.xlu0 %1386, %v1320
      %v1388 = vpop.permute.xlu0 %1387
      %1389 = vset.pattern.permute.xlu0 0
      %1390 = vperm.xlu0 %1389, %v1321
      %v1391 = vpop.permute.xlu0 %1390
      %1392 = vset.pattern.permute.xlu0 0
      %1393 = vperm.xlu0 %1392, %v1322
      %v1394 = vpop.permute.xlu0 %1393
      %1395 = vset.pattern.permute.xlu0 0
      %1396 = vperm.xlu0 %1395, %v1323
      %v1397 = vpop.permute.xlu0 %1396
      %1398 = vset.pattern.permute.xlu0 0
      %1399 = vperm.xlu0 %1398, %v1324
      %v1400 = vpop.permute.xlu0 %1399
      %1401 = vset.pattern.permute.xlu0 0
      %1402 = vperm.xlu0 %1401, %v1325
      %v1403 = vpop.permute.xlu0 %1402
      %1404 = vset.pattern.permute.xlu0 0
      %1405 = vperm.xlu0 %1404, %v1326
      %v1406 = vpop.permute.xlu0 %1405
      %1407 = vset.pattern.permute.xlu0 0
      %1408 = vperm.xlu0 %1407, %v1327
      %v1409 = vpop.permute.xlu0 %1408
      %1410 = vset.pattern.permute.xlu0 0
      %1411 = vperm.xlu0 %1410, %v1328
      %v1412 = vpop.permute.xlu0 %1411
      %1413 = vset.pattern.permute.xlu0 0
      %1414 = vperm.xlu0 %1413, %v1329
      %v1415 = vpop.permute.xlu0 %1414
      %1416 = vset.pattern.permute.xlu0 0
      %1417 = vperm.xlu0 %1416, %v1330
      %v1418 = vpop.permute.xlu0 %1417
      %1419 = vset.pattern.permute.xlu0 0
      %1420 = vperm.xlu0 %1419, %v1331
      %v1421 = vpop.permute.xlu0 %1420
      %1422 = vset.pattern.permute.xlu0 0
      %1423 = vperm.xlu0 %1422, %v1332
      %v1424 = vpop.permute.xlu0 %1423
      %1425 = vset.pattern.permute.xlu0 0
      %1426 = vperm.xlu0 %1425, %v1333
      %v1427 = vpop.permute.xlu0 %1426
      %1428 = vset.pattern.permute.xlu0 0
      %1429 = vperm.xlu0 %1428, %v1334
      %v1430 = vpop.permute.xlu0 %1429
      %vm1431 = vcmp.eq.s32.totalorder %v1337, 1
      %vm1432 = vcmp.eq.s32.totalorder %v1340, 1
      %vm1433 = vcmp.eq.s32.totalorder %v1343, 1
      %vm1434 = vcmp.eq.s32.totalorder %v1346, 1
      %vm1435 = vcmp.eq.s32.totalorder %v1349, 1
      %vm1436 = vcmp.eq.s32.totalorder %v1352, 1
      %vm1437 = vcmp.eq.s32.totalorder %v1355, 1
      %vm1438 = vcmp.eq.s32.totalorder %v1358, 1
      %vm1439 = vcmp.eq.s32.totalorder %v1361, 1
      %vm1440 = vcmp.eq.s32.totalorder %v1364, 1
      %vm1441 = vcmp.eq.s32.totalorder %v1367, 1
      %vm1442 = vcmp.eq.s32.totalorder %v1370, 1
      %vm1443 = vcmp.eq.s32.totalorder %v1373, 1
      %vm1444 = vcmp.eq.s32.totalorder %v1376, 1
      %vm1445 = vcmp.eq.s32.totalorder %v1379, 1
      %vm1446 = vcmp.eq.s32.totalorder %v1382, 1
      %vm1447 = vcmp.eq.s32.totalorder %v1385, 1
      %vm1448 = vcmp.eq.s32.totalorder %v1388, 1
      %vm1449 = vcmp.eq.s32.totalorder %v1391, 1
      %vm1450 = vcmp.eq.s32.totalorder %v1394, 1
      %vm1451 = vcmp.eq.s32.totalorder %v1397, 1
      %vm1452 = vcmp.eq.s32.totalorder %v1400, 1
      %vm1453 = vcmp.eq.s32.totalorder %v1403, 1
      %vm1454 = vcmp.eq.s32.totalorder %v1406, 1
      %vm1455 = vcmp.eq.s32.totalorder %v1409, 1
      %vm1456 = vcmp.eq.s32.totalorder %v1412, 1
      %vm1457 = vcmp.eq.s32.totalorder %v1415, 1
      %vm1458 = vcmp.eq.s32.totalorder %v1418, 1
      %vm1459 = vcmp.eq.s32.totalorder %v1421, 1
      %vm1460 = vcmp.eq.s32.totalorder %v1424, 1
      %vm1461 = vcmp.eq.s32.totalorder %v1427, 1
      %vm1462 = vcmp.eq.s32.totalorder %v1430, 1
      %v1463 = vsel %vm1431, %v1239, 0.0
      %v1464 = vsel %vm1432, %v1270, 0.0
      %v1465 = vsel %vm1433, %v1269, 0.0
      %v1466 = vsel %vm1434, %v1268, 0.0
      %v1467 = vsel %vm1435, %v1267, 0.0
      %v1468 = vsel %vm1436, %v1266, 0.0
      %v1469 = vsel %vm1437, %v1265, 0.0
      %v1470 = vsel %vm1438, %v1264, 0.0
      %v1471 = vsel %vm1439, %v1263, 0.0
      %v1472 = vsel %vm1440, %v1262, 0.0
      %v1473 = vsel %vm1441, %v1261, 0.0
      %v1474 = vsel %vm1442, %v1260, 0.0
      %v1475 = vsel %vm1443, %v1259, 0.0
      %v1476 = vsel %vm1444, %v1258, 0.0
      %v1477 = vsel %vm1445, %v1257, 0.0
      %v1478 = vsel %vm1446, %v1256, 0.0
      %v1479 = vsel %vm1447, %v1255, 0.0
      %v1480 = vsel %vm1448, %v1254, 0.0
      %v1481 = vsel %vm1449, %v1253, 0.0
      %v1482 = vsel %vm1450, %v1252, 0.0
      %v1483 = vsel %vm1451, %v1251, 0.0
      %v1484 = vsel %vm1452, %v1250, 0.0
      %v1485 = vsel %vm1453, %v1249, 0.0
      %v1486 = vsel %vm1454, %v1248, 0.0
      %v1487 = vsel %vm1455, %v1247, 0.0
      %v1488 = vsel %vm1456, %v1246, 0.0
      %v1489 = vsel %vm1457, %v1245, 0.0
      %v1490 = vsel %vm1458, %v1244, 0.0
      %v1491 = vsel %vm1459, %v1243, 0.0
      %v1492 = vsel %vm1460, %v1242, 0.0
      %v1493 = vsel %vm1461, %v1241, 0.0
      %v1494 = vsel %vm1462, %v1240, 0.0
      %v1495 = vpack.c.bf16 %v1464, %v1463
      %v1496 = vpack.c.bf16 %v1466, %v1465
      %v1497 = vpack.c.bf16 %v1468, %v1467
      %v1498 = vpack.c.bf16 %v1470, %v1469
      %v1499 = vpack.c.bf16 %v1472, %v1471
      %v1500 = vpack.c.bf16 %v1474, %v1473
      %v1501 = vpack.c.bf16 %v1476, %v1475
      %v1502 = vpack.c.bf16 %v1478, %v1477
      %v1503 = vpack.c.bf16 %v1480, %v1479
      %v1504 = vpack.c.bf16 %v1482, %v1481
      %v1505 = vpack.c.bf16 %v1484, %v1483
      %v1506 = vpack.c.bf16 %v1486, %v1485
      %v1507 = vpack.c.bf16 %v1488, %v1487
      %v1508 = vpack.c.bf16 %v1490, %v1489
      %v1509 = vpack.c.bf16 %v1492, %v1491
      %v1510 = vpack.c.bf16 %v1494, %v1493
      %1527 = vrot.lane.b32.xlu0 %v1495, 16
      %v1528 = vpop.permute.xlu0 %1527
      %1529 = vrot.lane.b32.xlu0 %v1496, 16
      %v1530 = vpop.permute.xlu0 %1529
      %1531 = vrot.lane.b32.xlu0 %v1497, 16
      %v1532 = vpop.permute.xlu0 %1531
      %1533 = vrot.lane.b32.xlu0 %v1498, 16
      %v1534 = vpop.permute.xlu0 %1533
      %1535 = vrot.lane.b32.xlu0 %v1499, 16
      %v1536 = vpop.permute.xlu0 %1535
      %1537 = vrot.lane.b32.xlu0 %v1500, 16
      %v1538 = vpop.permute.xlu0 %1537
      %1539 = vrot.lane.b32.xlu0 %v1501, 16
      %v1540 = vpop.permute.xlu0 %1539
      %1541 = vrot.lane.b32.xlu0 %v1502, 16
      %v1542 = vpop.permute.xlu0 %1541
      %1543 = vrot.lane.b32.xlu0 %v1503, 16
      %v1544 = vpop.permute.xlu0 %1543
      %1545 = vrot.lane.b32.xlu0 %v1504, 16
      %v1546 = vpop.permute.xlu0 %1545
      %1547 = vrot.lane.b32.xlu0 %v1505, 16
      %v1548 = vpop.permute.xlu0 %1547
      %1549 = vrot.lane.b32.xlu0 %v1506, 16
      %v1550 = vpop.permute.xlu0 %1549
      %1551 = vrot.lane.b32.xlu0 %v1507, 16
      %v1552 = vpop.permute.xlu0 %1551
      %1553 = vrot.lane.b32.xlu0 %v1508, 16
      %v1554 = vpop.permute.xlu0 %1553
      %1555 = vrot.lane.b32.xlu0 %v1509, 16
      %v1556 = vpop.permute.xlu0 %1555
      %1557 = vrot.lane.b32.xlu0 %v1510, 16
      %v1558 = vpop.permute.xlu0 %1557
      %vm1575 = vcmask 195712
      %1576 = vst.msk [vmem:[#allocation2] sm:$0xff] %vm1575, %v1528
      %1577 = vst.msk [vmem:[#allocation2 + $0x8] sm:$0xff] %vm1575, %v1530
      %1578 = vst.msk [vmem:[#allocation2 + $0x10] sm:$0xff] %vm1575, %v1532
      %1579 = vst.msk [vmem:[#allocation2 + $0x18] sm:$0xff] %vm1575, %v1534
      %1580 = vst.msk [vmem:[#allocation2 + $0x20] sm:$0xff] %vm1575, %v1536
      %1581 = vst.msk [vmem:[#allocation2 + $0x28] sm:$0xff] %vm1575, %v1538
      %1582 = vst.msk [vmem:[#allocation2 + $0x30] sm:$0xff] %vm1575, %v1540
      %1583 = vst.msk [vmem:[#allocation2 + $0x38] sm:$0xff] %vm1575, %v1542
      %1584 = vst.msk [vmem:[#allocation2 + $0x40] sm:$0xff] %vm1575, %v1544
      %1585 = vst.msk [vmem:[#allocation2 + $0x48] sm:$0xff] %vm1575, %v1546
      %1586 = vst.msk [vmem:[#allocation2 + $0x50] sm:$0xff] %vm1575, %v1548
      %1587 = vst.msk [vmem:[#allocation2 + $0x58] sm:$0xff] %vm1575, %v1550
      %1588 = vst.msk [vmem:[#allocation2 + $0x60] sm:$0xff] %vm1575, %v1552
      %1589 = vst.msk [vmem:[#allocation2 + $0x68] sm:$0xff] %vm1575, %v1554
      %1590 = vst.msk [vmem:[#allocation2 + $0x70] sm:$0xff] %vm1575, %v1556
      %1591 = vst.msk [vmem:[#allocation2 + $0x78] sm:$0xff] %vm1575, %v1558
      %v1592 = vsel %vm529, 1, 0
      %v1593 = vsel %vm530, 1, 0
      %v1594 = vsel %vm531, 1, 0
      %v1595 = vsel %vm532, 1, 0
      %v1596 = vsel %vm533, 1, 0
      %v1597 = vsel %vm534, 1, 0
      %v1598 = vsel %vm535, 1, 0
      %v1599 = vsel %vm536, 1, 0
      %v1600 = vsel %vm537, 1, 0
      %v1601 = vsel %vm538, 1, 0
      %v1602 = vsel %vm539, 1, 0
      %v1603 = vsel %vm540, 1, 0
      %v1604 = vsel %vm541, 1, 0
      %v1605 = vsel %vm542, 1, 0
      %v1606 = vsel %vm543, 1, 0
      %v1607 = vsel %vm544, 1, 0
      %v1608 = vsel %vm545, 1, 0
      %v1609 = vsel %vm546, 1, 0
      %v1610 = vsel %vm547, 1, 0
      %v1611 = vsel %vm548, 1, 0
      %v1612 = vsel %vm549, 1, 0
      %v1613 = vsel %vm550, 1, 0
      %v1614 = vsel %vm551, 1, 0
      %v1615 = vsel %vm552, 1, 0
      %v1616 = vsel %vm553, 1, 0
      %v1617 = vsel %vm554, 1, 0
      %v1618 = vsel %vm555, 1, 0
      %v1619 = vsel %vm556, 1, 0
      %v1620 = vsel %vm557, 1, 0
      %v1621 = vsel %vm558, 1, 0
      %v1622 = vsel %vm559, 1, 0
      %v1623 = vsel %vm560, 1, 0
      %1624 = vset.pattern.permute.xlu0 0
      %1625 = vperm.xlu0 %1624, %v1592
      %v1626 = vpop.permute.xlu0 %1625
      %1627 = vset.pattern.permute.xlu0 0
      %1628 = vperm.xlu0 %1627, %v1593
      %v1629 = vpop.permute.xlu0 %1628
      %1630 = vset.pattern.permute.xlu0 0
      %1631 = vperm.xlu0 %1630, %v1594
      %v1632 = vpop.permute.xlu0 %1631
      %1633 = vset.pattern.permute.xlu0 0
      %1634 = vperm.xlu0 %1633, %v1595
      %v1635 = vpop.permute.xlu0 %1634
      %1636 = vset.pattern.permute.xlu0 0
      %1637 = vperm.xlu0 %1636, %v1596
      %v1638 = vpop.permute.xlu0 %1637
      %1639 = vset.pattern.permute.xlu0 0
      %1640 = vperm.xlu0 %1639, %v1597
      %v1641 = vpop.permute.xlu0 %1640
      %1642 = vset.pattern.permute.xlu0 0
      %1643 = vperm.xlu0 %1642, %v1598
      %v1644 = vpop.permute.xlu0 %1643
      %1645 = vset.pattern.permute.xlu0 0
      %1646 = vperm.xlu0 %1645, %v1599
      %v1647 = vpop.permute.xlu0 %1646
      %1648 = vset.pattern.permute.xlu0 0
      %1649 = vperm.xlu0 %1648, %v1600
      %v1650 = vpop.permute.xlu0 %1649
      %1651 = vset.pattern.permute.xlu0 0
      %1652 = vperm.xlu0 %1651, %v1601
      %v1653 = vpop.permute.xlu0 %1652
      %1654 = vset.pattern.permute.xlu0 0
      %1655 = vperm.xlu0 %1654, %v1602
      %v1656 = vpop.permute.xlu0 %1655
      %1657 = vset.pattern.permute.xlu0 0
      %1658 = vperm.xlu0 %1657, %v1603
      %v1659 = vpop.permute.xlu0 %1658
      %1660 = vset.pattern.permute.xlu0 0
      %1661 = vperm.xlu0 %1660, %v1604
      %v1662 = vpop.permute.xlu0 %1661
      %1663 = vset.pattern.permute.xlu0 0
      %1664 = vperm.xlu0 %1663, %v1605
      %v1665 = vpop.permute.xlu0 %1664
      %1666 = vset.pattern.permute.xlu0 0
      %1667 = vperm.xlu0 %1666, %v1606
      %v1668 = vpop.permute.xlu0 %1667
      %1669 = vset.pattern.permute.xlu0 0
      %1670 = vperm.xlu0 %1669, %v1607
      %v1671 = vpop.permute.xlu0 %1670
      %1672 = vset.pattern.permute.xlu0 0
      %1673 = vperm.xlu0 %1672, %v1608
      %v1674 = vpop.permute.xlu0 %1673
      %1675 = vset.pattern.permute.xlu0 0
      %1676 = vperm.xlu0 %1675, %v1609
      %v1677 = vpop.permute.xlu0 %1676
      %1678 = vset.pattern.permute.xlu0 0
      %1679 = vperm.xlu0 %1678, %v1610
      %v1680 = vpop.permute.xlu0 %1679
      %1681 = vset.pattern.permute.xlu0 0
      %1682 = vperm.xlu0 %1681, %v1611
      %v1683 = vpop.permute.xlu0 %1682
      %1684 = vset.pattern.permute.xlu0 0
      %1685 = vperm.xlu0 %1684, %v1612
      %v1686 = vpop.permute.xlu0 %1685
      %1687 = vset.pattern.permute.xlu0 0
      %1688 = vperm.xlu0 %1687, %v1613
      %v1689 = vpop.permute.xlu0 %1688
      %1690 = vset.pattern.permute.xlu0 0
      %1691 = vperm.xlu0 %1690, %v1614
      %v1692 = vpop.permute.xlu0 %1691
      %1693 = vset.pattern.permute.xlu0 0
      %1694 = vperm.xlu0 %1693, %v1615
      %v1695 = vpop.permute.xlu0 %1694
      %1696 = vset.pattern.permute.xlu0 0
      %1697 = vperm.xlu0 %1696, %v1616
      %v1698 = vpop.permute.xlu0 %1697
      %1699 = vset.pattern.permute.xlu0 0
      %1700 = vperm.xlu0 %1699, %v1617
      %v1701 = vpop.permute.xlu0 %1700
      %1702 = vset.pattern.permute.xlu0 0
      %1703 = vperm.xlu0 %1702, %v1618
      %v1704 = vpop.permute.xlu0 %1703
      %1705 = vset.pattern.permute.xlu0 0
      %1706 = vperm.xlu0 %1705, %v1619
      %v1707 = vpop.permute.xlu0 %1706
      %1708 = vset.pattern.permute.xlu0 0
      %1709 = vperm.xlu0 %1708, %v1620
      %v1710 = vpop.permute.xlu0 %1709
      %1711 = vset.pattern.permute.xlu0 0
      %1712 = vperm.xlu0 %1711, %v1621
      %v1713 = vpop.permute.xlu0 %1712
      %1714 = vset.pattern.permute.xlu0 0
      %1715 = vperm.xlu0 %1714, %v1622
      %v1716 = vpop.permute.xlu0 %1715
      %1717 = vset.pattern.permute.xlu0 0
      %1718 = vperm.xlu0 %1717, %v1623
      %v1719 = vpop.permute.xlu0 %1718
      %vm1720 = vcmp.eq.s32.totalorder %v1626, 1
      %vm1721 = vcmp.eq.s32.totalorder %v1629, 1
      %vm1722 = vcmp.eq.s32.totalorder %v1632, 1
      %vm1723 = vcmp.eq.s32.totalorder %v1635, 1
      %vm1724 = vcmp.eq.s32.totalorder %v1638, 1
      %vm1725 = vcmp.eq.s32.totalorder %v1641, 1
      %vm1726 = vcmp.eq.s32.totalorder %v1644, 1
      %vm1727 = vcmp.eq.s32.totalorder %v1647, 1
      %vm1728 = vcmp.eq.s32.totalorder %v1650, 1
      %vm1729 = vcmp.eq.s32.totalorder %v1653, 1
      %vm1730 = vcmp.eq.s32.totalorder %v1656, 1
      %vm1731 = vcmp.eq.s32.totalorder %v1659, 1
      %vm1732 = vcmp.eq.s32.totalorder %v1662, 1
      %vm1733 = vcmp.eq.s32.totalorder %v1665, 1
      %vm1734 = vcmp.eq.s32.totalorder %v1668, 1
      %vm1735 = vcmp.eq.s32.totalorder %v1671, 1
      %vm1736 = vcmp.eq.s32.totalorder %v1674, 1
      %vm1737 = vcmp.eq.s32.totalorder %v1677, 1
      %vm1738 = vcmp.eq.s32.totalorder %v1680, 1
      %vm1739 = vcmp.eq.s32.totalorder %v1683, 1
      %vm1740 = vcmp.eq.s32.totalorder %v1686, 1
      %vm1741 = vcmp.eq.s32.totalorder %v1689, 1
      %vm1742 = vcmp.eq.s32.totalorder %v1692, 1
      %vm1743 = vcmp.eq.s32.totalorder %v1695, 1
      %vm1744 = vcmp.eq.s32.totalorder %v1698, 1
      %vm1745 = vcmp.eq.s32.totalorder %v1701, 1
      %vm1746 = vcmp.eq.s32.totalorder %v1704, 1
      %vm1747 = vcmp.eq.s32.totalorder %v1707, 1
      %vm1748 = vcmp.eq.s32.totalorder %v1710, 1
      %vm1749 = vcmp.eq.s32.totalorder %v1713, 1
      %vm1750 = vcmp.eq.s32.totalorder %v1716, 1
      %vm1751 = vcmp.eq.s32.totalorder %v1719, 1
      %v1752 = vsel %vm1720, %v659, 0.0
      %v1753 = vsel %vm1721, %v658, 0.0
      %v1754 = vsel %vm1722, %v657, 0.0
      %v1755 = vsel %vm1723, %v656, 0.0
      %v1756 = vsel %vm1724, %v655, 0.0
      %v1757 = vsel %vm1725, %v654, 0.0
      %v1758 = vsel %vm1726, %v653, 0.0
      %v1759 = vsel %vm1727, %v652, 0.0
      %v1760 = vsel %vm1728, %v651, 0.0
      %v1761 = vsel %vm1729, %v650, 0.0
      %v1762 = vsel %vm1730, %v649, 0.0
      %v1763 = vsel %vm1731, %v648, 0.0
      %v1764 = vsel %vm1732, %v647, 0.0
      %v1765 = vsel %vm1733, %v646, 0.0
      %v1766 = vsel %vm1734, %v645, 0.0
      %v1767 = vsel %vm1735, %v644, 0.0
      %v1768 = vsel %vm1736, %v643, 0.0
      %v1769 = vsel %vm1737, %v642, 0.0
      %v1770 = vsel %vm1738, %v641, 0.0
      %v1771 = vsel %vm1739, %v640, 0.0
      %v1772 = vsel %vm1740, %v639, 0.0
      %v1773 = vsel %vm1741, %v638, 0.0
      %v1774 = vsel %vm1742, %v637, 0.0
      %v1775 = vsel %vm1743, %v636, 0.0
      %v1776 = vsel %vm1744, %v635, 0.0
      %v1777 = vsel %vm1745, %v634, 0.0
      %v1778 = vsel %vm1746, %v633, 0.0
      %v1779 = vsel %vm1747, %v632, 0.0
      %v1780 = vsel %vm1748, %v631, 0.0
      %v1781 = vsel %vm1749, %v630, 0.0
      %v1782 = vsel %vm1750, %v629, 0.0
      %v1783 = vsel %vm1751, %v628, 0.0
      %v1784 = vpack.c.bf16 %v1753, %v1752
      %v1785 = vpack.c.bf16 %v1755, %v1754
      %v1786 = vpack.c.bf16 %v1757, %v1756
      %v1787 = vpack.c.bf16 %v1759, %v1758
      %v1788 = vpack.c.bf16 %v1761, %v1760
      %v1789 = vpack.c.bf16 %v1763, %v1762
      %v1790 = vpack.c.bf16 %v1765, %v1764
      %v1791 = vpack.c.bf16 %v1767, %v1766
      %v1792 = vpack.c.bf16 %v1769, %v1768
      %v1793 = vpack.c.bf16 %v1771, %v1770
      %v1794 = vpack.c.bf16 %v1773, %v1772
      %v1795 = vpack.c.bf16 %v1775, %v1774
      %v1796 = vpack.c.bf16 %v1777, %v1776
      %v1797 = vpack.c.bf16 %v1779, %v1778
      %v1798 = vpack.c.bf16 %v1781, %v1780
      %v1799 = vpack.c.bf16 %v1783, %v1782
      %1816 = vrot.lane.b32.xlu0 %v1784, 24
      %v1817 = vpop.permute.xlu0 %1816
      %1818 = vrot.lane.b32.xlu0 %v1785, 24
      %v1819 = vpop.permute.xlu0 %1818
      %1820 = vrot.lane.b32.xlu0 %v1786, 24
      %v1821 = vpop.permute.xlu0 %1820
      %1822 = vrot.lane.b32.xlu0 %v1787, 24
      %v1823 = vpop.permute.xlu0 %1822
      %1824 = vrot.lane.b32.xlu0 %v1788, 24
      %v1825 = vpop.permute.xlu0 %1824
      %1826 = vrot.lane.b32.xlu0 %v1789, 24
      %v1827 = vpop.permute.xlu0 %1826
      %1828 = vrot.lane.b32.xlu0 %v1790, 24
      %v1829 = vpop.permute.xlu0 %1828
      %1830 = vrot.lane.b32.xlu0 %v1791, 24
      %v1831 = vpop.permute.xlu0 %1830
      %1832 = vrot.lane.b32.xlu0 %v1792, 24
      %v1833 = vpop.permute.xlu0 %1832
      %1834 = vrot.lane.b32.xlu0 %v1793, 24
      %v1835 = vpop.permute.xlu0 %1834
      %1836 = vrot.lane.b32.xlu0 %v1794, 24
      %v1837 = vpop.permute.xlu0 %1836
      %1838 = vrot.lane.b32.xlu0 %v1795, 24
      %v1839 = vpop.permute.xlu0 %1838
      %1840 = vrot.lane.b32.xlu0 %v1796, 24
      %v1841 = vpop.permute.xlu0 %1840
      %1842 = vrot.lane.b32.xlu0 %v1797, 24
      %v1843 = vpop.permute.xlu0 %1842
      %1844 = vrot.lane.b32.xlu0 %v1798, 24
      %v1845 = vpop.permute.xlu0 %1844
      %1846 = vrot.lane.b32.xlu0 %v1799, 24
      %v1847 = vpop.permute.xlu0 %1846
      %vm1864 = vcmask 261312
      %1865 = vst.msk [vmem:[#allocation2] sm:$0xff] %vm1864, %v1817
      %1866 = vst.msk [vmem:[#allocation2 + $0x8] sm:$0xff] %vm1864, %v1819
      %1867 = vst.msk [vmem:[#allocation2 + $0x10] sm:$0xff] %vm1864, %v1821
      %1868 = vst.msk [vmem:[#allocation2 + $0x18] sm:$0xff] %vm1864, %v1823
      %1869 = vst.msk [vmem:[#allocation2 + $0x20] sm:$0xff] %vm1864, %v1825
      %1870 = vst.msk [vmem:[#allocation2 + $0x28] sm:$0xff] %vm1864, %v1827
      %1871 = vst.msk [vmem:[#allocation2 + $0x30] sm:$0xff] %vm1864, %v1829
      %1872 = vst.msk [vmem:[#allocation2 + $0x38] sm:$0xff] %vm1864, %v1831
      %1873 = vst.msk [vmem:[#allocation2 + $0x40] sm:$0xff] %vm1864, %v1833
      %1874 = vst.msk [vmem:[#allocation2 + $0x48] sm:$0xff] %vm1864, %v1835
      %1875 = vst.msk [vmem:[#allocation2 + $0x50] sm:$0xff] %vm1864, %v1837
      %1876 = vst.msk [vmem:[#allocation2 + $0x58] sm:$0xff] %vm1864, %v1839
      %1877 = vst.msk [vmem:[#allocation2 + $0x60] sm:$0xff] %vm1864, %v1841
      %1878 = vst.msk [vmem:[#allocation2 + $0x68] sm:$0xff] %vm1864, %v1843
      %1879 = vst.msk [vmem:[#allocation2 + $0x70] sm:$0xff] %vm1864, %v1845
      %1880 = vst.msk [vmem:[#allocation2 + $0x78] sm:$0xff] %vm1864, %v1847
      %v1913 = vunpack.c.l.b16 %v337
      %v1914 = vunpack.c.l.b16 %v338
      %v1915 = vunpack.c.l.b16 %v339
      %v1916 = vunpack.c.l.b16 %v340
      %v1917 = vunpack.c.l.b16 %v341
      %v1918 = vunpack.c.l.b16 %v342
      %v1919 = vunpack.c.l.b16 %v343
      %v1920 = vunpack.c.l.b16 %v344
      %v1921 = vunpack.c.l.b16 %v345
      %v1922 = vunpack.c.l.b16 %v346
      %v1923 = vunpack.c.l.b16 %v347
      %v1924 = vunpack.c.l.b16 %v348
      %v1925 = vunpack.c.l.b16 %v349
      %v1926 = vunpack.c.l.b16 %v350
      %v1927 = vunpack.c.l.b16 %v351
      %v1928 = vunpack.c.l.b16 %v352
      %v1929 = vunpack.c.l.b16 %v353
      %v1930 = vunpack.c.l.b16 %v354
      %v1931 = vunpack.c.l.b16 %v355
      %v1932 = vunpack.c.l.b16 %v356
      %v1933 = vunpack.c.l.b16 %v357
      %v1934 = vunpack.c.l.b16 %v358
      %v1935 = vunpack.c.l.b16 %v359
      %v1936 = vunpack.c.l.b16 %v360
      %v1937 = vunpack.c.l.b16 %v361
      %v1938 = vunpack.c.l.b16 %v362
      %v1939 = vunpack.c.l.b16 %v363
      %v1940 = vunpack.c.l.b16 %v364
      %v1941 = vunpack.c.l.b16 %v365
      %v1942 = vunpack.c.l.b16 %v366
      %v1943 = vunpack.c.l.b16 %v367
      %v1944 = vunpack.c.l.b16 %v368
      %v1945 = vpack.c.b16 %v1914, %v1913
      %v1946 = vpack.c.b16 %v1916, %v1915
      %v1947 = vpack.c.b16 %v1918, %v1917
      %v1948 = vpack.c.b16 %v1920, %v1919
      %v1949 = vpack.c.b16 %v1922, %v1921
      %v1950 = vpack.c.b16 %v1924, %v1923
      %v1951 = vpack.c.b16 %v1926, %v1925
      %v1952 = vpack.c.b16 %v1928, %v1927
      %v1953 = vpack.c.b16 %v1930, %v1929
      %v1954 = vpack.c.b16 %v1932, %v1931
      %v1955 = vpack.c.b16 %v1934, %v1933
      %v1956 = vpack.c.b16 %v1936, %v1935
      %v1957 = vpack.c.b16 %v1938, %v1937
      %v1958 = vpack.c.b16 %v1940, %v1939
      %v1959 = vpack.c.b16 %v1942, %v1941
      %v1960 = vpack.c.b16 %v1944, %v1943
      %1961 = vrot.lane.b32.xlu0 %v1945, 32
      %v1962 = vpop.permute.xlu0 %1961
      %1963 = vrot.lane.b32.xlu0 %v1946, 32
      %v1964 = vpop.permute.xlu0 %1963
      %1965 = vrot.lane.b32.xlu0 %v1947, 32
      %v1966 = vpop.permute.xlu0 %1965
      %1967 = vrot.lane.b32.xlu0 %v1948, 32
      %v1968 = vpop.permute.xlu0 %1967
      %1969 = vrot.lane.b32.xlu0 %v1949, 32
      %v1970 = vpop.permute.xlu0 %1969
      %1971 = vrot.lane.b32.xlu0 %v1950, 32
      %v1972 = vpop.permute.xlu0 %1971
      %1973 = vrot.lane.b32.xlu0 %v1951, 32
      %v1974 = vpop.permute.xlu0 %1973
      %1975 = vrot.lane.b32.xlu0 %v1952, 32
      %v1976 = vpop.permute.xlu0 %1975
      %1977 = vrot.lane.b32.xlu0 %v1953, 32
      %v1978 = vpop.permute.xlu0 %1977
      %1979 = vrot.lane.b32.xlu0 %v1954, 32
      %v1980 = vpop.permute.xlu0 %1979
      %1981 = vrot.lane.b32.xlu0 %v1955, 32
      %v1982 = vpop.permute.xlu0 %1981
      %1983 = vrot.lane.b32.xlu0 %v1956, 32
      %v1984 = vpop.permute.xlu0 %1983
      %1985 = vrot.lane.b32.xlu0 %v1957, 32
      %v1986 = vpop.permute.xlu0 %1985
      %1987 = vrot.lane.b32.xlu0 %v1958, 32
      %v1988 = vpop.permute.xlu0 %1987
      %1989 = vrot.lane.b32.xlu0 %v1959, 32
      %v1990 = vpop.permute.xlu0 %1989
      %1991 = vrot.lane.b32.xlu0 %v1960, 32
      %v1992 = vpop.permute.xlu0 %1991
      %vm2009 = vcmask 326912
      %2010 = vst.msk [vmem:[#allocation2] sm:$0xff] %vm2009, %v1962
      %2011 = vst.msk [vmem:[#allocation2 + $0x8] sm:$0xff] %vm2009, %v1964
      %2012 = vst.msk [vmem:[#allocation2 + $0x10] sm:$0xff] %vm2009, %v1966
      %2013 = vst.msk [vmem:[#allocation2 + $0x18] sm:$0xff] %vm2009, %v1968
      %2014 = vst.msk [vmem:[#allocation2 + $0x20] sm:$0xff] %vm2009, %v1970
      %2015 = vst.msk [vmem:[#allocation2 + $0x28] sm:$0xff] %vm2009, %v1972
      %2016 = vst.msk [vmem:[#allocation2 + $0x30] sm:$0xff] %vm2009, %v1974
      %2017 = vst.msk [vmem:[#allocation2 + $0x38] sm:$0xff] %vm2009, %v1976
      %2018 = vst.msk [vmem:[#allocation2 + $0x40] sm:$0xff] %vm2009, %v1978
      %2019 = vst.msk [vmem:[#allocation2 + $0x48] sm:$0xff] %vm2009, %v1980
      %2020 = vst.msk [vmem:[#allocation2 + $0x50] sm:$0xff] %vm2009, %v1982
      %2021 = vst.msk [vmem:[#allocation2 + $0x58] sm:$0xff] %vm2009, %v1984
      %2022 = vst.msk [vmem:[#allocation2 + $0x60] sm:$0xff] %vm2009, %v1986
      %2023 = vst.msk [vmem:[#allocation2 + $0x68] sm:$0xff] %vm2009, %v1988
      %2024 = vst.msk [vmem:[#allocation2 + $0x70] sm:$0xff] %vm2009, %v1990
      %2025 = vst.msk [vmem:[#allocation2 + $0x78] sm:$0xff] %vm2009, %v1992
      %v2026 = vsel %vm561, 1, 0
      %v2027 = vsel %vm562, 1, 0
      %v2028 = vsel %vm563, 1, 0
      %v2029 = vsel %vm564, 1, 0
      %v2030 = vsel %vm565, 1, 0
      %v2031 = vsel %vm566, 1, 0
      %v2032 = vsel %vm567, 1, 0
      %v2033 = vsel %vm568, 1, 0
      %v2034 = vsel %vm569, 1, 0
      %v2035 = vsel %vm570, 1, 0
      %v2036 = vsel %vm571, 1, 0
      %v2037 = vsel %vm572, 1, 0
      %v2038 = vsel %vm573, 1, 0
      %v2039 = vsel %vm574, 1, 0
      %v2040 = vsel %vm575, 1, 0
      %v2041 = vsel %vm576, 1, 0
      %v2042 = vsel %vm577, 1, 0
      %v2043 = vsel %vm578, 1, 0
      %v2044 = vsel %vm579, 1, 0
      %v2045 = vsel %vm580, 1, 0
      %v2046 = vsel %vm581, 1, 0
      %v2047 = vsel %vm582, 1, 0
      %v2048 = vsel %vm583, 1, 0
      %v2049 = vsel %vm584, 1, 0
      %v2050 = vsel %vm585, 1, 0
      %v2051 = vsel %vm586, 1, 0
      %v2052 = vsel %vm587, 1, 0
      %v2053 = vsel %vm588, 1, 0
      %v2054 = vsel %vm589, 1, 0
      %v2055 = vsel %vm590, 1, 0
      %v2056 = vsel %vm591, 1, 0
      %v2057 = vsel %vm592, 1, 0
      %2058 = vset.pattern.permute.xlu0 0
      %2059 = vperm.xlu0 %2058, %v2026
      %v2060 = vpop.permute.xlu0 %2059
      %2061 = vset.pattern.permute.xlu0 0
      %2062 = vperm.xlu0 %2061, %v2027
      %v2063 = vpop.permute.xlu0 %2062
      %2064 = vset.pattern.permute.xlu0 0
      %2065 = vperm.xlu0 %2064, %v2028
      %v2066 = vpop.permute.xlu0 %2065
      %2067 = vset.pattern.permute.xlu0 0
      %2068 = vperm.xlu0 %2067, %v2029
      %v2069 = vpop.permute.xlu0 %2068
      %2070 = vset.pattern.permute.xlu0 0
      %2071 = vperm.xlu0 %2070, %v2030
      %v2072 = vpop.permute.xlu0 %2071
      %2073 = vset.pattern.permute.xlu0 0
      %2074 = vperm.xlu0 %2073, %v2031
      %v2075 = vpop.permute.xlu0 %2074
      %2076 = vset.pattern.permute.xlu0 0
      %2077 = vperm.xlu0 %2076, %v2032
      %v2078 = vpop.permute.xlu0 %2077
      %2079 = vset.pattern.permute.xlu0 0
      %2080 = vperm.xlu0 %2079, %v2033
      %v2081 = vpop.permute.xlu0 %2080
      %2082 = vset.pattern.permute.xlu0 0
      %2083 = vperm.xlu0 %2082, %v2034
      %v2084 = vpop.permute.xlu0 %2083
      %2085 = vset.pattern.permute.xlu0 0
      %2086 = vperm.xlu0 %2085, %v2035
      %v2087 = vpop.permute.xlu0 %2086
      %2088 = vset.pattern.permute.xlu0 0
      %2089 = vperm.xlu0 %2088, %v2036
      %v2090 = vpop.permute.xlu0 %2089
      %2091 = vset.pattern.permute.xlu0 0
      %2092 = vperm.xlu0 %2091, %v2037
      %v2093 = vpop.permute.xlu0 %2092
      %2094 = vset.pattern.permute.xlu0 0
      %2095 = vperm.xlu0 %2094, %v2038
      %v2096 = vpop.permute.xlu0 %2095
      %2097 = vset.pattern.permute.xlu0 0
      %2098 = vperm.xlu0 %2097, %v2039
      %v2099 = vpop.permute.xlu0 %2098
      %2100 = vset.pattern.permute.xlu0 0
      %2101 = vperm.xlu0 %2100, %v2040
      %v2102 = vpop.permute.xlu0 %2101
      %2103 = vset.pattern.permute.xlu0 0
      %2104 = vperm.xlu0 %2103, %v2041
      %v2105 = vpop.permute.xlu0 %2104
      %2106 = vset.pattern.permute.xlu0 0
      %2107 = vperm.xlu0 %2106, %v2042
      %v2108 = vpop.permute.xlu0 %2107
      %2109 = vset.pattern.permute.xlu0 0
      %2110 = vperm.xlu0 %2109, %v2043
      %v2111 = vpop.permute.xlu0 %2110
      %2112 = vset.pattern.permute.xlu0 0
      %2113 = vperm.xlu0 %2112, %v2044
      %v2114 = vpop.permute.xlu0 %2113
      %2115 = vset.pattern.permute.xlu0 0
      %2116 = vperm.xlu0 %2115, %v2045
      %v2117 = vpop.permute.xlu0 %2116
      %2118 = vset.pattern.permute.xlu0 0
      %2119 = vperm.xlu0 %2118, %v2046
      %v2120 = vpop.permute.xlu0 %2119
      %2121 = vset.pattern.permute.xlu0 0
      %2122 = vperm.xlu0 %2121, %v2047
      %v2123 = vpop.permute.xlu0 %2122
      %2124 = vset.pattern.permute.xlu0 0
      %2125 = vperm.xlu0 %2124, %v2048
      %v2126 = vpop.permute.xlu0 %2125
      %2127 = vset.pattern.permute.xlu0 0
      %2128 = vperm.xlu0 %2127, %v2049
      %v2129 = vpop.permute.xlu0 %2128
      %2130 = vset.pattern.permute.xlu0 0
      %2131 = vperm.xlu0 %2130, %v2050
      %v2132 = vpop.permute.xlu0 %2131
      %2133 = vset.pattern.permute.xlu0 0
      %2134 = vperm.xlu0 %2133, %v2051
      %v2135 = vpop.permute.xlu0 %2134
      %2136 = vset.pattern.permute.xlu0 0
      %2137 = vperm.xlu0 %2136, %v2052
      %v2138 = vpop.permute.xlu0 %2137
      %2139 = vset.pattern.permute.xlu0 0
      %2140 = vperm.xlu0 %2139, %v2053
      %v2141 = vpop.permute.xlu0 %2140
      %2142 = vset.pattern.permute.xlu0 0
      %2143 = vperm.xlu0 %2142, %v2054
      %v2144 = vpop.permute.xlu0 %2143
      %2145 = vset.pattern.permute.xlu0 0
      %2146 = vperm.xlu0 %2145, %v2055
      %v2147 = vpop.permute.xlu0 %2146
      %2148 = vset.pattern.permute.xlu0 0
      %2149 = vperm.xlu0 %2148, %v2056
      %v2150 = vpop.permute.xlu0 %2149
      %2151 = vset.pattern.permute.xlu0 0
      %2152 = vperm.xlu0 %2151, %v2057
      %v2153 = vpop.permute.xlu0 %2152
      %vm2154 = vcmp.eq.s32.totalorder %v2060, 1
      %vm2155 = vcmp.eq.s32.totalorder %v2063, 1
      %vm2156 = vcmp.eq.s32.totalorder %v2066, 1
      %vm2157 = vcmp.eq.s32.totalorder %v2069, 1
      %vm2158 = vcmp.eq.s32.totalorder %v2072, 1
      %vm2159 = vcmp.eq.s32.totalorder %v2075, 1
      %vm2160 = vcmp.eq.s32.totalorder %v2078, 1
      %vm2161 = vcmp.eq.s32.totalorder %v2081, 1
      %vm2162 = vcmp.eq.s32.totalorder %v2084, 1
      %vm2163 = vcmp.eq.s32.totalorder %v2087, 1
      %vm2164 = vcmp.eq.s32.totalorder %v2090, 1
      %vm2165 = vcmp.eq.s32.totalorder %v2093, 1
      %vm2166 = vcmp.eq.s32.totalorder %v2096, 1
      %vm2167 = vcmp.eq.s32.totalorder %v2099, 1
      %vm2168 = vcmp.eq.s32.totalorder %v2102, 1
      %vm2169 = vcmp.eq.s32.totalorder %v2105, 1
      %vm2170 = vcmp.eq.s32.totalorder %v2108, 1
      %vm2171 = vcmp.eq.s32.totalorder %v2111, 1
      %vm2172 = vcmp.eq.s32.totalorder %v2114, 1
      %vm2173 = vcmp.eq.s32.totalorder %v2117, 1
      %vm2174 = vcmp.eq.s32.totalorder %v2120, 1
      %vm2175 = vcmp.eq.s32.totalorder %v2123, 1
      %vm2176 = vcmp.eq.s32.totalorder %v2126, 1
      %vm2177 = vcmp.eq.s32.totalorder %v2129, 1
      %vm2178 = vcmp.eq.s32.totalorder %v2132, 1
      %vm2179 = vcmp.eq.s32.totalorder %v2135, 1
      %vm2180 = vcmp.eq.s32.totalorder %v2138, 1
      %vm2181 = vcmp.eq.s32.totalorder %v2141, 1
      %vm2182 = vcmp.eq.s32.totalorder %v2144, 1
      %vm2183 = vcmp.eq.s32.totalorder %v2147, 1
      %vm2184 = vcmp.eq.s32.totalorder %v2150, 1
      %vm2185 = vcmp.eq.s32.totalorder %v2153, 1
      %v2186 = vsel %vm2154, %v1269, 0.0
      %v2187 = vsel %vm2155, %v1268, 0.0
      %v2188 = vsel %vm2156, %v1267, 0.0
      %v2189 = vsel %vm2157, %v1266, 0.0
      %v2190 = vsel %vm2158, %v1265, 0.0
      %v2191 = vsel %vm2159, %v1264, 0.0
      %v2192 = vsel %vm2160, %v1263, 0.0
      %v2193 = vsel %vm2161, %v1262, 0.0
      %v2194 = vsel %vm2162, %v1261, 0.0
      %v2195 = vsel %vm2163, %v1260, 0.0
      %v2196 = vsel %vm2164, %v1259, 0.0
      %v2197 = vsel %vm2165, %v1258, 0.0
      %v2198 = vsel %vm2166, %v1257, 0.0
      %v2199 = vsel %vm2167, %v1256, 0.0
      %v2200 = vsel %vm2168, %v1255, 0.0
      %v2201 = vsel %vm2169, %v1254, 0.0
      %v2202 = vsel %vm2170, %v1253, 0.0
      %v2203 = vsel %vm2171, %v1252, 0.0
      %v2204 = vsel %vm2172, %v1251, 0.0
      %v2205 = vsel %vm2173, %v1250, 0.0
      %v2206 = vsel %vm2174, %v1249, 0.0
      %v2207 = vsel %vm2175, %v1248, 0.0
      %v2208 = vsel %vm2176, %v1247, 0.0
      %v2209 = vsel %vm2177, %v1246, 0.0
      %v2210 = vsel %vm2178, %v1245, 0.0
      %v2211 = vsel %vm2179, %v1244, 0.0
      %v2212 = vsel %vm2180, %v1243, 0.0
      %v2213 = vsel %vm2181, %v1242, 0.0
      %v2214 = vsel %vm2182, %v1241, 0.0
      %v2215 = vsel %vm2183, %v1240, 0.0
      %v2216 = vsel %vm2184, %v1239, 0.0
      %v2217 = vsel %vm2185, %v1270, 0.0
      %v2218 = vpack.c.bf16 %v2187, %v2186
      %v2219 = vpack.c.bf16 %v2189, %v2188
      %v2220 = vpack.c.bf16 %v2191, %v2190
      %v2221 = vpack.c.bf16 %v2193, %v2192
      %v2222 = vpack.c.bf16 %v2195, %v2194
      %v2223 = vpack.c.bf16 %v2197, %v2196
      %v2224 = vpack.c.bf16 %v2199, %v2198
      %v2225 = vpack.c.bf16 %v2201, %v2200
      %v2226 = vpack.c.bf16 %v2203, %v2202
      %v2227 = vpack.c.bf16 %v2205, %v2204
      %v2228 = vpack.c.bf16 %v2207, %v2206
      %v2229 = vpack.c.bf16 %v2209, %v2208
      %v2230 = vpack.c.bf16 %v2211, %v2210
      %v2231 = vpack.c.bf16 %v2213, %v2212
      %v2232 = vpack.c.bf16 %v2215, %v2214
      %v2233 = vpack.c.bf16 %v2217, %v2216
      %2250 = vrot.lane.b32.xlu0 %v2218, 40
      %v2251 = vpop.permute.xlu0 %2250
      %2252 = vrot.lane.b32.xlu0 %v2219, 40
      %v2253 = vpop.permute.xlu0 %2252
      %2254 = vrot.lane.b32.xlu0 %v2220, 40
      %v2255 = vpop.permute.xlu0 %2254
      %2256 = vrot.lane.b32.xlu0 %v2221, 40
      %v2257 = vpop.permute.xlu0 %2256
      %2258 = vrot.lane.b32.xlu0 %v2222, 40
      %v2259 = vpop.permute.xlu0 %2258
      %2260 = vrot.lane.b32.xlu0 %v2223, 40
      %v2261 = vpop.permute.xlu0 %2260
      %2262 = vrot.lane.b32.xlu0 %v2224, 40
      %v2263 = vpop.permute.xlu0 %2262
      %2264 = vrot.lane.b32.xlu0 %v2225, 40
      %v2265 = vpop.permute.xlu0 %2264
      %2266 = vrot.lane.b32.xlu0 %v2226, 40
      %v2267 = vpop.permute.xlu0 %2266
      %2268 = vrot.lane.b32.xlu0 %v2227, 40
      %v2269 = vpop.permute.xlu0 %2268
      %2270 = vrot.lane.b32.xlu0 %v2228, 40
      %v2271 = vpop.permute.xlu0 %2270
      %2272 = vrot.lane.b32.xlu0 %v2229, 40
      %v2273 = vpop.permute.xlu0 %2272
      %2274 = vrot.lane.b32.xlu0 %v2230, 40
      %v2275 = vpop.permute.xlu0 %2274
      %2276 = vrot.lane.b32.xlu0 %v2231, 40
      %v2277 = vpop.permute.xlu0 %2276
      %2278 = vrot.lane.b32.xlu0 %v2232, 40
      %v2279 = vpop.permute.xlu0 %2278
      %2280 = vrot.lane.b32.xlu0 %v2233, 40
      %v2281 = vpop.permute.xlu0 %2280
      %vm2298 = vcmask 392512
      %2299 = vst.msk [vmem:[#allocation2] sm:$0xff] %vm2298, %v2251
      %2300 = vst.msk [vmem:[#allocation2 + $0x8] sm:$0xff] %vm2298, %v2253
      %2301 = vst.msk [vmem:[#allocation2 + $0x10] sm:$0xff] %vm2298, %v2255
      %2302 = vst.msk [vmem:[#allocation2 + $0x18] sm:$0xff] %vm2298, %v2257
      %2303 = vst.msk [vmem:[#allocation2 + $0x20] sm:$0xff] %vm2298, %v2259
      %2304 = vst.msk [vmem:[#allocation2 + $0x28] sm:$0xff] %vm2298, %v2261
      %2305 = vst.msk [vmem:[#allocation2 + $0x30] sm:$0xff] %vm2298, %v2263
      %2306 = vst.msk [vmem:[#allocation2 + $0x38] sm:$0xff] %vm2298, %v2265
      %2307 = vst.msk [vmem:[#allocation2 + $0x40] sm:$0xff] %vm2298, %v2267
      %2308 = vst.msk [vmem:[#allocation2 + $0x48] sm:$0xff] %vm2298, %v2269
      %2309 = vst.msk [vmem:[#allocation2 + $0x50] sm:$0xff] %vm2298, %v2271
      %2310 = vst.msk [vmem:[#allocation2 + $0x58] sm:$0xff] %vm2298, %v2273
      %2311 = vst.msk [vmem:[#allocation2 + $0x60] sm:$0xff] %vm2298, %v2275
      %2312 = vst.msk [vmem:[#allocation2 + $0x68] sm:$0xff] %vm2298, %v2277
      %2313 = vst.msk [vmem:[#allocation2 + $0x70] sm:$0xff] %vm2298, %v2279
      %2314 = vst.msk [vmem:[#allocation2 + $0x78] sm:$0xff] %vm2298, %v2281
      %vm2315 = vmand %vm497, %vm529
      %vm2316 = vmand %vm498, %vm530
      %vm2317 = vmand %vm499, %vm531
      %vm2318 = vmand %vm500, %vm532
      %vm2319 = vmand %vm501, %vm533
      %vm2320 = vmand %vm502, %vm534
      %vm2321 = vmand %vm503, %vm535
      %vm2322 = vmand %vm504, %vm536
      %vm2323 = vmand %vm505, %vm537
      %vm2324 = vmand %vm506, %vm538
      %vm2325 = vmand %vm507, %vm539
      %vm2326 = vmand %vm508, %vm540
      %vm2327 = vmand %vm509, %vm541
      %vm2328 = vmand %vm510, %vm542
      %vm2329 = vmand %vm511, %vm543
      %vm2330 = vmand %vm512, %vm544
      %vm2331 = vmand %vm513, %vm545
      %vm2332 = vmand %vm514, %vm546
      %vm2333 = vmand %vm515, %vm547
      %vm2334 = vmand %vm516, %vm548
      %vm2335 = vmand %vm517, %vm549
      %vm2336 = vmand %vm518, %vm550
      %vm2337 = vmand %vm519, %vm551
      %vm2338 = vmand %vm520, %vm552
      %vm2339 = vmand %vm521, %vm553
      %vm2340 = vmand %vm522, %vm554
      %vm2341 = vmand %vm523, %vm555
      %vm2342 = vmand %vm524, %vm556
      %vm2343 = vmand %vm525, %vm557
      %vm2344 = vmand %vm526, %vm558
      %vm2345 = vmand %vm527, %vm559
      %vm2346 = vmand %vm528, %vm560
      %v2347 = vsel %vm2315, 1, 0
      %v2348 = vsel %vm2316, 1, 0
      %v2349 = vsel %vm2317, 1, 0
      %v2350 = vsel %vm2318, 1, 0
      %v2351 = vsel %vm2319, 1, 0
      %v2352 = vsel %vm2320, 1, 0
      %v2353 = vsel %vm2321, 1, 0
      %v2354 = vsel %vm2322, 1, 0
      %v2355 = vsel %vm2323, 1, 0
      %v2356 = vsel %vm2324, 1, 0
      %v2357 = vsel %vm2325, 1, 0
      %v2358 = vsel %vm2326, 1, 0
      %v2359 = vsel %vm2327, 1, 0
      %v2360 = vsel %vm2328, 1, 0
      %v2361 = vsel %vm2329, 1, 0
      %v2362 = vsel %vm2330, 1, 0
      %v2363 = vsel %vm2331, 1, 0
      %v2364 = vsel %vm2332, 1, 0
      %v2365 = vsel %vm2333, 1, 0
      %v2366 = vsel %vm2334, 1, 0
      %v2367 = vsel %vm2335, 1, 0
      %v2368 = vsel %vm2336, 1, 0
      %v2369 = vsel %vm2337, 1, 0
      %v2370 = vsel %vm2338, 1, 0
      %v2371 = vsel %vm2339, 1, 0
      %v2372 = vsel %vm2340, 1, 0
      %v2373 = vsel %vm2341, 1, 0
      %v2374 = vsel %vm2342, 1, 0
      %v2375 = vsel %vm2343, 1, 0
      %v2376 = vsel %vm2344, 1, 0
      %v2377 = vsel %vm2345, 1, 0
      %v2378 = vsel %vm2346, 1, 0
      %2379 = vset.pattern.permute.xlu0 0
      %2380 = vperm.xlu0 %2379, %v2347
      %v2381 = vpop.permute.xlu0 %2380
      %2382 = vset.pattern.permute.xlu0 0
      %2383 = vperm.xlu0 %2382, %v2348
      %v2384 = vpop.permute.xlu0 %2383
      %2385 = vset.pattern.permute.xlu0 0
      %2386 = vperm.xlu0 %2385, %v2349
      %v2387 = vpop.permute.xlu0 %2386
      %2388 = vset.pattern.permute.xlu0 0
      %2389 = vperm.xlu0 %2388, %v2350
      %v2390 = vpop.permute.xlu0 %2389
      %2391 = vset.pattern.permute.xlu0 0
      %2392 = vperm.xlu0 %2391, %v2351
      %v2393 = vpop.permute.xlu0 %2392
      %2394 = vset.pattern.permute.xlu0 0
      %2395 = vperm.xlu0 %2394, %v2352
      %v2396 = vpop.permute.xlu0 %2395
      %2397 = vset.pattern.permute.xlu0 0
      %2398 = vperm.xlu0 %2397, %v2353
      %v2399 = vpop.permute.xlu0 %2398
      %2400 = vset.pattern.permute.xlu0 0
      %2401 = vperm.xlu0 %2400, %v2354
      %v2402 = vpop.permute.xlu0 %2401
      %2403 = vset.pattern.permute.xlu0 0
      %2404 = vperm.xlu0 %2403, %v2355
      %v2405 = vpop.permute.xlu0 %2404
      %2406 = vset.pattern.permute.xlu0 0
      %2407 = vperm.xlu0 %2406, %v2356
      %v2408 = vpop.permute.xlu0 %2407
      %2409 = vset.pattern.permute.xlu0 0
      %2410 = vperm.xlu0 %2409, %v2357
      %v2411 = vpop.permute.xlu0 %2410
      %2412 = vset.pattern.permute.xlu0 0
      %2413 = vperm.xlu0 %2412, %v2358
      %v2414 = vpop.permute.xlu0 %2413
      %2415 = vset.pattern.permute.xlu0 0
      %2416 = vperm.xlu0 %2415, %v2359
      %v2417 = vpop.permute.xlu0 %2416
      %2418 = vset.pattern.permute.xlu0 0
      %2419 = vperm.xlu0 %2418, %v2360
      %v2420 = vpop.permute.xlu0 %2419
      %2421 = vset.pattern.permute.xlu0 0
      %2422 = vperm.xlu0 %2421, %v2361
      %v2423 = vpop.permute.xlu0 %2422
      %2424 = vset.pattern.permute.xlu0 0
      %2425 = vperm.xlu0 %2424, %v2362
      %v2426 = vpop.permute.xlu0 %2425
      %2427 = vset.pattern.permute.xlu0 0
      %2428 = vperm.xlu0 %2427, %v2363
      %v2429 = vpop.permute.xlu0 %2428
      %2430 = vset.pattern.permute.xlu0 0
      %2431 = vperm.xlu0 %2430, %v2364
      %v2432 = vpop.permute.xlu0 %2431
      %2433 = vset.pattern.permute.xlu0 0
      %2434 = vperm.xlu0 %2433, %v2365
      %v2435 = vpop.permute.xlu0 %2434
      %2436 = vset.pattern.permute.xlu0 0
      %2437 = vperm.xlu0 %2436, %v2366
      %v2438 = vpop.permute.xlu0 %2437
      %2439 = vset.pattern.permute.xlu0 0
      %2440 = vperm.xlu0 %2439, %v2367
      %v2441 = vpop.permute.xlu0 %2440
      %2442 = vset.pattern.permute.xlu0 0
      %2443 = vperm.xlu0 %2442, %v2368
      %v2444 = vpop.permute.xlu0 %2443
      %2445 = vset.pattern.permute.xlu0 0
      %2446 = vperm.xlu0 %2445, %v2369
      %v2447 = vpop.permute.xlu0 %2446
      %2448 = vset.pattern.permute.xlu0 0
      %2449 = vperm.xlu0 %2448, %v2370
      %v2450 = vpop.permute.xlu0 %2449
      %2451 = vset.pattern.permute.xlu0 0
      %2452 = vperm.xlu0 %2451, %v2371
      %v2453 = vpop.permute.xlu0 %2452
      %2454 = vset.pattern.permute.xlu0 0
      %2455 = vperm.xlu0 %2454, %v2372
      %v2456 = vpop.permute.xlu0 %2455
      %2457 = vset.pattern.permute.xlu0 0
      %2458 = vperm.xlu0 %2457, %v2373
      %v2459 = vpop.permute.xlu0 %2458
      %2460 = vset.pattern.permute.xlu0 0
      %2461 = vperm.xlu0 %2460, %v2374
      %v2462 = vpop.permute.xlu0 %2461
      %2463 = vset.pattern.permute.xlu0 0
      %2464 = vperm.xlu0 %2463, %v2375
      %v2465 = vpop.permute.xlu0 %2464
      %2466 = vset.pattern.permute.xlu0 0
      %2467 = vperm.xlu0 %2466, %v2376
      %v2468 = vpop.permute.xlu0 %2467
      %2469 = vset.pattern.permute.xlu0 0
      %2470 = vperm.xlu0 %2469, %v2377
      %v2471 = vpop.permute.xlu0 %2470
      %2472 = vset.pattern.permute.xlu0 0
      %2473 = vperm.xlu0 %2472, %v2378
      %v2474 = vpop.permute.xlu0 %2473
      %vm2475 = vcmp.eq.s32.totalorder %v2381, 1
      %vm2476 = vcmp.eq.s32.totalorder %v2384, 1
      %vm2477 = vcmp.eq.s32.totalorder %v2387, 1
      %vm2478 = vcmp.eq.s32.totalorder %v2390, 1
      %vm2479 = vcmp.eq.s32.totalorder %v2393, 1
      %vm2480 = vcmp.eq.s32.totalorder %v2396, 1
      %vm2481 = vcmp.eq.s32.totalorder %v2399, 1
      %vm2482 = vcmp.eq.s32.totalorder %v2402, 1
      %vm2483 = vcmp.eq.s32.totalorder %v2405, 1
      %vm2484 = vcmp.eq.s32.totalorder %v2408, 1
      %vm2485 = vcmp.eq.s32.totalorder %v2411, 1
      %vm2486 = vcmp.eq.s32.totalorder %v2414, 1
      %vm2487 = vcmp.eq.s32.totalorder %v2417, 1
      %vm2488 = vcmp.eq.s32.totalorder %v2420, 1
      %vm2489 = vcmp.eq.s32.totalorder %v2423, 1
      %vm2490 = vcmp.eq.s32.totalorder %v2426, 1
      %vm2491 = vcmp.eq.s32.totalorder %v2429, 1
      %vm2492 = vcmp.eq.s32.totalorder %v2432, 1
      %vm2493 = vcmp.eq.s32.totalorder %v2435, 1
      %vm2494 = vcmp.eq.s32.totalorder %v2438, 1
      %vm2495 = vcmp.eq.s32.totalorder %v2441, 1
      %vm2496 = vcmp.eq.s32.totalorder %v2444, 1
      %vm2497 = vcmp.eq.s32.totalorder %v2447, 1
      %vm2498 = vcmp.eq.s32.totalorder %v2450, 1
      %vm2499 = vcmp.eq.s32.totalorder %v2453, 1
      %vm2500 = vcmp.eq.s32.totalorder %v2456, 1
      %vm2501 = vcmp.eq.s32.totalorder %v2459, 1
      %vm2502 = vcmp.eq.s32.totalorder %v2462, 1
      %vm2503 = vcmp.eq.s32.totalorder %v2465, 1
      %vm2504 = vcmp.eq.s32.totalorder %v2468, 1
      %vm2505 = vcmp.eq.s32.totalorder %v2471, 1
      %vm2506 = vcmp.eq.s32.totalorder %v2474, 1
      %v2507 = vsel %vm2475, %v657, 0.0
      %v2508 = vsel %vm2476, %v656, 0.0
      %v2509 = vsel %vm2477, %v655, 0.0
      %v2510 = vsel %vm2478, %v654, 0.0
      %v2511 = vsel %vm2479, %v653, 0.0
      %v2512 = vsel %vm2480, %v652, 0.0
      %v2513 = vsel %vm2481, %v651, 0.0
      %v2514 = vsel %vm2482, %v650, 0.0
      %v2515 = vsel %vm2483, %v649, 0.0
      %v2516 = vsel %vm2484, %v648, 0.0
      %v2517 = vsel %vm2485, %v647, 0.0
      %v2518 = vsel %vm2486, %v646, 0.0
      %v2519 = vsel %vm2487, %v645, 0.0
      %v2520 = vsel %vm2488, %v644, 0.0
      %v2521 = vsel %vm2489, %v643, 0.0
      %v2522 = vsel %vm2490, %v642, 0.0
      %v2523 = vsel %vm2491, %v641, 0.0
      %v2524 = vsel %vm2492, %v640, 0.0
      %v2525 = vsel %vm2493, %v639, 0.0
      %v2526 = vsel %vm2494, %v638, 0.0
      %v2527 = vsel %vm2495, %v637, 0.0
      %v2528 = vsel %vm2496, %v636, 0.0
      %v2529 = vsel %vm2497, %v635, 0.0
      %v2530 = vsel %vm2498, %v634, 0.0
      %v2531 = vsel %vm2499, %v633, 0.0
      %v2532 = vsel %vm2500, %v632, 0.0
      %v2533 = vsel %vm2501, %v631, 0.0
      %v2534 = vsel %vm2502, %v630, 0.0
      %v2535 = vsel %vm2503, %v629, 0.0
      %v2536 = vsel %vm2504, %v628, 0.0
      %v2537 = vsel %vm2505, %v659, 0.0
      %v2538 = vsel %vm2506, %v658, 0.0
      %v2539 = vpack.c.bf16 %v2508, %v2507
      %v2540 = vpack.c.bf16 %v2510, %v2509
      %v2541 = vpack.c.bf16 %v2512, %v2511
      %v2542 = vpack.c.bf16 %v2514, %v2513
      %v2543 = vpack.c.bf16 %v2516, %v2515
      %v2544 = vpack.c.bf16 %v2518, %v2517
      %v2545 = vpack.c.bf16 %v2520, %v2519
      %v2546 = vpack.c.bf16 %v2522, %v2521
      %v2547 = vpack.c.bf16 %v2524, %v2523
      %v2548 = vpack.c.bf16 %v2526, %v2525
      %v2549 = vpack.c.bf16 %v2528, %v2527
      %v2550 = vpack.c.bf16 %v2530, %v2529
      %v2551 = vpack.c.bf16 %v2532, %v2531
      %v2552 = vpack.c.bf16 %v2534, %v2533
      %v2553 = vpack.c.bf16 %v2536, %v2535
      %v2554 = vpack.c.bf16 %v2538, %v2537
      %2571 = vrot.lane.b32.xlu0 %v2539, 48
      %v2572 = vpop.permute.xlu0 %2571
      %2573 = vrot.lane.b32.xlu0 %v2540, 48
      %v2574 = vpop.permute.xlu0 %2573
      %2575 = vrot.lane.b32.xlu0 %v2541, 48
      %v2576 = vpop.permute.xlu0 %2575
      %2577 = vrot.lane.b32.xlu0 %v2542, 48
      %v2578 = vpop.permute.xlu0 %2577
      %2579 = vrot.lane.b32.xlu0 %v2543, 48
      %v2580 = vpop.permute.xlu0 %2579
      %2581 = vrot.lane.b32.xlu0 %v2544, 48
      %v2582 = vpop.permute.xlu0 %2581
      %2583 = vrot.lane.b32.xlu0 %v2545, 48
      %v2584 = vpop.permute.xlu0 %2583
      %2585 = vrot.lane.b32.xlu0 %v2546, 48
      %v2586 = vpop.permute.xlu0 %2585
      %2587 = vrot.lane.b32.xlu0 %v2547, 48
      %v2588 = vpop.permute.xlu0 %2587
      %2589 = vrot.lane.b32.xlu0 %v2548, 48
      %v2590 = vpop.permute.xlu0 %2589
      %2591 = vrot.lane.b32.xlu0 %v2549, 48
      %v2592 = vpop.permute.xlu0 %2591
      %2593 = vrot.lane.b32.xlu0 %v2550, 48
      %v2594 = vpop.permute.xlu0 %2593
      %2595 = vrot.lane.b32.xlu0 %v2551, 48
      %v2596 = vpop.permute.xlu0 %2595
      %2597 = vrot.lane.b32.xlu0 %v2552, 48
      %v2598 = vpop.permute.xlu0 %2597
      %2599 = vrot.lane.b32.xlu0 %v2553, 48
      %v2600 = vpop.permute.xlu0 %2599
      %2601 = vrot.lane.b32.xlu0 %v2554, 48
      %v2602 = vpop.permute.xlu0 %2601
      %vm2619 = vcmask 458112
      %2620 = vst.msk [vmem:[#allocation2] sm:$0xff] %vm2619, %v2572
      %2621 = vst.msk [vmem:[#allocation2 + $0x8] sm:$0xff] %vm2619, %v2574
      %2622 = vst.msk [vmem:[#allocation2 + $0x10] sm:$0xff] %vm2619, %v2576
      %2623 = vst.msk [vmem:[#allocation2 + $0x18] sm:$0xff] %vm2619, %v2578
      %2624 = vst.msk [vmem:[#allocation2 + $0x20] sm:$0xff] %vm2619, %v2580
      %2625 = vst.msk [vmem:[#allocation2 + $0x28] sm:$0xff] %vm2619, %v2582
      %2626 = vst.msk [vmem:[#allocation2 + $0x30] sm:$0xff] %vm2619, %v2584
      %2627 = vst.msk [vmem:[#allocation2 + $0x38] sm:$0xff] %vm2619, %v2586
      %2628 = vst.msk [vmem:[#allocation2 + $0x40] sm:$0xff] %vm2619, %v2588
      %2629 = vst.msk [vmem:[#allocation2 + $0x48] sm:$0xff] %vm2619, %v2590
      %2630 = vst.msk [vmem:[#allocation2 + $0x50] sm:$0xff] %vm2619, %v2592
      %2631 = vst.msk [vmem:[#allocation2 + $0x58] sm:$0xff] %vm2619, %v2594
      %2632 = vst.msk [vmem:[#allocation2 + $0x60] sm:$0xff] %vm2619, %v2596
      %2633 = vst.msk [vmem:[#allocation2 + $0x68] sm:$0xff] %vm2619, %v2598
      %2634 = vst.msk [vmem:[#allocation2 + $0x70] sm:$0xff] %vm2619, %v2600
      %2635 = vst.msk [vmem:[#allocation2 + $0x78] sm:$0xff] %vm2619, %v2602
      %v2636 = vsel %vm497, 1, 0
      %v2637 = vsel %vm498, 1, 0
      %v2638 = vsel %vm499, 1, 0
      %v2639 = vsel %vm500, 1, 0
      %v2640 = vsel %vm501, 1, 0
      %v2641 = vsel %vm502, 1, 0
      %v2642 = vsel %vm503, 1, 0
      %v2643 = vsel %vm504, 1, 0
      %v2644 = vsel %vm505, 1, 0
      %v2645 = vsel %vm506, 1, 0
      %v2646 = vsel %vm507, 1, 0
      %v2647 = vsel %vm508, 1, 0
      %v2648 = vsel %vm509, 1, 0
      %v2649 = vsel %vm510, 1, 0
      %v2650 = vsel %vm511, 1, 0
      %v2651 = vsel %vm512, 1, 0
      %v2652 = vsel %vm513, 1, 0
      %v2653 = vsel %vm514, 1, 0
      %v2654 = vsel %vm515, 1, 0
      %v2655 = vsel %vm516, 1, 0
      %v2656 = vsel %vm517, 1, 0
      %v2657 = vsel %vm518, 1, 0
      %v2658 = vsel %vm519, 1, 0
      %v2659 = vsel %vm520, 1, 0
      %v2660 = vsel %vm521, 1, 0
      %v2661 = vsel %vm522, 1, 0
      %v2662 = vsel %vm523, 1, 0
      %v2663 = vsel %vm524, 1, 0
      %v2664 = vsel %vm525, 1, 0
      %v2665 = vsel %vm526, 1, 0
      %v2666 = vsel %vm527, 1, 0
      %v2667 = vsel %vm528, 1, 0
      %2668 = vset.pattern.permute.xlu0 0
      %2669 = vperm.xlu0 %2668, %v2636
      %v2670 = vpop.permute.xlu0 %2669
      %2671 = vset.pattern.permute.xlu0 0
      %2672 = vperm.xlu0 %2671, %v2637
      %v2673 = vpop.permute.xlu0 %2672
      %2674 = vset.pattern.permute.xlu0 0
      %2675 = vperm.xlu0 %2674, %v2638
      %v2676 = vpop.permute.xlu0 %2675
      %2677 = vset.pattern.permute.xlu0 0
      %2678 = vperm.xlu0 %2677, %v2639
      %v2679 = vpop.permute.xlu0 %2678
      %2680 = vset.pattern.permute.xlu0 0
      %2681 = vperm.xlu0 %2680, %v2640
      %v2682 = vpop.permute.xlu0 %2681
      %2683 = vset.pattern.permute.xlu0 0
      %2684 = vperm.xlu0 %2683, %v2641
      %v2685 = vpop.permute.xlu0 %2684
      %2686 = vset.pattern.permute.xlu0 0
      %2687 = vperm.xlu0 %2686, %v2642
      %v2688 = vpop.permute.xlu0 %2687
      %2689 = vset.pattern.permute.xlu0 0
      %2690 = vperm.xlu0 %2689, %v2643
      %v2691 = vpop.permute.xlu0 %2690
      %2692 = vset.pattern.permute.xlu0 0
      %2693 = vperm.xlu0 %2692, %v2644
      %v2694 = vpop.permute.xlu0 %2693
      %2695 = vset.pattern.permute.xlu0 0
      %2696 = vperm.xlu0 %2695, %v2645
      %v2697 = vpop.permute.xlu0 %2696
      %2698 = vset.pattern.permute.xlu0 0
      %2699 = vperm.xlu0 %2698, %v2646
      %v2700 = vpop.permute.xlu0 %2699
      %2701 = vset.pattern.permute.xlu0 0
      %2702 = vperm.xlu0 %2701, %v2647
      %v2703 = vpop.permute.xlu0 %2702
      %2704 = vset.pattern.permute.xlu0 0
      %2705 = vperm.xlu0 %2704, %v2648
      %v2706 = vpop.permute.xlu0 %2705
      %2707 = vset.pattern.permute.xlu0 0
      %2708 = vperm.xlu0 %2707, %v2649
      %v2709 = vpop.permute.xlu0 %2708
      %2710 = vset.pattern.permute.xlu0 0
      %2711 = vperm.xlu0 %2710, %v2650
      %v2712 = vpop.permute.xlu0 %2711
      %2713 = vset.pattern.permute.xlu0 0
      %2714 = vperm.xlu0 %2713, %v2651
      %v2715 = vpop.permute.xlu0 %2714
      %2716 = vset.pattern.permute.xlu0 0
      %2717 = vperm.xlu0 %2716, %v2652
      %v2718 = vpop.permute.xlu0 %2717
      %2719 = vset.pattern.permute.xlu0 0
      %2720 = vperm.xlu0 %2719, %v2653
      %v2721 = vpop.permute.xlu0 %2720
      %2722 = vset.pattern.permute.xlu0 0
      %2723 = vperm.xlu0 %2722, %v2654
      %v2724 = vpop.permute.xlu0 %2723
      %2725 = vset.pattern.permute.xlu0 0
      %2726 = vperm.xlu0 %2725, %v2655
      %v2727 = vpop.permute.xlu0 %2726
      %2728 = vset.pattern.permute.xlu0 0
      %2729 = vperm.xlu0 %2728, %v2656
      %v2730 = vpop.permute.xlu0 %2729
      %2731 = vset.pattern.permute.xlu0 0
      %2732 = vperm.xlu0 %2731, %v2657
      %v2733 = vpop.permute.xlu0 %2732
      %2734 = vset.pattern.permute.xlu0 0
      %2735 = vperm.xlu0 %2734, %v2658
      %v2736 = vpop.permute.xlu0 %2735
      %2737 = vset.pattern.permute.xlu0 0
      %2738 = vperm.xlu0 %2737, %v2659
      %v2739 = vpop.permute.xlu0 %2738
      %2740 = vset.pattern.permute.xlu0 0
      %2741 = vperm.xlu0 %2740, %v2660
      %v2742 = vpop.permute.xlu0 %2741
      %2743 = vset.pattern.permute.xlu0 0
      %2744 = vperm.xlu0 %2743, %v2661
      %v2745 = vpop.permute.xlu0 %2744
      %2746 = vset.pattern.permute.xlu0 0
      %2747 = vperm.xlu0 %2746, %v2662
      %v2748 = vpop.permute.xlu0 %2747
      %2749 = vset.pattern.permute.xlu0 0
      %2750 = vperm.xlu0 %2749, %v2663
      %v2751 = vpop.permute.xlu0 %2750
      %2752 = vset.pattern.permute.xlu0 0
      %2753 = vperm.xlu0 %2752, %v2664
      %v2754 = vpop.permute.xlu0 %2753
      %2755 = vset.pattern.permute.xlu0 0
      %2756 = vperm.xlu0 %2755, %v2665
      %v2757 = vpop.permute.xlu0 %2756
      %2758 = vset.pattern.permute.xlu0 0
      %2759 = vperm.xlu0 %2758, %v2666
      %v2760 = vpop.permute.xlu0 %2759
      %2761 = vset.pattern.permute.xlu0 0
      %2762 = vperm.xlu0 %2761, %v2667
      %v2763 = vpop.permute.xlu0 %2762
      %vm2764 = vcmp.eq.s32.totalorder %v2670, 1
      %vm2765 = vcmp.eq.s32.totalorder %v2673, 1
      %vm2766 = vcmp.eq.s32.totalorder %v2676, 1
      %vm2767 = vcmp.eq.s32.totalorder %v2679, 1
      %vm2768 = vcmp.eq.s32.totalorder %v2682, 1
      %vm2769 = vcmp.eq.s32.totalorder %v2685, 1
      %vm2770 = vcmp.eq.s32.totalorder %v2688, 1
      %vm2771 = vcmp.eq.s32.totalorder %v2691, 1
      %vm2772 = vcmp.eq.s32.totalorder %v2694, 1
      %vm2773 = vcmp.eq.s32.totalorder %v2697, 1
      %vm2774 = vcmp.eq.s32.totalorder %v2700, 1
      %vm2775 = vcmp.eq.s32.totalorder %v2703, 1
      %vm2776 = vcmp.eq.s32.totalorder %v2706, 1
      %vm2777 = vcmp.eq.s32.totalorder %v2709, 1
      %vm2778 = vcmp.eq.s32.totalorder %v2712, 1
      %vm2779 = vcmp.eq.s32.totalorder %v2715, 1
      %vm2780 = vcmp.eq.s32.totalorder %v2718, 1
      %vm2781 = vcmp.eq.s32.totalorder %v2721, 1
      %vm2782 = vcmp.eq.s32.totalorder %v2724, 1
      %vm2783 = vcmp.eq.s32.totalorder %v2727, 1
      %vm2784 = vcmp.eq.s32.totalorder %v2730, 1
      %vm2785 = vcmp.eq.s32.totalorder %v2733, 1
      %vm2786 = vcmp.eq.s32.totalorder %v2736, 1
      %vm2787 = vcmp.eq.s32.totalorder %v2739, 1
      %vm2788 = vcmp.eq.s32.totalorder %v2742, 1
      %vm2789 = vcmp.eq.s32.totalorder %v2745, 1
      %vm2790 = vcmp.eq.s32.totalorder %v2748, 1
      %vm2791 = vcmp.eq.s32.totalorder %v2751, 1
      %vm2792 = vcmp.eq.s32.totalorder %v2754, 1
      %vm2793 = vcmp.eq.s32.totalorder %v2757, 1
      %vm2794 = vcmp.eq.s32.totalorder %v2760, 1
      %vm2795 = vcmp.eq.s32.totalorder %v2763, 1
      %v2796 = vsel %vm2764, %v371, 0.0
      %v2797 = vsel %vm2765, %v372, 0.0
      %v2798 = vsel %vm2766, %v373, 0.0
      %v2799 = vsel %vm2767, %v374, 0.0
      %v2800 = vsel %vm2768, %v375, 0.0
      %v2801 = vsel %vm2769, %v376, 0.0
      %v2802 = vsel %vm2770, %v377, 0.0
      %v2803 = vsel %vm2771, %v378, 0.0
      %v2804 = vsel %vm2772, %v379, 0.0
      %v2805 = vsel %vm2773, %v380, 0.0
      %v2806 = vsel %vm2774, %v381, 0.0
      %v2807 = vsel %vm2775, %v382, 0.0
      %v2808 = vsel %vm2776, %v383, 0.0
      %v2809 = vsel %vm2777, %v384, 0.0
      %v2810 = vsel %vm2778, %v385, 0.0
      %v2811 = vsel %vm2779, %v386, 0.0
      %v2812 = vsel %vm2780, %v387, 0.0
      %v2813 = vsel %vm2781, %v388, 0.0
      %v2814 = vsel %vm2782, %v389, 0.0
      %v2815 = vsel %vm2783, %v390, 0.0
      %v2816 = vsel %vm2784, %v391, 0.0
      %v2817 = vsel %vm2785, %v392, 0.0
      %v2818 = vsel %vm2786, %v393, 0.0
      %v2819 = vsel %vm2787, %v394, 0.0
      %v2820 = vsel %vm2788, %v395, 0.0
      %v2821 = vsel %vm2789, %v396, 0.0
      %v2822 = vsel %vm2790, %v397, 0.0
      %v2823 = vsel %vm2791, %v398, 0.0
      %v2824 = vsel %vm2792, %v399, 0.0
      %v2825 = vsel %vm2793, %v400, 0.0
      %v2826 = vsel %vm2794, %v369, 0.0
      %v2827 = vsel %vm2795, %v370, 0.0
      %v2828 = vpack.c.bf16 %v2797, %v2796
      %v2829 = vpack.c.bf16 %v2799, %v2798
      %v2830 = vpack.c.bf16 %v2801, %v2800
      %v2831 = vpack.c.bf16 %v2803, %v2802
      %v2832 = vpack.c.bf16 %v2805, %v2804
      %v2833 = vpack.c.bf16 %v2807, %v2806
      %v2834 = vpack.c.bf16 %v2809, %v2808
      %v2835 = vpack.c.bf16 %v2811, %v2810
      %v2836 = vpack.c.bf16 %v2813, %v2812
      %v2837 = vpack.c.bf16 %v2815, %v2814
      %v2838 = vpack.c.bf16 %v2817, %v2816
      %v2839 = vpack.c.bf16 %v2819, %v2818
      %v2840 = vpack.c.bf16 %v2821, %v2820
      %v2841 = vpack.c.bf16 %v2823, %v2822
      %v2842 = vpack.c.bf16 %v2825, %v2824
      %v2843 = vpack.c.bf16 %v2827, %v2826
      %2860 = vrot.lane.b32.xlu0 %v2828, 56
      %v2861 = vpop.permute.xlu0 %2860
      %2862 = vrot.lane.b32.xlu0 %v2829, 56
      %v2863 = vpop.permute.xlu0 %2862
      %2864 = vrot.lane.b32.xlu0 %v2830, 56
      %v2865 = vpop.permute.xlu0 %2864
      %2866 = vrot.lane.b32.xlu0 %v2831, 56
      %v2867 = vpop.permute.xlu0 %2866
      %2868 = vrot.lane.b32.xlu0 %v2832, 56
      %v2869 = vpop.permute.xlu0 %2868
      %2870 = vrot.lane.b32.xlu0 %v2833, 56
      %v2871 = vpop.permute.xlu0 %2870
      %2872 = vrot.lane.b32.xlu0 %v2834, 56
      %v2873 = vpop.permute.xlu0 %2872
      %2874 = vrot.lane.b32.xlu0 %v2835, 56
      %v2875 = vpop.permute.xlu0 %2874
      %2876 = vrot.lane.b32.xlu0 %v2836, 56
      %v2877 = vpop.permute.xlu0 %2876
      %2878 = vrot.lane.b32.xlu0 %v2837, 56
      %v2879 = vpop.permute.xlu0 %2878
      %2880 = vrot.lane.b32.xlu0 %v2838, 56
      %v2881 = vpop.permute.xlu0 %2880
      %2882 = vrot.lane.b32.xlu0 %v2839, 56
      %v2883 = vpop.permute.xlu0 %2882
      %2884 = vrot.lane.b32.xlu0 %v2840, 56
      %v2885 = vpop.permute.xlu0 %2884
      %2886 = vrot.lane.b32.xlu0 %v2841, 56
      %v2887 = vpop.permute.xlu0 %2886
      %2888 = vrot.lane.b32.xlu0 %v2842, 56
      %v2889 = vpop.permute.xlu0 %2888
      %2890 = vrot.lane.b32.xlu0 %v2843, 56
      %v2891 = vpop.permute.xlu0 %2890
      %vm2908 = vcmask 523712
      %2909 = vst.msk [vmem:[#allocation2] sm:$0xff] %vm2908, %v2861
      %2910 = vst.msk [vmem:[#allocation2 + $0x8] sm:$0xff] %vm2908, %v2863
      %2911 = vst.msk [vmem:[#allocation2 + $0x10] sm:$0xff] %vm2908, %v2865
      %2912 = vst.msk [vmem:[#allocation2 + $0x18] sm:$0xff] %vm2908, %v2867
      %2913 = vst.msk [vmem:[#allocation2 + $0x20] sm:$0xff] %vm2908, %v2869
      %2914 = vst.msk [vmem:[#allocation2 + $0x28] sm:$0xff] %vm2908, %v2871
      %2915 = vst.msk [vmem:[#allocation2 + $0x30] sm:$0xff] %vm2908, %v2873
      %2916 = vst.msk [vmem:[#allocation2 + $0x38] sm:$0xff] %vm2908, %v2875
      %2917 = vst.msk [vmem:[#allocation2 + $0x40] sm:$0xff] %vm2908, %v2877
      %2918 = vst.msk [vmem:[#allocation2 + $0x48] sm:$0xff] %vm2908, %v2879
      %2919 = vst.msk [vmem:[#allocation2 + $0x50] sm:$0xff] %vm2908, %v2881
      %2920 = vst.msk [vmem:[#allocation2 + $0x58] sm:$0xff] %vm2908, %v2883
      %2921 = vst.msk [vmem:[#allocation2 + $0x60] sm:$0xff] %vm2908, %v2885
      %2922 = vst.msk [vmem:[#allocation2 + $0x68] sm:$0xff] %vm2908, %v2887
      %2923 = vst.msk [vmem:[#allocation2 + $0x70] sm:$0xff] %vm2908, %v2889
      %2924 = vst.msk [vmem:[#allocation2 + $0x78] sm:$0xff] %vm2908, %v2891
      %vm2925 = vmand %vm497, %vm561
      %vm2926 = vmand %vm498, %vm562
      %vm2927 = vmand %vm499, %vm563
      %vm2928 = vmand %vm500, %vm564
      %vm2929 = vmand %vm501, %vm565
      %vm2930 = vmand %vm502, %vm566
      %vm2931 = vmand %vm503, %vm567
      %vm2932 = vmand %vm504, %vm568
      %vm2933 = vmand %vm505, %vm569
      %vm2934 = vmand %vm506, %vm570
      %vm2935 = vmand %vm507, %vm571
      %vm2936 = vmand %vm508, %vm572
      %vm2937 = vmand %vm509, %vm573
      %vm2938 = vmand %vm510, %vm574
      %vm2939 = vmand %vm511, %vm575
      %vm2940 = vmand %vm512, %vm576
      %vm2941 = vmand %vm513, %vm577
      %vm2942 = vmand %vm514, %vm578
      %vm2943 = vmand %vm515, %vm579
      %vm2944 = vmand %vm516, %vm580
      %vm2945 = vmand %vm517, %vm581
      %vm2946 = vmand %vm518, %vm582
      %vm2947 = vmand %vm519, %vm583
      %vm2948 = vmand %vm520, %vm584
      %vm2949 = vmand %vm521, %vm585
      %vm2950 = vmand %vm522, %vm586
      %vm2951 = vmand %vm523, %vm587
      %vm2952 = vmand %vm524, %vm588
      %vm2953 = vmand %vm525, %vm589
      %vm2954 = vmand %vm526, %vm590
      %vm2955 = vmand %vm527, %vm591
      %vm2956 = vmand %vm528, %vm592
      %v2957 = vsel %vm2925, 1, 0
      %v2958 = vsel %vm2926, 1, 0
      %v2959 = vsel %vm2927, 1, 0
      %v2960 = vsel %vm2928, 1, 0
      %v2961 = vsel %vm2929, 1, 0
      %v2962 = vsel %vm2930, 1, 0
      %v2963 = vsel %vm2931, 1, 0
      %v2964 = vsel %vm2932, 1, 0
      %v2965 = vsel %vm2933, 1, 0
      %v2966 = vsel %vm2934, 1, 0
      %v2967 = vsel %vm2935, 1, 0
      %v2968 = vsel %vm2936, 1, 0
      %v2969 = vsel %vm2937, 1, 0
      %v2970 = vsel %vm2938, 1, 0
      %v2971 = vsel %vm2939, 1, 0
      %v2972 = vsel %vm2940, 1, 0
      %v2973 = vsel %vm2941, 1, 0
      %v2974 = vsel %vm2942, 1, 0
      %v2975 = vsel %vm2943, 1, 0
      %v2976 = vsel %vm2944, 1, 0
      %v2977 = vsel %vm2945, 1, 0
      %v2978 = vsel %vm2946, 1, 0
      %v2979 = vsel %vm2947, 1, 0
      %v2980 = vsel %vm2948, 1, 0
      %v2981 = vsel %vm2949, 1, 0
      %v2982 = vsel %vm2950, 1, 0
      %v2983 = vsel %vm2951, 1, 0
      %v2984 = vsel %vm2952, 1, 0
      %v2985 = vsel %vm2953, 1, 0
      %v2986 = vsel %vm2954, 1, 0
      %v2987 = vsel %vm2955, 1, 0
      %v2988 = vsel %vm2956, 1, 0
      %2989 = vset.pattern.permute.xlu0 0
      %2990 = vperm.xlu0 %2989, %v2957
      %v2991 = vpop.permute.xlu0 %2990
      %2992 = vset.pattern.permute.xlu0 0
      %2993 = vperm.xlu0 %2992, %v2958
      %v2994 = vpop.permute.xlu0 %2993
      %2995 = vset.pattern.permute.xlu0 0
      %2996 = vperm.xlu0 %2995, %v2959
      %v2997 = vpop.permute.xlu0 %2996
      %2998 = vset.pattern.permute.xlu0 0
      %2999 = vperm.xlu0 %2998, %v2960
      %v3000 = vpop.permute.xlu0 %2999
      %3001 = vset.pattern.permute.xlu0 0
      %3002 = vperm.xlu0 %3001, %v2961
      %v3003 = vpop.permute.xlu0 %3002
      %3004 = vset.pattern.permute.xlu0 0
      %3005 = vperm.xlu0 %3004, %v2962
      %v3006 = vpop.permute.xlu0 %3005
      %3007 = vset.pattern.permute.xlu0 0
      %3008 = vperm.xlu0 %3007, %v2963
      %v3009 = vpop.permute.xlu0 %3008
      %3010 = vset.pattern.permute.xlu0 0
      %3011 = vperm.xlu0 %3010, %v2964
      %v3012 = vpop.permute.xlu0 %3011
      %3013 = vset.pattern.permute.xlu0 0
      %3014 = vperm.xlu0 %3013, %v2965
      %v3015 = vpop.permute.xlu0 %3014
      %3016 = vset.pattern.permute.xlu0 0
      %3017 = vperm.xlu0 %3016, %v2966
      %v3018 = vpop.permute.xlu0 %3017
      %3019 = vset.pattern.permute.xlu0 0
      %3020 = vperm.xlu0 %3019, %v2967
      %v3021 = vpop.permute.xlu0 %3020
      %3022 = vset.pattern.permute.xlu0 0
      %3023 = vperm.xlu0 %3022, %v2968
      %v3024 = vpop.permute.xlu0 %3023
      %3025 = vset.pattern.permute.xlu0 0
      %3026 = vperm.xlu0 %3025, %v2969
      %v3027 = vpop.permute.xlu0 %3026
      %3028 = vset.pattern.permute.xlu0 0
      %3029 = vperm.xlu0 %3028, %v2970
      %v3030 = vpop.permute.xlu0 %3029
      %3031 = vset.pattern.permute.xlu0 0
      %3032 = vperm.xlu0 %3031, %v2971
      %v3033 = vpop.permute.xlu0 %3032
      %3034 = vset.pattern.permute.xlu0 0
      %3035 = vperm.xlu0 %3034, %v2972
      %v3036 = vpop.permute.xlu0 %3035
      %3037 = vset.pattern.permute.xlu0 0
      %3038 = vperm.xlu0 %3037, %v2973
      %v3039 = vpop.permute.xlu0 %3038
      %3040 = vset.pattern.permute.xlu0 0
      %3041 = vperm.xlu0 %3040, %v2974
      %v3042 = vpop.permute.xlu0 %3041
      %3043 = vset.pattern.permute.xlu0 0
      %3044 = vperm.xlu0 %3043, %v2975
      %v3045 = vpop.permute.xlu0 %3044
      %3046 = vset.pattern.permute.xlu0 0
      %3047 = vperm.xlu0 %3046, %v2976
      %v3048 = vpop.permute.xlu0 %3047
      %3049 = vset.pattern.permute.xlu0 0
      %3050 = vperm.xlu0 %3049, %v2977
      %v3051 = vpop.permute.xlu0 %3050
      %3052 = vset.pattern.permute.xlu0 0
      %3053 = vperm.xlu0 %3052, %v2978
      %v3054 = vpop.permute.xlu0 %3053
      %3055 = vset.pattern.permute.xlu0 0
      %3056 = vperm.xlu0 %3055, %v2979
      %v3057 = vpop.permute.xlu0 %3056
      %3058 = vset.pattern.permute.xlu0 0
      %3059 = vperm.xlu0 %3058, %v2980
      %v3060 = vpop.permute.xlu0 %3059
      %3061 = vset.pattern.permute.xlu0 0
      %3062 = vperm.xlu0 %3061, %v2981
      %v3063 = vpop.permute.xlu0 %3062
      %3064 = vset.pattern.permute.xlu0 0
      %3065 = vperm.xlu0 %3064, %v2982
      %v3066 = vpop.permute.xlu0 %3065
      %3067 = vset.pattern.permute.xlu0 0
      %3068 = vperm.xlu0 %3067, %v2983
      %v3069 = vpop.permute.xlu0 %3068
      %3070 = vset.pattern.permute.xlu0 0
      %3071 = vperm.xlu0 %3070, %v2984
      %v3072 = vpop.permute.xlu0 %3071
      %3073 = vset.pattern.permute.xlu0 0
      %3074 = vperm.xlu0 %3073, %v2985
      %v3075 = vpop.permute.xlu0 %3074
      %3076 = vset.pattern.permute.xlu0 0
      %3077 = vperm.xlu0 %3076, %v2986
      %v3078 = vpop.permute.xlu0 %3077
      %3079 = vset.pattern.permute.xlu0 0
      %3080 = vperm.xlu0 %3079, %v2987
      %v3081 = vpop.permute.xlu0 %3080
      %3082 = vset.pattern.permute.xlu0 0
      %3083 = vperm.xlu0 %3082, %v2988
      %v3084 = vpop.permute.xlu0 %3083
      %vm3085 = vcmp.eq.s32.totalorder %v2991, 1
      %vm3086 = vcmp.eq.s32.totalorder %v2994, 1
      %vm3087 = vcmp.eq.s32.totalorder %v2997, 1
      %vm3088 = vcmp.eq.s32.totalorder %v3000, 1
      %vm3089 = vcmp.eq.s32.totalorder %v3003, 1
      %vm3090 = vcmp.eq.s32.totalorder %v3006, 1
      %vm3091 = vcmp.eq.s32.totalorder %v3009, 1
      %vm3092 = vcmp.eq.s32.totalorder %v3012, 1
      %vm3093 = vcmp.eq.s32.totalorder %v3015, 1
      %vm3094 = vcmp.eq.s32.totalorder %v3018, 1
      %vm3095 = vcmp.eq.s32.totalorder %v3021, 1
      %vm3096 = vcmp.eq.s32.totalorder %v3024, 1
      %vm3097 = vcmp.eq.s32.totalorder %v3027, 1
      %vm3098 = vcmp.eq.s32.totalorder %v3030, 1
      %vm3099 = vcmp.eq.s32.totalorder %v3033, 1
      %vm3100 = vcmp.eq.s32.totalorder %v3036, 1
      %vm3101 = vcmp.eq.s32.totalorder %v3039, 1
      %vm3102 = vcmp.eq.s32.totalorder %v3042, 1
      %vm3103 = vcmp.eq.s32.totalorder %v3045, 1
      %vm3104 = vcmp.eq.s32.totalorder %v3048, 1
      %vm3105 = vcmp.eq.s32.totalorder %v3051, 1
      %vm3106 = vcmp.eq.s32.totalorder %v3054, 1
      %vm3107 = vcmp.eq.s32.totalorder %v3057, 1
      %vm3108 = vcmp.eq.s32.totalorder %v3060, 1
      %vm3109 = vcmp.eq.s32.totalorder %v3063, 1
      %vm3110 = vcmp.eq.s32.totalorder %v3066, 1
      %vm3111 = vcmp.eq.s32.totalorder %v3069, 1
      %vm3112 = vcmp.eq.s32.totalorder %v3072, 1
      %vm3113 = vcmp.eq.s32.totalorder %v3075, 1
      %vm3114 = vcmp.eq.s32.totalorder %v3078, 1
      %vm3115 = vcmp.eq.s32.totalorder %v3081, 1
      %vm3116 = vcmp.eq.s32.totalorder %v3084, 1
      %v3117 = vsel %vm3085, %v1267, 0.0
      %v3118 = vsel %vm3086, %v1266, 0.0
      %v3119 = vsel %vm3087, %v1265, 0.0
      %v3120 = vsel %vm3088, %v1264, 0.0
      %v3121 = vsel %vm3089, %v1263, 0.0
      %v3122 = vsel %vm3090, %v1262, 0.0
      %v3123 = vsel %vm3091, %v1261, 0.0
      %v3124 = vsel %vm3092, %v1260, 0.0
      %v3125 = vsel %vm3093, %v1259, 0.0
      %v3126 = vsel %vm3094, %v1258, 0.0
      %v3127 = vsel %vm3095, %v1257, 0.0
      %v3128 = vsel %vm3096, %v1256, 0.0
      %v3129 = vsel %vm3097, %v1255, 0.0
      %v3130 = vsel %vm3098, %v1254, 0.0
      %v3131 = vsel %vm3099, %v1253, 0.0
      %v3132 = vsel %vm3100, %v1252, 0.0
      %v3133 = vsel %vm3101, %v1251, 0.0
      %v3134 = vsel %vm3102, %v1250, 0.0
      %v3135 = vsel %vm3103, %v1249, 0.0
      %v3136 = vsel %vm3104, %v1248, 0.0
      %v3137 = vsel %vm3105, %v1247, 0.0
      %v3138 = vsel %vm3106, %v1246, 0.0
      %v3139 = vsel %vm3107, %v1245, 0.0
      %v3140 = vsel %vm3108, %v1244, 0.0
      %v3141 = vsel %vm3109, %v1243, 0.0
      %v3142 = vsel %vm3110, %v1242, 0.0
      %v3143 = vsel %vm3111, %v1241, 0.0
      %v3144 = vsel %vm3112, %v1240, 0.0
      %v3145 = vsel %vm3113, %v1239, 0.0
      %v3146 = vsel %vm3114, %v1270, 0.0
      %v3147 = vsel %vm3115, %v1269, 0.0
      %v3148 = vsel %vm3116, %v1268, 0.0
      %v3149 = vpack.c.bf16 %v3118, %v3117
      %v3150 = vpack.c.bf16 %v3120, %v3119
      %v3151 = vpack.c.bf16 %v3122, %v3121
      %v3152 = vpack.c.bf16 %v3124, %v3123
      %v3153 = vpack.c.bf16 %v3126, %v3125
      %v3154 = vpack.c.bf16 %v3128, %v3127
      %v3155 = vpack.c.bf16 %v3130, %v3129
      %v3156 = vpack.c.bf16 %v3132, %v3131
      %v3157 = vpack.c.bf16 %v3134, %v3133
      %v3158 = vpack.c.bf16 %v3136, %v3135
      %v3159 = vpack.c.bf16 %v3138, %v3137
      %v3160 = vpack.c.bf16 %v3140, %v3139
      %v3161 = vpack.c.bf16 %v3142, %v3141
      %v3162 = vpack.c.bf16 %v3144, %v3143
      %v3163 = vpack.c.bf16 %v3146, %v3145
      %v3164 = vpack.c.bf16 %v3148, %v3147
      %3181 = vrot.lane.b32.xlu0 %v3149, 64
      %v3182 = vpop.permute.xlu0 %3181
      %3183 = vrot.lane.b32.xlu0 %v3150, 64
      %v3184 = vpop.permute.xlu0 %3183
      %3185 = vrot.lane.b32.xlu0 %v3151, 64
      %v3186 = vpop.permute.xlu0 %3185
      %3187 = vrot.lane.b32.xlu0 %v3152, 64
      %v3188 = vpop.permute.xlu0 %3187
      %3189 = vrot.lane.b32.xlu0 %v3153, 64
      %v3190 = vpop.permute.xlu0 %3189
      %3191 = vrot.lane.b32.xlu0 %v3154, 64
      %v3192 = vpop.permute.xlu0 %3191
      %3193 = vrot.lane.b32.xlu0 %v3155, 64
      %v3194 = vpop.permute.xlu0 %3193
      %3195 = vrot.lane.b32.xlu0 %v3156, 64
      %v3196 = vpop.permute.xlu0 %3195
      %3197 = vrot.lane.b32.xlu0 %v3157, 64
      %v3198 = vpop.permute.xlu0 %3197
      %3199 = vrot.lane.b32.xlu0 %v3158, 64
      %v3200 = vpop.permute.xlu0 %3199
      %3201 = vrot.lane.b32.xlu0 %v3159, 64
      %v3202 = vpop.permute.xlu0 %3201
      %3203 = vrot.lane.b32.xlu0 %v3160, 64
      %v3204 = vpop.permute.xlu0 %3203
      %3205 = vrot.lane.b32.xlu0 %v3161, 64
      %v3206 = vpop.permute.xlu0 %3205
      %3207 = vrot.lane.b32.xlu0 %v3162, 64
      %v3208 = vpop.permute.xlu0 %3207
      %3209 = vrot.lane.b32.xlu0 %v3163, 64
      %v3210 = vpop.permute.xlu0 %3209
      %3211 = vrot.lane.b32.xlu0 %v3164, 64
      %v3212 = vpop.permute.xlu0 %3211
      %vm3229 = vcmask 589312
      %3230 = vst.msk [vmem:[#allocation2] sm:$0xff] %vm3229, %v3182
      %3231 = vst.msk [vmem:[#allocation2 + $0x8] sm:$0xff] %vm3229, %v3184
      %3232 = vst.msk [vmem:[#allocation2 + $0x10] sm:$0xff] %vm3229, %v3186
      %3233 = vst.msk [vmem:[#allocation2 + $0x18] sm:$0xff] %vm3229, %v3188
      %3234 = vst.msk [vmem:[#allocation2 + $0x20] sm:$0xff] %vm3229, %v3190
      %3235 = vst.msk [vmem:[#allocation2 + $0x28] sm:$0xff] %vm3229, %v3192
      %3236 = vst.msk [vmem:[#allocation2 + $0x30] sm:$0xff] %vm3229, %v3194
      %3237 = vst.msk [vmem:[#allocation2 + $0x38] sm:$0xff] %vm3229, %v3196
      %3238 = vst.msk [vmem:[#allocation2 + $0x40] sm:$0xff] %vm3229, %v3198
      %3239 = vst.msk [vmem:[#allocation2 + $0x48] sm:$0xff] %vm3229, %v3200
      %3240 = vst.msk [vmem:[#allocation2 + $0x50] sm:$0xff] %vm3229, %v3202
      %3241 = vst.msk [vmem:[#allocation2 + $0x58] sm:$0xff] %vm3229, %v3204
      %3242 = vst.msk [vmem:[#allocation2 + $0x60] sm:$0xff] %vm3229, %v3206
      %3243 = vst.msk [vmem:[#allocation2 + $0x68] sm:$0xff] %vm3229, %v3208
      %3244 = vst.msk [vmem:[#allocation2 + $0x70] sm:$0xff] %vm3229, %v3210
      %3245 = vst.msk [vmem:[#allocation2 + $0x78] sm:$0xff] %vm3229, %v3212
      %v3246 = vld [vmem:[#allocation2] sm:$0xff]
      %v3247 = vld [vmem:[#allocation2 + $0x8] sm:$0xff]
      %v3248 = vld [vmem:[#allocation2 + $0x10] sm:$0xff]
      %v3249 = vld [vmem:[#allocation2 + $0x18] sm:$0xff]
      %v3250 = vld [vmem:[#allocation2 + $0x20] sm:$0xff]
      %v3251 = vld [vmem:[#allocation2 + $0x28] sm:$0xff]
      %v3252 = vld [vmem:[#allocation2 + $0x30] sm:$0xff]
      %v3253 = vld [vmem:[#allocation2 + $0x38] sm:$0xff]
      %v3254 = vld [vmem:[#allocation2 + $0x40] sm:$0xff]
      %v3255 = vld [vmem:[#allocation2 + $0x48] sm:$0xff]
      %v3256 = vld [vmem:[#allocation2 + $0x50] sm:$0xff]
      %v3257 = vld [vmem:[#allocation2 + $0x58] sm:$0xff]
      %v3258 = vld [vmem:[#allocation2 + $0x60] sm:$0xff]
      %v3259 = vld [vmem:[#allocation2 + $0x68] sm:$0xff]
      %v3260 = vld [vmem:[#allocation2 + $0x70] sm:$0xff]
      %v3261 = vld [vmem:[#allocation2 + $0x78] sm:$0xff]
      %v3262 = vld [vmem:[%s3] sm:$0xf]
      %v3263 = vld [vmem:[%s3 + $0x4] sm:$0xf]
      %v3264 = vld [vmem:[%s3 + $0x8] sm:$0xf]
      %v3265 = vld [vmem:[%s3 + $0xc] sm:$0xf]
      %v3266 = vld [vmem:[%s3 + $0x10] sm:$0xf]
      %v3267 = vld [vmem:[%s3 + $0x14] sm:$0xf]
      %v3268 = vld [vmem:[%s3 + $0x18] sm:$0xf]
      %v3269 = vld [vmem:[%s3 + $0x1c] sm:$0xf]
      %v3270 = vld [vmem:[%s3 + $0x20] sm:$0xf]
      %v3280 = vunpack.c.l.b16 %v3262
      %v3281 = vunpack.c.l.b16 %v3263
      %v3282 = vunpack.c.l.b16 %v3264
      %v3283 = vunpack.c.l.b16 %v3265
      %v3284 = vunpack.c.l.b16 %v3266
      %v3285 = vunpack.c.l.b16 %v3267
      %v3286 = vunpack.c.l.b16 %v3268
      %v3287 = vunpack.c.l.b16 %v3269
      %v3288 = vunpack.c.l.b16 %v3270
      %v3289 = vpack.c.b16 %v3281, %v3280
      %v3290 = vpack.c.b16 %v3283, %v3282
      %v3291 = vpack.c.b16 %v3285, %v3284
      %v3292 = vpack.c.b16 %v3287, %v3286
      %v3293 = vpack.c.b16 %v3288, %v3288
      %vm3298 = vcmask 588800
      %v3300 = vsel %vm3298, %v3246, 0
      %v3303 = vsel %vm3298, %v3247, 0
      %v3306 = vsel %vm3298, %v3248, 0
      %v3309 = vsel %vm3298, %v3249, 0
      %v3312 = vsel %vm3298, %v3250, 0
      %v3315 = vsel %vm3298, %v3251, 0
      %v3318 = vsel %vm3298, %v3252, 0
      %v3321 = vsel %vm3298, %v3253, 0
      %v3324 = vsel %vm3298, %v3254, 0
      %v3327 = vsel %vm3298, %v3255, 0
      %v3330 = vsel %vm3298, %v3256, 0
      %v3333 = vsel %vm3298, %v3257, 0
      %v3336 = vsel %vm3298, %v3258, 0
      %v3339 = vsel %vm3298, %v3259, 0
      %v3342 = vsel %vm3298, %v3260, 0
      %v3345 = vsel %vm3298, %v3261, 0
      %vm3347 = vcmask 1043456
      %v3349 = vsel %vm3347, %v3293, 0
      %3351 = vmatprep.subr.bf16.mxu0 0
      %3352 = vmatpush1.bf16.msra.mxu0 %v3289
      %3353 = vmatprep.subr.bf16.mxu0 0
      %3354 = vmatpush1.bf16.msra.mxu0 %v3290
      %3355 = vmatprep.subr.bf16.mxu0 0
      %3356 = vmatpush1.bf16.msra.mxu0 %v3291
      %3357 = vmatprep.subr.bf16.mxu0 0
      %3358 = vmatpush1.bf16.msra.mxu0 %v3292
      %3359 = vmatprep.subr.bf16.mxu0 0
      %3360 = vmatpush1.bf16.msra.mxu0 %v3349
      %3361 = vmatprep.subr.bf16.mxu0 0
      %3362 = vmatpush1.bf16.msra.mxu0 0
      %3363 = vmatprep.subr.bf16.mxu0 0
      %3364 = vmatpush1.bf16.msra.mxu0 0
      %3365 = vmatprep.subr.bf16.mxu0 0
      %3366 = vmatpush1.bf16.msra.mxu0 0
      %3367 = vmatprep.subr.bf16.mxu0 0
      %3368 = vmatpush1.bf16.msra.mxu0 0
      %3369 = vmatprep.subr.bf16.mxu0 0
      %3370 = vmatpush1.bf16.msra.mxu0 0
      %3371 = vmatprep.subr.bf16.mxu0 0
      %3372 = vmatpush1.bf16.msra.mxu0 0
      %3373 = vmatprep.subr.bf16.mxu0 0
      %3374 = vmatpush1.bf16.msra.mxu0 0
      %3375 = vmatprep.subr.bf16.mxu0 0
      %3376 = vmatpush1.bf16.msra.mxu0 0
      %3377 = vmatprep.subr.bf16.mxu0 0
      %3378 = vmatpush1.bf16.msra.mxu0 0
      %3379 = vmatprep.subr.bf16.mxu0 0
      %3380 = vmatpush1.bf16.msra.mxu0 0
      %3381 = vmatprep.subr.bf16.mxu0 0
      %3382 = vmatpush1.bf16.msra.mxu0 0
      %3383 = vmatprep.mubr.bf16.mxu0 0
      %3384 = vmatmul.mubr.bf16.gmra.mrb[0].mxu0 %v3300
      %v3385 = vpop.f32.mrb[0].mxu0
      %v3386 = vadd.f32 0.0, %v3385
      %v3387 = vpop.f32.mrb[0].mxu0
      %v3388 = vpop.f32.mrb[0].mxu0
      %v3389 = vadd.f32 0.0, %v3388
      %v3390 = vpop.f32.mrb[0].mxu0
      %3391 = vmatprep.mubr.bf16.mxu0 0
      %3392 = vmatmul.mubr.bf16.gmra.mrb[0].mxu0 %v3303
      %v3393 = vpop.f32.mrb[0].mxu0
      %v3394 = vadd.f32 0.0, %v3393
      %v3395 = vpop.f32.mrb[0].mxu0
      %v3396 = vpop.f32.mrb[0].mxu0
      %v3397 = vadd.f32 0.0, %v3396
      %v3398 = vpop.f32.mrb[0].mxu0
      %3399 = vmatprep.mubr.bf16.mxu0 0
      %3400 = vmatmul.mubr.bf16.gmra.mrb[0].mxu0 %v3306
      %v3401 = vpop.f32.mrb[0].mxu0
      %v3402 = vadd.f32 0.0, %v3401
      %v3403 = vpop.f32.mrb[0].mxu0
      %v3404 = vpop.f32.mrb[0].mxu0
      %v3405 = vadd.f32 0.0, %v3404
      %v3406 = vpop.f32.mrb[0].mxu0
      %3407 = vmatprep.mubr.bf16.mxu0 0
      %3408 = vmatmul.mubr.bf16.gmra.mrb[0].mxu0 %v3309
      %v3409 = vpop.f32.mrb[0].mxu0
      %v3410 = vadd.f32 0.0, %v3409
      %v3411 = vpop.f32.mrb[0].mxu0
      %v3412 = vpop.f32.mrb[0].mxu0
      %v3413 = vadd.f32 0.0, %v3412
      %v3414 = vpop.f32.mrb[0].mxu0
      %3415 = vmatprep.mubr.bf16.mxu0 0
      %3416 = vmatmul.mubr.bf16.gmra.mrb[0].mxu0 %v3312
      %v3417 = vpop.f32.mrb[0].mxu0
      %v3418 = vadd.f32 0.0, %v3417
      %v3419 = vpop.f32.mrb[0].mxu0
      %v3420 = vpop.f32.mrb[0].mxu0
      %v3421 = vadd.f32 0.0, %v3420
      %v3422 = vpop.f32.mrb[0].mxu0
      %3423 = vmatprep.mubr.bf16.mxu0 0
      %3424 = vmatmul.mubr.bf16.gmra.mrb[0].mxu0 %v3315
      %v3425 = vpop.f32.mrb[0].mxu0
      %v3426 = vadd.f32 0.0, %v3425
      %v3427 = vpop.f32.mrb[0].mxu0
      %v3428 = vpop.f32.mrb[0].mxu0
      %v3429 = vadd.f32 0.0, %v3428
      %v3430 = vpop.f32.mrb[0].mxu0
      %3431 = vmatprep.mubr.bf16.mxu0 0
      %3432 = vmatmul.mubr.bf16.gmra.mrb[0].mxu0 %v3318
      %v3433 = vpop.f32.mrb[0].mxu0
      %v3434 = vadd.f32 0.0, %v3433
      %v3435 = vpop.f32.mrb[0].mxu0
      %v3436 = vpop.f32.mrb[0].mxu0
      %v3437 = vadd.f32 0.0, %v3436
      %v3438 = vpop.f32.mrb[0].mxu0
      %3439 = vmatprep.mubr.bf16.mxu0 0
      %3440 = vmatmul.mubr.bf16.gmra.mrb[0].mxu0 %v3321
      %v3441 = vpop.f32.mrb[0].mxu0
      %v3442 = vadd.f32 0.0, %v3441
      %v3443 = vpop.f32.mrb[0].mxu0
      %v3444 = vpop.f32.mrb[0].mxu0
      %v3445 = vadd.f32 0.0, %v3444
      %v3446 = vpop.f32.mrb[0].mxu0
      %3447 = vmatprep.mubr.bf16.mxu0 0
      %3448 = vmatmul.mubr.bf16.gmra.mrb[0].mxu0 %v3324
      %v3449 = vpop.f32.mrb[0].mxu0
      %v3450 = vadd.f32 0.0, %v3449
      %v3451 = vpop.f32.mrb[0].mxu0
      %v3452 = vpop.f32.mrb[0].mxu0
      %v3453 = vadd.f32 0.0, %v3452
      %v3454 = vpop.f32.mrb[0].mxu0
      %3455 = vmatprep.mubr.bf16.mxu0 0
      %3456 = vmatmul.mubr.bf16.gmra.mrb[0].mxu0 %v3327
      %v3457 = vpop.f32.mrb[0].mxu0
      %v3458 = vadd.f32 0.0, %v3457
      %v3459 = vpop.f32.mrb[0].mxu0
      %v3460 = vpop.f32.mrb[0].mxu0
      %v3461 = vadd.f32 0.0, %v3460
      %v3462 = vpop.f32.mrb[0].mxu0
      %3463 = vmatprep.mubr.bf16.mxu0 0
      %3464 = vmatmul.mubr.bf16.gmra.mrb[0].mxu0 %v3330
      %v3465 = vpop.f32.mrb[0].mxu0
      %v3466 = vadd.f32 0.0, %v3465
      %v3467 = vpop.f32.mrb[0].mxu0
      %v3468 = vpop.f32.mrb[0].mxu0
      %v3469 = vadd.f32 0.0, %v3468
      %v3470 = vpop.f32.mrb[0].mxu0
      %3471 = vmatprep.mubr.bf16.mxu0 0
      %3472 = vmatmul.mubr.bf16.gmra.mrb[0].mxu0 %v3333
      %v3473 = vpop.f32.mrb[0].mxu0
      %v3474 = vadd.f32 0.0, %v3473
      %v3475 = vpop.f32.mrb[0].mxu0
      %v3476 = vpop.f32.mrb[0].mxu0
      %v3477 = vadd.f32 0.0, %v3476
      %v3478 = vpop.f32.mrb[0].mxu0
      %3479 = vmatprep.mubr.bf16.mxu0 0
      %3480 = vmatmul.mubr.bf16.gmra.mrb[0].mxu0 %v3336
      %v3481 = vpop.f32.mrb[0].mxu0
      %v3482 = vadd.f32 0.0, %v3481
      %v3483 = vpop.f32.mrb[0].mxu0
      %v3484 = vpop.f32.mrb[0].mxu0
      %v3485 = vadd.f32 0.0, %v3484
      %v3486 = vpop.f32.mrb[0].mxu0
      %3487 = vmatprep.mubr.bf16.mxu0 0
      %3488 = vmatmul.mubr.bf16.gmra.mrb[0].mxu0 %v3339
      %v3489 = vpop.f32.mrb[0].mxu0
      %v3490 = vadd.f32 0.0, %v3489
      %v3491 = vpop.f32.mrb[0].mxu0
      %v3492 = vpop.f32.mrb[0].mxu0
      %v3493 = vadd.f32 0.0, %v3492
      %v3494 = vpop.f32.mrb[0].mxu0
      %3495 = vmatprep.mubr.bf16.mxu0 0
      %3496 = vmatmul.mubr.bf16.gmra.mrb[0].mxu0 %v3342
      %v3497 = vpop.f32.mrb[0].mxu0
      %v3498 = vadd.f32 0.0, %v3497
      %v3499 = vpop.f32.mrb[0].mxu0
      %v3500 = vpop.f32.mrb[0].mxu0
      %v3501 = vadd.f32 0.0, %v3500
      %v3502 = vpop.f32.mrb[0].mxu0
      %3503 = vmatprep.mubr.bf16.mxu0 0
      %3504 = vmatmul.mubr.bf16.gmra.mrb[0].mxu0 %v3345
      %v3505 = vpop.f32.mrb[0].mxu0
      %v3506 = vadd.f32 0.0, %v3505
      %v3507 = vpop.f32.mrb[0].mxu0
      %v3508 = vpop.f32.mrb[0].mxu0
      %v3509 = vadd.f32 0.0, %v3508
      %v3510 = vpop.f32.mrb[0].mxu0
      %3511 = vdwg.mxu0
      %v3512 = vld [vmem:[%s4] sm:$0x1]
      %v3514 = vlaneseq
      %v3515 = vshrl.u32 %v3514, 7
      %v3516 = vsub.s32 0, %v3515
      %v3517 = vrot.slane %v3512, %v3516
      %v3519 = vmul.f32 %v3386, %v3517
      %v3520 = vmul.f32 %v3389, %v3517
      %v3521 = vmul.f32 %v3394, %v3517
      %v3522 = vmul.f32 %v3397, %v3517
      %v3523 = vmul.f32 %v3402, %v3517
      %v3524 = vmul.f32 %v3405, %v3517
      %v3525 = vmul.f32 %v3410, %v3517
      %v3526 = vmul.f32 %v3413, %v3517
      %v3527 = vmul.f32 %v3418, %v3517
      %v3528 = vmul.f32 %v3421, %v3517
      %v3529 = vmul.f32 %v3426, %v3517
      %v3530 = vmul.f32 %v3429, %v3517
      %v3531 = vmul.f32 %v3434, %v3517
      %v3532 = vmul.f32 %v3437, %v3517
      %v3533 = vmul.f32 %v3442, %v3517
      %v3534 = vmul.f32 %v3445, %v3517
      %v3535 = vmul.f32 %v3450, %v3517
      %v3536 = vmul.f32 %v3453, %v3517
      %v3537 = vmul.f32 %v3458, %v3517
      %v3538 = vmul.f32 %v3461, %v3517
      %v3539 = vmul.f32 %v3466, %v3517
      %v3540 = vmul.f32 %v3469, %v3517
      %v3541 = vmul.f32 %v3474, %v3517
      %v3542 = vmul.f32 %v3477, %v3517
      %v3543 = vmul.f32 %v3482, %v3517
      %v3544 = vmul.f32 %v3485, %v3517
      %v3545 = vmul.f32 %v3490, %v3517
      %v3546 = vmul.f32 %v3493, %v3517
      %v3547 = vmul.f32 %v3498, %v3517
      %v3548 = vmul.f32 %v3501, %v3517
      %v3549 = vmul.f32 %v3506, %v3517
      %v3550 = vmul.f32 %v3509, %v3517
      %v3551 = vld [vmem:[%s5] sm:$0x1]
      %v3553 = vlaneseq
      %v3554 = vshrl.u32 %v3553, 7
      %v3555 = vsub.s32 0, %v3554
      %v3556 = vrot.slane %v3551, %v3555
      %v3558 = vadd.f32 %v3519, %v3556
      %v3559 = vadd.f32 %v3520, %v3556
      %v3560 = vadd.f32 %v3521, %v3556
      %v3561 = vadd.f32 %v3522, %v3556
      %v3562 = vadd.f32 %v3523, %v3556
      %v3563 = vadd.f32 %v3524, %v3556
      %v3564 = vadd.f32 %v3525, %v3556
      %v3565 = vadd.f32 %v3526, %v3556
      %v3566 = vadd.f32 %v3527, %v3556
      %v3567 = vadd.f32 %v3528, %v3556
      %v3568 = vadd.f32 %v3529, %v3556
      %v3569 = vadd.f32 %v3530, %v3556
      %v3570 = vadd.f32 %v3531, %v3556
      %v3571 = vadd.f32 %v3532, %v3556
      %v3572 = vadd.f32 %v3533, %v3556
      %v3573 = vadd.f32 %v3534, %v3556
      %v3574 = vadd.f32 %v3535, %v3556
      %v3575 = vadd.f32 %v3536, %v3556
      %v3576 = vadd.f32 %v3537, %v3556
      %v3577 = vadd.f32 %v3538, %v3556
      %v3578 = vadd.f32 %v3539, %v3556
      %v3579 = vadd.f32 %v3540, %v3556
      %v3580 = vadd.f32 %v3541, %v3556
      %v3581 = vadd.f32 %v3542, %v3556
      %v3582 = vadd.f32 %v3543, %v3556
      %v3583 = vadd.f32 %v3544, %v3556
      %v3584 = vadd.f32 %v3545, %v3556
      %v3585 = vadd.f32 %v3546, %v3556
      %v3586 = vadd.f32 %v3547, %v3556
      %v3587 = vadd.f32 %v3548, %v3556
      %v3588 = vadd.f32 %v3549, %v3556
      %v3589 = vadd.f32 %v3550, %v3556
      %v3590 = vmax.f32 %v3558, 0.0
      %v3591 = vmax.f32 %v3559, 0.0
      %v3592 = vmax.f32 %v3560, 0.0
      %v3593 = vmax.f32 %v3561, 0.0
      %v3594 = vmax.f32 %v3562, 0.0
      %v3595 = vmax.f32 %v3563, 0.0
      %v3596 = vmax.f32 %v3564, 0.0
      %v3597 = vmax.f32 %v3565, 0.0
      %v3598 = vmax.f32 %v3566, 0.0
      %v3599 = vmax.f32 %v3567, 0.0
      %v3600 = vmax.f32 %v3568, 0.0
      %v3601 = vmax.f32 %v3569, 0.0
      %v3602 = vmax.f32 %v3570, 0.0
      %v3603 = vmax.f32 %v3571, 0.0
      %v3604 = vmax.f32 %v3572, 0.0
      %v3605 = vmax.f32 %v3573, 0.0
      %v3606 = vmax.f32 %v3574, 0.0
      %v3607 = vmax.f32 %v3575, 0.0
      %v3608 = vmax.f32 %v3576, 0.0
      %v3609 = vmax.f32 %v3577, 0.0
      %v3610 = vmax.f32 %v3578, 0.0
      %v3611 = vmax.f32 %v3579, 0.0
      %v3612 = vmax.f32 %v3580, 0.0
      %v3613 = vmax.f32 %v3581, 0.0
      %v3614 = vmax.f32 %v3582, 0.0
      %v3615 = vmax.f32 %v3583, 0.0
      %v3616 = vmax.f32 %v3584, 0.0
      %v3617 = vmax.f32 %v3585, 0.0
      %v3618 = vmax.f32 %v3586, 0.0
      %v3619 = vmax.f32 %v3587, 0.0
      %v3620 = vmax.f32 %v3588, 0.0
      %v3621 = vmax.f32 %v3589, 0.0
      %v3622 = vrot.slane %v3590, 7
      %v3623 = vrot.slane %v3591, 7
      %v3624 = vrot.slane %v3592, 7
      %v3625 = vrot.slane %v3593, 7
      %v3626 = vrot.slane %v3594, 7
      %v3627 = vrot.slane %v3595, 7
      %v3628 = vrot.slane %v3596, 7
      %v3629 = vrot.slane %v3597, 7
      %v3630 = vrot.slane %v3598, 7
      %v3631 = vrot.slane %v3599, 7
      %v3632 = vrot.slane %v3600, 7
      %v3633 = vrot.slane %v3601, 7
      %v3634 = vrot.slane %v3602, 7
      %v3635 = vrot.slane %v3603, 7
      %v3636 = vrot.slane %v3604, 7
      %v3637 = vrot.slane %v3605, 7
      %v3638 = vrot.slane %v3606, 7
      %v3639 = vrot.slane %v3607, 7
      %v3640 = vrot.slane %v3608, 7
      %v3641 = vrot.slane %v3609, 7
      %v3642 = vrot.slane %v3610, 7
      %v3643 = vrot.slane %v3611, 7
      %v3644 = vrot.slane %v3612, 7
      %v3645 = vrot.slane %v3613, 7
      %v3646 = vrot.slane %v3614, 7
      %v3647 = vrot.slane %v3615, 7
      %v3648 = vrot.slane %v3616, 7
      %v3649 = vrot.slane %v3617, 7
      %v3650 = vrot.slane %v3618, 7
      %v3651 = vrot.slane %v3619, 7
      %v3652 = vrot.slane %v3620, 7
      %v3653 = vrot.slane %v3621, 7
      %v3654 = vsel %vm627, %v3652, %v3653
      %v3655 = vsel %vm627, %v3651, %v3652
      %v3656 = vsel %vm627, %v3650, %v3651
      %v3657 = vsel %vm627, %v3649, %v3650
      %v3658 = vsel %vm627, %v3648, %v3649
      %v3659 = vsel %vm627, %v3647, %v3648
      %v3660 = vsel %vm627, %v3646, %v3647
      %v3661 = vsel %vm627, %v3645, %v3646
      %v3662 = vsel %vm627, %v3644, %v3645
      %v3663 = vsel %vm627, %v3643, %v3644
      %v3664 = vsel %vm627, %v3642, %v3643
      %v3665 = vsel %vm627, %v3641, %v3642
      %v3666 = vsel %vm627, %v3640, %v3641
      %v3667 = vsel %vm627, %v3639, %v3640
      %v3668 = vsel %vm627, %v3638, %v3639
      %v3669 = vsel %vm627, %v3637, %v3638
      %v3670 = vsel %vm627, %v3636, %v3637
      %v3671 = vsel %vm627, %v3635, %v3636
      %v3672 = vsel %vm627, %v3634, %v3635
      %v3673 = vsel %vm627, %v3633, %v3634
      %v3674 = vsel %vm627, %v3632, %v3633
      %v3675 = vsel %vm627, %v3631, %v3632
      %v3676 = vsel %vm627, %v3630, %v3631
      %v3677 = vsel %vm627, %v3629, %v3630
      %v3678 = vsel %vm627, %v3628, %v3629
      %v3679 = vsel %vm627, %v3627, %v3628
      %v3680 = vsel %vm627, %v3626, %v3627
      %v3681 = vsel %vm627, %v3625, %v3626
      %v3682 = vsel %vm627, %v3624, %v3625
      %v3683 = vsel %vm627, %v3623, %v3624
      %v3684 = vsel %vm627, %v3622, %v3623
      %v3685 = vsel %vm627, %v3653, %v3622
      %v3686 = vsel %vm820, %v3655, 0.0
      %v3687 = vsel %vm821, %v3654, 0.0
      %v3688 = vsel %vm822, %v3685, 0.0
      %v3689 = vsel %vm823, %v3684, 0.0
      %v3690 = vsel %vm824, %v3683, 0.0
      %v3691 = vsel %vm825, %v3682, 0.0
      %v3692 = vsel %vm826, %v3681, 0.0
      %v3693 = vsel %vm827, %v3680, 0.0
      %v3694 = vsel %vm828, %v3679, 0.0
      %v3695 = vsel %vm829, %v3678, 0.0
      %v3696 = vsel %vm830, %v3677, 0.0
      %v3697 = vsel %vm831, %v3676, 0.0
      %v3698 = vsel %vm832, %v3675, 0.0
      %v3699 = vsel %vm833, %v3674, 0.0
      %v3700 = vsel %vm834, %v3673, 0.0
      %v3701 = vsel %vm835, %v3672, 0.0
      %v3702 = vsel %vm836, %v3671, 0.0
      %v3703 = vsel %vm837, %v3670, 0.0
      %v3704 = vsel %vm838, %v3669, 0.0
      %v3705 = vsel %vm839, %v3668, 0.0
      %v3706 = vsel %vm840, %v3667, 0.0
      %v3707 = vsel %vm841, %v3666, 0.0
      %v3708 = vsel %vm842, %v3665, 0.0
      %v3709 = vsel %vm843, %v3664, 0.0
      %v3710 = vsel %vm844, %v3663, 0.0
      %v3711 = vsel %vm845, %v3662, 0.0
      %v3712 = vsel %vm846, %v3661, 0.0
      %v3713 = vsel %vm847, %v3660, 0.0
      %v3714 = vsel %vm848, %v3659, 0.0
      %v3715 = vsel %vm849, %v3658, 0.0
      %v3716 = vsel %vm850, %v3657, 0.0
      %v3717 = vsel %vm851, %v3656, 0.0
      %v3718 = vpack.c.bf16 %v3687, %v3686
      %v3719 = vpack.c.bf16 %v3689, %v3688
      %v3720 = vpack.c.bf16 %v3691, %v3690
      %v3721 = vpack.c.bf16 %v3693, %v3692
      %v3722 = vpack.c.bf16 %v3695, %v3694
      %v3723 = vpack.c.bf16 %v3697, %v3696
      %v3724 = vpack.c.bf16 %v3699, %v3698
      %v3725 = vpack.c.bf16 %v3701, %v3700
      %v3726 = vpack.c.bf16 %v3703, %v3702
      %v3727 = vpack.c.bf16 %v3705, %v3704
      %v3728 = vpack.c.bf16 %v3707, %v3706
      %v3729 = vpack.c.bf16 %v3709, %v3708
      %v3730 = vpack.c.bf16 %v3711, %v3710
      %v3731 = vpack.c.bf16 %v3713, %v3712
      %v3732 = vpack.c.bf16 %v3715, %v3714
      %v3733 = vpack.c.bf16 %v3717, %v3716
      %3734 = vst.msk [vmem:[#allocation2] sm:$0xff] %vm900, %v3718
      %3735 = vst.msk [vmem:[#allocation2 + $0x8] sm:$0xff] %vm900, %v3719
      %3736 = vst.msk [vmem:[#allocation2 + $0x10] sm:$0xff] %vm900, %v3720
      %3737 = vst.msk [vmem:[#allocation2 + $0x18] sm:$0xff] %vm900, %v3721
      %3738 = vst.msk [vmem:[#allocation2 + $0x20] sm:$0xff] %vm900, %v3722
      %3739 = vst.msk [vmem:[#allocation2 + $0x28] sm:$0xff] %vm900, %v3723
      %3740 = vst.msk [vmem:[#allocation2 + $0x30] sm:$0xff] %vm900, %v3724
      %3741 = vst.msk [vmem:[#allocation2 + $0x38] sm:$0xff] %vm900, %v3725
      %3742 = vst.msk [vmem:[#allocation2 + $0x40] sm:$0xff] %vm900, %v3726
      %3743 = vst.msk [vmem:[#allocation2 + $0x48] sm:$0xff] %vm900, %v3727
      %3744 = vst.msk [vmem:[#allocation2 + $0x50] sm:$0xff] %vm900, %v3728
      %3745 = vst.msk [vmem:[#allocation2 + $0x58] sm:$0xff] %vm900, %v3729
      %3746 = vst.msk [vmem:[#allocation2 + $0x60] sm:$0xff] %vm900, %v3730
      %3747 = vst.msk [vmem:[#allocation2 + $0x68] sm:$0xff] %vm900, %v3731
      %3748 = vst.msk [vmem:[#allocation2 + $0x70] sm:$0xff] %vm900, %v3732
      %3749 = vst.msk [vmem:[#allocation2 + $0x78] sm:$0xff] %vm900, %v3733
      %v3750 = vsel %vm1045, %v3620, 0.0
      %v3751 = vsel %vm1046, %v3621, 0.0
      %v3752 = vsel %vm1047, %v3590, 0.0
      %v3753 = vsel %vm1048, %v3591, 0.0
      %v3754 = vsel %vm1049, %v3592, 0.0
      %v3755 = vsel %vm1050, %v3593, 0.0
      %v3756 = vsel %vm1051, %v3594, 0.0
      %v3757 = vsel %vm1052, %v3595, 0.0
      %v3758 = vsel %vm1053, %v3596, 0.0
      %v3759 = vsel %vm1054, %v3597, 0.0
      %v3760 = vsel %vm1055, %v3598, 0.0
      %v3761 = vsel %vm1056, %v3599, 0.0
      %v3762 = vsel %vm1057, %v3600, 0.0
      %v3763 = vsel %vm1058, %v3601, 0.0
      %v3764 = vsel %vm1059, %v3602, 0.0
      %v3765 = vsel %vm1060, %v3603, 0.0
      %v3766 = vsel %vm1061, %v3604, 0.0
      %v3767 = vsel %vm1062, %v3605, 0.0
      %v3768 = vsel %vm1063, %v3606, 0.0
      %v3769 = vsel %vm1064, %v3607, 0.0
      %v3770 = vsel %vm1065, %v3608, 0.0
      %v3771 = vsel %vm1066, %v3609, 0.0
      %v3772 = vsel %vm1067, %v3610, 0.0
      %v3773 = vsel %vm1068, %v3611, 0.0
      %v3774 = vsel %vm1069, %v3612, 0.0
      %v3775 = vsel %vm1070, %v3613, 0.0
      %v3776 = vsel %vm1071, %v3614, 0.0
      %v3777 = vsel %vm1072, %v3615, 0.0
      %v3778 = vsel %vm1073, %v3616, 0.0
      %v3779 = vsel %vm1074, %v3617, 0.0
      %v3780 = vsel %vm1075, %v3618, 0.0
      %v3781 = vsel %vm1076, %v3619, 0.0
      %v3782 = vpack.c.bf16 %v3751, %v3750
      %v3783 = vpack.c.bf16 %v3753, %v3752
      %v3784 = vpack.c.bf16 %v3755, %v3754
      %v3785 = vpack.c.bf16 %v3757, %v3756
      %v3786 = vpack.c.bf16 %v3759, %v3758
      %v3787 = vpack.c.bf16 %v3761, %v3760
      %v3788 = vpack.c.bf16 %v3763, %v3762
      %v3789 = vpack.c.bf16 %v3765, %v3764
      %v3790 = vpack.c.bf16 %v3767, %v3766
      %v3791 = vpack.c.bf16 %v3769, %v3768
      %v3792 = vpack.c.bf16 %v3771, %v3770
      %v3793 = vpack.c.bf16 %v3773, %v3772
      %v3794 = vpack.c.bf16 %v3775, %v3774
      %v3795 = vpack.c.bf16 %v3777, %v3776
      %v3796 = vpack.c.bf16 %v3779, %v3778
      %v3797 = vpack.c.bf16 %v3781, %v3780
      %3814 = vrot.lane.b32.xlu0 %v3782, 8
      %v3815 = vpop.permute.xlu0 %3814
      %3816 = vrot.lane.b32.xlu0 %v3783, 8
      %v3817 = vpop.permute.xlu0 %3816
      %3818 = vrot.lane.b32.xlu0 %v3784, 8
      %v3819 = vpop.permute.xlu0 %3818
      %3820 = vrot.lane.b32.xlu0 %v3785, 8
      %v3821 = vpop.permute.xlu0 %3820
      %3822 = vrot.lane.b32.xlu0 %v3786, 8
      %v3823 = vpop.permute.xlu0 %3822
      %3824 = vrot.lane.b32.xlu0 %v3787, 8
      %v3825 = vpop.permute.xlu0 %3824
      %3826 = vrot.lane.b32.xlu0 %v3788, 8
      %v3827 = vpop.permute.xlu0 %3826
      %3828 = vrot.lane.b32.xlu0 %v3789, 8
      %v3829 = vpop.permute.xlu0 %3828
      %3830 = vrot.lane.b32.xlu0 %v3790, 8
      %v3831 = vpop.permute.xlu0 %3830
      %3832 = vrot.lane.b32.xlu0 %v3791, 8
      %v3833 = vpop.permute.xlu0 %3832
      %3834 = vrot.lane.b32.xlu0 %v3792, 8
      %v3835 = vpop.permute.xlu0 %3834
      %3836 = vrot.lane.b32.xlu0 %v3793, 8
      %v3837 = vpop.permute.xlu0 %3836
      %3838 = vrot.lane.b32.xlu0 %v3794, 8
      %v3839 = vpop.permute.xlu0 %3838
      %3840 = vrot.lane.b32.xlu0 %v3795, 8
      %v3841 = vpop.permute.xlu0 %3840
      %3842 = vrot.lane.b32.xlu0 %v3796, 8
      %v3843 = vpop.permute.xlu0 %3842
      %3844 = vrot.lane.b32.xlu0 %v3797, 8
      %v3845 = vpop.permute.xlu0 %3844
      %3862 = vst.msk [vmem:[#allocation2] sm:$0xff] %vm1189, %v3815
      %3863 = vst.msk [vmem:[#allocation2 + $0x8] sm:$0xff] %vm1189, %v3817
      %3864 = vst.msk [vmem:[#allocation2 + $0x10] sm:$0xff] %vm1189, %v3819
      %3865 = vst.msk [vmem:[#allocation2 + $0x18] sm:$0xff] %vm1189, %v3821
      %3866 = vst.msk [vmem:[#allocation2 + $0x20] sm:$0xff] %vm1189, %v3823
      %3867 = vst.msk [vmem:[#allocation2 + $0x28] sm:$0xff] %vm1189, %v3825
      %3868 = vst.msk [vmem:[#allocation2 + $0x30] sm:$0xff] %vm1189, %v3827
      %3869 = vst.msk [vmem:[#allocation2 + $0x38] sm:$0xff] %vm1189, %v3829
      %3870 = vst.msk [vmem:[#allocation2 + $0x40] sm:$0xff] %vm1189, %v3831
      %3871 = vst.msk [vmem:[#allocation2 + $0x48] sm:$0xff] %vm1189, %v3833
      %3872 = vst.msk [vmem:[#allocation2 + $0x50] sm:$0xff] %vm1189, %v3835
      %3873 = vst.msk [vmem:[#allocation2 + $0x58] sm:$0xff] %vm1189, %v3837
      %3874 = vst.msk [vmem:[#allocation2 + $0x60] sm:$0xff] %vm1189, %v3839
      %3875 = vst.msk [vmem:[#allocation2 + $0x68] sm:$0xff] %vm1189, %v3841
      %3876 = vst.msk [vmem:[#allocation2 + $0x70] sm:$0xff] %vm1189, %v3843
      %3877 = vst.msk [vmem:[#allocation2 + $0x78] sm:$0xff] %vm1189, %v3845
      %v3878 = vrot.slane %v3590, 1
      %v3879 = vrot.slane %v3591, 1
      %v3880 = vrot.slane %v3592, 1
      %v3881 = vrot.slane %v3593, 1
      %v3882 = vrot.slane %v3594, 1
      %v3883 = vrot.slane %v3595, 1
      %v3884 = vrot.slane %v3596, 1
      %v3885 = vrot.slane %v3597, 1
      %v3886 = vrot.slane %v3598, 1
      %v3887 = vrot.slane %v3599, 1
      %v3888 = vrot.slane %v3600, 1
      %v3889 = vrot.slane %v3601, 1
      %v3890 = vrot.slane %v3602, 1
      %v3891 = vrot.slane %v3603, 1
      %v3892 = vrot.slane %v3604, 1
      %v3893 = vrot.slane %v3605, 1
      %v3894 = vrot.slane %v3606, 1
      %v3895 = vrot.slane %v3607, 1
      %v3896 = vrot.slane %v3608, 1
      %v3897 = vrot.slane %v3609, 1
      %v3898 = vrot.slane %v3610, 1
      %v3899 = vrot.slane %v3611, 1
      %v3900 = vrot.slane %v3612, 1
      %v3901 = vrot.slane %v3613, 1
      %v3902 = vrot.slane %v3614, 1
      %v3903 = vrot.slane %v3615, 1
      %v3904 = vrot.slane %v3616, 1
      %v3905 = vrot.slane %v3617, 1
      %v3906 = vrot.slane %v3618, 1
      %v3907 = vrot.slane %v3619, 1
      %v3908 = vrot.slane %v3620, 1
      %v3909 = vrot.slane %v3621, 1
      %v3910 = vsel %vm1238, %v3908, %v3909
      %v3911 = vsel %vm1238, %v3907, %v3908
      %v3912 = vsel %vm1238, %v3906, %v3907
      %v3913 = vsel %vm1238, %v3905, %v3906
      %v3914 = vsel %vm1238, %v3904, %v3905
      %v3915 = vsel %vm1238, %v3903, %v3904
      %v3916 = vsel %vm1238, %v3902, %v3903
      %v3917 = vsel %vm1238, %v3901, %v3902
      %v3918 = vsel %vm1238, %v3900, %v3901
      %v3919 = vsel %vm1238, %v3899, %v3900
      %v3920 = vsel %vm1238, %v3898, %v3899
      %v3921 = vsel %vm1238, %v3897, %v3898
      %v3922 = vsel %vm1238, %v3896, %v3897
      %v3923 = vsel %vm1238, %v3895, %v3896
      %v3924 = vsel %vm1238, %v3894, %v3895
      %v3925 = vsel %vm1238, %v3893, %v3894
      %v3926 = vsel %vm1238, %v3892, %v3893
      %v3927 = vsel %vm1238, %v3891, %v3892
      %v3928 = vsel %vm1238, %v3890, %v3891
      %v3929 = vsel %vm1238, %v3889, %v3890
      %v3930 = vsel %vm1238, %v3888, %v3889
      %v3931 = vsel %vm1238, %v3887, %v3888
      %v3932 = vsel %vm1238, %v3886, %v3887
      %v3933 = vsel %vm1238, %v3885, %v3886
      %v3934 = vsel %vm1238, %v3884, %v3885
      %v3935 = vsel %vm1238, %v3883, %v3884
      %v3936 = vsel %vm1238, %v3882, %v3883
      %v3937 = vsel %vm1238, %v3881, %v3882
      %v3938 = vsel %vm1238, %v3880, %v3881
      %v3939 = vsel %vm1238, %v3879, %v3880
      %v3940 = vsel %vm1238, %v3878, %v3879
      %v3941 = vsel %vm1238, %v3909, %v3878
      %v3942 = vsel %vm1431, %v3910, 0.0
      %v3943 = vsel %vm1432, %v3941, 0.0
      %v3944 = vsel %vm1433, %v3940, 0.0
      %v3945 = vsel %vm1434, %v3939, 0.0
      %v3946 = vsel %vm1435, %v3938, 0.0
      %v3947 = vsel %vm1436, %v3937, 0.0
      %v3948 = vsel %vm1437, %v3936, 0.0
      %v3949 = vsel %vm1438, %v3935, 0.0
      %v3950 = vsel %vm1439, %v3934, 0.0
      %v3951 = vsel %vm1440, %v3933, 0.0
      %v3952 = vsel %vm1441, %v3932, 0.0
      %v3953 = vsel %vm1442, %v3931, 0.0
      %v3954 = vsel %vm1443, %v3930, 0.0
      %v3955 = vsel %vm1444, %v3929, 0.0
      %v3956 = vsel %vm1445, %v3928, 0.0
      %v3957 = vsel %vm1446, %v3927, 0.0
      %v3958 = vsel %vm1447, %v3926, 0.0
      %v3959 = vsel %vm1448, %v3925, 0.0
      %v3960 = vsel %vm1449, %v3924, 0.0
      %v3961 = vsel %vm1450, %v3923, 0.0
      %v3962 = vsel %vm1451, %v3922, 0.0
      %v3963 = vsel %vm1452, %v3921, 0.0
      %v3964 = vsel %vm1453, %v3920, 0.0
      %v3965 = vsel %vm1454, %v3919, 0.0
      %v3966 = vsel %vm1455, %v3918, 0.0
      %v3967 = vsel %vm1456, %v3917, 0.0
      %v3968 = vsel %vm1457, %v3916, 0.0
      %v3969 = vsel %vm1458, %v3915, 0.0
      %v3970 = vsel %vm1459, %v3914, 0.0
      %v3971 = vsel %vm1460, %v3913, 0.0
      %v3972 = vsel %vm1461, %v3912, 0.0
      %v3973 = vsel %vm1462, %v3911, 0.0
      %v3974 = vpack.c.bf16 %v3943, %v3942
      %v3975 = vpack.c.bf16 %v3945, %v3944
      %v3976 = vpack.c.bf16 %v3947, %v3946
      %v3977 = vpack.c.bf16 %v3949, %v3948
      %v3978 = vpack.c.bf16 %v3951, %v3950
      %v3979 = vpack.c.bf16 %v3953, %v3952
      %v3980 = vpack.c.bf16 %v3955, %v3954
      %v3981 = vpack.c.bf16 %v3957, %v3956
      %v3982 = vpack.c.bf16 %v3959, %v3958
      %v3983 = vpack.c.bf16 %v3961, %v3960
      %v3984 = vpack.c.bf16 %v3963, %v3962
      %v3985 = vpack.c.bf16 %v3965, %v3964
      %v3986 = vpack.c.bf16 %v3967, %v3966
      %v3987 = vpack.c.bf16 %v3969, %v3968
      %v3988 = vpack.c.bf16 %v3971, %v3970
      %v3989 = vpack.c.bf16 %v3973, %v3972
      %4006 = vrot.lane.b32.xlu0 %v3974, 16
      %v4007 = vpop.permute.xlu0 %4006
      %4008 = vrot.lane.b32.xlu0 %v3975, 16
      %v4009 = vpop.permute.xlu0 %4008
      %4010 = vrot.lane.b32.xlu0 %v3976, 16
      %v4011 = vpop.permute.xlu0 %4010
      %4012 = vrot.lane.b32.xlu0 %v3977, 16
      %v4013 = vpop.permute.xlu0 %4012
      %4014 = vrot.lane.b32.xlu0 %v3978, 16
      %v4015 = vpop.permute.xlu0 %4014
      %4016 = vrot.lane.b32.xlu0 %v3979, 16
      %v4017 = vpop.permute.xlu0 %4016
      %4018 = vrot.lane.b32.xlu0 %v3980, 16
      %v4019 = vpop.permute.xlu0 %4018
      %4020 = vrot.lane.b32.xlu0 %v3981, 16
      %v4021 = vpop.permute.xlu0 %4020
      %4022 = vrot.lane.b32.xlu0 %v3982, 16
      %v4023 = vpop.permute.xlu0 %4022
      %4024 = vrot.lane.b32.xlu0 %v3983, 16
      %v4025 = vpop.permute.xlu0 %4024
      %4026 = vrot.lane.b32.xlu0 %v3984, 16
      %v4027 = vpop.permute.xlu0 %4026
      %4028 = vrot.lane.b32.xlu0 %v3985, 16
      %v4029 = vpop.permute.xlu0 %4028
      %4030 = vrot.lane.b32.xlu0 %v3986, 16
      %v4031 = vpop.permute.xlu0 %4030
      %4032 = vrot.lane.b32.xlu0 %v3987, 16
      %v4033 = vpop.permute.xlu0 %4032
      %4034 = vrot.lane.b32.xlu0 %v3988, 16
      %v4035 = vpop.permute.xlu0 %4034
      %4036 = vrot.lane.b32.xlu0 %v3989, 16
      %v4037 = vpop.permute.xlu0 %4036
      %4054 = vst.msk [vmem:[#allocation2] sm:$0xff] %vm1575, %v4007
      %4055 = vst.msk [vmem:[#allocation2 + $0x8] sm:$0xff] %vm1575, %v4009
      %4056 = vst.msk [vmem:[#allocation2 + $0x10] sm:$0xff] %vm1575, %v4011
      %4057 = vst.msk [vmem:[#allocation2 + $0x18] sm:$0xff] %vm1575, %v4013
      %4058 = vst.msk [vmem:[#allocation2 + $0x20] sm:$0xff] %vm1575, %v4015
      %4059 = vst.msk [vmem:[#allocation2 + $0x28] sm:$0xff] %vm1575, %v4017
      %4060 = vst.msk [vmem:[#allocation2 + $0x30] sm:$0xff] %vm1575, %v4019
      %4061 = vst.msk [vmem:[#allocation2 + $0x38] sm:$0xff] %vm1575, %v4021
      %4062 = vst.msk [vmem:[#allocation2 + $0x40] sm:$0xff] %vm1575, %v4023
      %4063 = vst.msk [vmem:[#allocation2 + $0x48] sm:$0xff] %vm1575, %v4025
      %4064 = vst.msk [vmem:[#allocation2 + $0x50] sm:$0xff] %vm1575, %v4027
      %4065 = vst.msk [vmem:[#allocation2 + $0x58] sm:$0xff] %vm1575, %v4029
      %4066 = vst.msk [vmem:[#allocation2 + $0x60] sm:$0xff] %vm1575, %v4031
      %4067 = vst.msk [vmem:[#allocation2 + $0x68] sm:$0xff] %vm1575, %v4033
      %4068 = vst.msk [vmem:[#allocation2 + $0x70] sm:$0xff] %vm1575, %v4035
      %4069 = vst.msk [vmem:[#allocation2 + $0x78] sm:$0xff] %vm1575, %v4037
      %v4070 = vsel %vm1720, %v3685, 0.0
      %v4071 = vsel %vm1721, %v3684, 0.0
      %v4072 = vsel %vm1722, %v3683, 0.0
      %v4073 = vsel %vm1723, %v3682, 0.0
      %v4074 = vsel %vm1724, %v3681, 0.0
      %v4075 = vsel %vm1725, %v3680, 0.0
      %v4076 = vsel %vm1726, %v3679, 0.0
      %v4077 = vsel %vm1727, %v3678, 0.0
      %v4078 = vsel %vm1728, %v3677, 0.0
      %v4079 = vsel %vm1729, %v3676, 0.0
      %v4080 = vsel %vm1730, %v3675, 0.0
      %v4081 = vsel %vm1731, %v3674, 0.0
      %v4082 = vsel %vm1732, %v3673, 0.0
      %v4083 = vsel %vm1733, %v3672, 0.0
      %v4084 = vsel %vm1734, %v3671, 0.0
      %v4085 = vsel %vm1735, %v3670, 0.0
      %v4086 = vsel %vm1736, %v3669, 0.0
      %v4087 = vsel %vm1737, %v3668, 0.0
      %v4088 = vsel %vm1738, %v3667, 0.0
      %v4089 = vsel %vm1739, %v3666, 0.0
      %v4090 = vsel %vm1740, %v3665, 0.0
      %v4091 = vsel %vm1741, %v3664, 0.0
      %v4092 = vsel %vm1742, %v3663, 0.0
      %v4093 = vsel %vm1743, %v3662, 0.0
      %v4094 = vsel %vm1744, %v3661, 0.0
      %v4095 = vsel %vm1745, %v3660, 0.0
      %v4096 = vsel %vm1746, %v3659, 0.0
      %v4097 = vsel %vm1747, %v3658, 0.0
      %v4098 = vsel %vm1748, %v3657, 0.0
      %v4099 = vsel %vm1749, %v3656, 0.0
      %v4100 = vsel %vm1750, %v3655, 0.0
      %v4101 = vsel %vm1751, %v3654, 0.0
      %v4102 = vpack.c.bf16 %v4071, %v4070
      %v4103 = vpack.c.bf16 %v4073, %v4072
      %v4104 = vpack.c.bf16 %v4075, %v4074
      %v4105 = vpack.c.bf16 %v4077, %v4076
      %v4106 = vpack.c.bf16 %v4079, %v4078
      %v4107 = vpack.c.bf16 %v4081, %v4080
      %v4108 = vpack.c.bf16 %v4083, %v4082
      %v4109 = vpack.c.bf16 %v4085, %v4084
      %v4110 = vpack.c.bf16 %v4087, %v4086
      %v4111 = vpack.c.bf16 %v4089, %v4088
      %v4112 = vpack.c.bf16 %v4091, %v4090
      %v4113 = vpack.c.bf16 %v4093, %v4092
      %v4114 = vpack.c.bf16 %v4095, %v4094
      %v4115 = vpack.c.bf16 %v4097, %v4096
      %v4116 = vpack.c.bf16 %v4099, %v4098
      %v4117 = vpack.c.bf16 %v4101, %v4100
      %4134 = vrot.lane.b32.xlu0 %v4102, 24
      %v4135 = vpop.permute.xlu0 %4134
      %4136 = vrot.lane.b32.xlu0 %v4103, 24
      %v4137 = vpop.permute.xlu0 %4136
      %4138 = vrot.lane.b32.xlu0 %v4104, 24
      %v4139 = vpop.permute.xlu0 %4138
      %4140 = vrot.lane.b32.xlu0 %v4105, 24
      %v4141 = vpop.permute.xlu0 %4140
      %4142 = vrot.lane.b32.xlu0 %v4106, 24
      %v4143 = vpop.permute.xlu0 %4142
      %4144 = vrot.lane.b32.xlu0 %v4107, 24
      %v4145 = vpop.permute.xlu0 %4144
      %4146 = vrot.lane.b32.xlu0 %v4108, 24
      %v4147 = vpop.permute.xlu0 %4146
      %4148 = vrot.lane.b32.xlu0 %v4109, 24
      %v4149 = vpop.permute.xlu0 %4148
      %4150 = vrot.lane.b32.xlu0 %v4110, 24
      %v4151 = vpop.permute.xlu0 %4150
      %4152 = vrot.lane.b32.xlu0 %v4111, 24
      %v4153 = vpop.permute.xlu0 %4152
      %4154 = vrot.lane.b32.xlu0 %v4112, 24
      %v4155 = vpop.permute.xlu0 %4154
      %4156 = vrot.lane.b32.xlu0 %v4113, 24
      %v4157 = vpop.permute.xlu0 %4156
      %4158 = vrot.lane.b32.xlu0 %v4114, 24
      %v4159 = vpop.permute.xlu0 %4158
      %4160 = vrot.lane.b32.xlu0 %v4115, 24
      %v4161 = vpop.permute.xlu0 %4160
      %4162 = vrot.lane.b32.xlu0 %v4116, 24
      %v4163 = vpop.permute.xlu0 %4162
      %4164 = vrot.lane.b32.xlu0 %v4117, 24
      %v4165 = vpop.permute.xlu0 %4164
      %4182 = vst.msk [vmem:[#allocation2] sm:$0xff] %vm1864, %v4135
      %4183 = vst.msk [vmem:[#allocation2 + $0x8] sm:$0xff] %vm1864, %v4137
      %4184 = vst.msk [vmem:[#allocation2 + $0x10] sm:$0xff] %vm1864, %v4139
      %4185 = vst.msk [vmem:[#allocation2 + $0x18] sm:$0xff] %vm1864, %v4141
      %4186 = vst.msk [vmem:[#allocation2 + $0x20] sm:$0xff] %vm1864, %v4143
      %4187 = vst.msk [vmem:[#allocation2 + $0x28] sm:$0xff] %vm1864, %v4145
      %4188 = vst.msk [vmem:[#allocation2 + $0x30] sm:$0xff] %vm1864, %v4147
      %4189 = vst.msk [vmem:[#allocation2 + $0x38] sm:$0xff] %vm1864, %v4149
      %4190 = vst.msk [vmem:[#allocation2 + $0x40] sm:$0xff] %vm1864, %v4151
      %4191 = vst.msk [vmem:[#allocation2 + $0x48] sm:$0xff] %vm1864, %v4153
      %4192 = vst.msk [vmem:[#allocation2 + $0x50] sm:$0xff] %vm1864, %v4155
      %4193 = vst.msk [vmem:[#allocation2 + $0x58] sm:$0xff] %vm1864, %v4157
      %4194 = vst.msk [vmem:[#allocation2 + $0x60] sm:$0xff] %vm1864, %v4159
      %4195 = vst.msk [vmem:[#allocation2 + $0x68] sm:$0xff] %vm1864, %v4161
      %4196 = vst.msk [vmem:[#allocation2 + $0x70] sm:$0xff] %vm1864, %v4163
      %4197 = vst.msk [vmem:[#allocation2 + $0x78] sm:$0xff] %vm1864, %v4165
      %v4198 = vpack.c.bf16 %v3591, %v3590
      %v4199 = vpack.c.bf16 %v3593, %v3592
      %v4200 = vpack.c.bf16 %v3595, %v3594
      %v4201 = vpack.c.bf16 %v3597, %v3596
      %v4202 = vpack.c.bf16 %v3599, %v3598
      %v4203 = vpack.c.bf16 %v3601, %v3600
      %v4204 = vpack.c.bf16 %v3603, %v3602
      %v4205 = vpack.c.bf16 %v3605, %v3604
      %v4206 = vpack.c.bf16 %v3607, %v3606
      %v4207 = vpack.c.bf16 %v3609, %v3608
      %v4208 = vpack.c.bf16 %v3611, %v3610
      %v4209 = vpack.c.bf16 %v3613, %v3612
      %v4210 = vpack.c.bf16 %v3615, %v3614
      %v4211 = vpack.c.bf16 %v3617, %v3616
      %v4212 = vpack.c.bf16 %v3619, %v3618
      %v4213 = vpack.c.bf16 %v3621, %v3620
      %4230 = vrot.lane.b32.xlu0 %v4198, 32
      %v4231 = vpop.permute.xlu0 %4230
      %4232 = vrot.lane.b32.xlu0 %v4199, 32
      %v4233 = vpop.permute.xlu0 %4232
      %4234 = vrot.lane.b32.xlu0 %v4200, 32
      %v4235 = vpop.permute.xlu0 %4234
      %4236 = vrot.lane.b32.xlu0 %v4201, 32
      %v4237 = vpop.permute.xlu0 %4236
      %4238 = vrot.lane.b32.xlu0 %v4202, 32
      %v4239 = vpop.permute.xlu0 %4238
      %4240 = vrot.lane.b32.xlu0 %v4203, 32
      %v4241 = vpop.permute.xlu0 %4240
      %4242 = vrot.lane.b32.xlu0 %v4204, 32
      %v4243 = vpop.permute.xlu0 %4242
      %4244 = vrot.lane.b32.xlu0 %v4205, 32
      %v4245 = vpop.permute.xlu0 %4244
      %4246 = vrot.lane.b32.xlu0 %v4206, 32
      %v4247 = vpop.permute.xlu0 %4246
      %4248 = vrot.lane.b32.xlu0 %v4207, 32
      %v4249 = vpop.permute.xlu0 %4248
      %4250 = vrot.lane.b32.xlu0 %v4208, 32
      %v4251 = vpop.permute.xlu0 %4250
      %4252 = vrot.lane.b32.xlu0 %v4209, 32
      %v4253 = vpop.permute.xlu0 %4252
      %4254 = vrot.lane.b32.xlu0 %v4210, 32
      %v4255 = vpop.permute.xlu0 %4254
      %4256 = vrot.lane.b32.xlu0 %v4211, 32
      %v4257 = vpop.permute.xlu0 %4256
      %4258 = vrot.lane.b32.xlu0 %v4212, 32
      %v4259 = vpop.permute.xlu0 %4258
      %4260 = vrot.lane.b32.xlu0 %v4213, 32
      %v4261 = vpop.permute.xlu0 %4260
      %4278 = vst.msk [vmem:[#allocation2] sm:$0xff] %vm2009, %v4231
      %4279 = vst.msk [vmem:[#allocation2 + $0x8] sm:$0xff] %vm2009, %v4233
      %4280 = vst.msk [vmem:[#allocation2 + $0x10] sm:$0xff] %vm2009, %v4235
      %4281 = vst.msk [vmem:[#allocation2 + $0x18] sm:$0xff] %vm2009, %v4237
      %4282 = vst.msk [vmem:[#allocation2 + $0x20] sm:$0xff] %vm2009, %v4239
      %4283 = vst.msk [vmem:[#allocation2 + $0x28] sm:$0xff] %vm2009, %v4241
      %4284 = vst.msk [vmem:[#allocation2 + $0x30] sm:$0xff] %vm2009, %v4243
      %4285 = vst.msk [vmem:[#allocation2 + $0x38] sm:$0xff] %vm2009, %v4245
      %4286 = vst.msk [vmem:[#allocation2 + $0x40] sm:$0xff] %vm2009, %v4247
      %4287 = vst.msk [vmem:[#allocation2 + $0x48] sm:$0xff] %vm2009, %v4249
      %4288 = vst.msk [vmem:[#allocation2 + $0x50] sm:$0xff] %vm2009, %v4251
      %4289 = vst.msk [vmem:[#allocation2 + $0x58] sm:$0xff] %vm2009, %v4253
      %4290 = vst.msk [vmem:[#allocation2 + $0x60] sm:$0xff] %vm2009, %v4255
      %4291 = vst.msk [vmem:[#allocation2 + $0x68] sm:$0xff] %vm2009, %v4257
      %4292 = vst.msk [vmem:[#allocation2 + $0x70] sm:$0xff] %vm2009, %v4259
      %4293 = vst.msk [vmem:[#allocation2 + $0x78] sm:$0xff] %vm2009, %v4261
      %v4294 = vsel %vm2154, %v3940, 0.0
      %v4295 = vsel %vm2155, %v3939, 0.0
      %v4296 = vsel %vm2156, %v3938, 0.0
      %v4297 = vsel %vm2157, %v3937, 0.0
      %v4298 = vsel %vm2158, %v3936, 0.0
      %v4299 = vsel %vm2159, %v3935, 0.0
      %v4300 = vsel %vm2160, %v3934, 0.0
      %v4301 = vsel %vm2161, %v3933, 0.0
      %v4302 = vsel %vm2162, %v3932, 0.0
      %v4303 = vsel %vm2163, %v3931, 0.0
      %v4304 = vsel %vm2164, %v3930, 0.0
      %v4305 = vsel %vm2165, %v3929, 0.0
      %v4306 = vsel %vm2166, %v3928, 0.0
      %v4307 = vsel %vm2167, %v3927, 0.0
      %v4308 = vsel %vm2168, %v3926, 0.0
      %v4309 = vsel %vm2169, %v3925, 0.0
      %v4310 = vsel %vm2170, %v3924, 0.0
      %v4311 = vsel %vm2171, %v3923, 0.0
      %v4312 = vsel %vm2172, %v3922, 0.0
      %v4313 = vsel %vm2173, %v3921, 0.0
      %v4314 = vsel %vm2174, %v3920, 0.0
      %v4315 = vsel %vm2175, %v3919, 0.0
      %v4316 = vsel %vm2176, %v3918, 0.0
      %v4317 = vsel %vm2177, %v3917, 0.0
      %v4318 = vsel %vm2178, %v3916, 0.0
      %v4319 = vsel %vm2179, %v3915, 0.0
      %v4320 = vsel %vm2180, %v3914, 0.0
      %v4321 = vsel %vm2181, %v3913, 0.0
      %v4322 = vsel %vm2182, %v3912, 0.0
      %v4323 = vsel %vm2183, %v3911, 0.0
      %v4324 = vsel %vm2184, %v3910, 0.0
      %v4325 = vsel %vm2185, %v3941, 0.0
      %v4326 = vpack.c.bf16 %v4295, %v4294
      %v4327 = vpack.c.bf16 %v4297, %v4296
      %v4328 = vpack.c.bf16 %v4299, %v4298
      %v4329 = vpack.c.bf16 %v4301, %v4300
      %v4330 = vpack.c.bf16 %v4303, %v4302
      %v4331 = vpack.c.bf16 %v4305, %v4304
      %v4332 = vpack.c.bf16 %v4307, %v4306
      %v4333 = vpack.c.bf16 %v4309, %v4308
      %v4334 = vpack.c.bf16 %v4311, %v4310
      %v4335 = vpack.c.bf16 %v4313, %v4312
      %v4336 = vpack.c.bf16 %v4315, %v4314
      %v4337 = vpack.c.bf16 %v4317, %v4316
      %v4338 = vpack.c.bf16 %v4319, %v4318
      %v4339 = vpack.c.bf16 %v4321, %v4320
      %v4340 = vpack.c.bf16 %v4323, %v4322
      %v4341 = vpack.c.bf16 %v4325, %v4324
      %4358 = vrot.lane.b32.xlu0 %v4326, 40
      %v4359 = vpop.permute.xlu0 %4358
      %4360 = vrot.lane.b32.xlu0 %v4327, 40
      %v4361 = vpop.permute.xlu0 %4360
      %4362 = vrot.lane.b32.xlu0 %v4328, 40
      %v4363 = vpop.permute.xlu0 %4362
      %4364 = vrot.lane.b32.xlu0 %v4329, 40
      %v4365 = vpop.permute.xlu0 %4364
      %4366 = vrot.lane.b32.xlu0 %v4330, 40
      %v4367 = vpop.permute.xlu0 %4366
      %4368 = vrot.lane.b32.xlu0 %v4331, 40
      %v4369 = vpop.permute.xlu0 %4368
      %4370 = vrot.lane.b32.xlu0 %v4332, 40
      %v4371 = vpop.permute.xlu0 %4370
      %4372 = vrot.lane.b32.xlu0 %v4333, 40
      %v4373 = vpop.permute.xlu0 %4372
      %4374 = vrot.lane.b32.xlu0 %v4334, 40
      %v4375 = vpop.permute.xlu0 %4374
      %4376 = vrot.lane.b32.xlu0 %v4335, 40
      %v4377 = vpop.permute.xlu0 %4376
      %4378 = vrot.lane.b32.xlu0 %v4336, 40
      %v4379 = vpop.permute.xlu0 %4378
      %4380 = vrot.lane.b32.xlu0 %v4337, 40
      %v4381 = vpop.permute.xlu0 %4380
      %4382 = vrot.lane.b32.xlu0 %v4338, 40
      %v4383 = vpop.permute.xlu0 %4382
      %4384 = vrot.lane.b32.xlu0 %v4339, 40
      %v4385 = vpop.permute.xlu0 %4384
      %4386 = vrot.lane.b32.xlu0 %v4340, 40
      %v4387 = vpop.permute.xlu0 %4386
      %4388 = vrot.lane.b32.xlu0 %v4341, 40
      %v4389 = vpop.permute.xlu0 %4388
      %4406 = vst.msk [vmem:[#allocation2] sm:$0xff] %vm2298, %v4359
      %4407 = vst.msk [vmem:[#allocation2 + $0x8] sm:$0xff] %vm2298, %v4361
      %4408 = vst.msk [vmem:[#allocation2 + $0x10] sm:$0xff] %vm2298, %v4363
      %4409 = vst.msk [vmem:[#allocation2 + $0x18] sm:$0xff] %vm2298, %v4365
      %4410 = vst.msk [vmem:[#allocation2 + $0x20] sm:$0xff] %vm2298, %v4367
      %4411 = vst.msk [vmem:[#allocation2 + $0x28] sm:$0xff] %vm2298, %v4369
      %4412 = vst.msk [vmem:[#allocation2 + $0x30] sm:$0xff] %vm2298, %v4371
      %4413 = vst.msk [vmem:[#allocation2 + $0x38] sm:$0xff] %vm2298, %v4373
      %4414 = vst.msk [vmem:[#allocation2 + $0x40] sm:$0xff] %vm2298, %v4375
      %4415 = vst.msk [vmem:[#allocation2 + $0x48] sm:$0xff] %vm2298, %v4377
      %4416 = vst.msk [vmem:[#allocation2 + $0x50] sm:$0xff] %vm2298, %v4379
      %4417 = vst.msk [vmem:[#allocation2 + $0x58] sm:$0xff] %vm2298, %v4381
      %4418 = vst.msk [vmem:[#allocation2 + $0x60] sm:$0xff] %vm2298, %v4383
      %4419 = vst.msk [vmem:[#allocation2 + $0x68] sm:$0xff] %vm2298, %v4385
      %4420 = vst.msk [vmem:[#allocation2 + $0x70] sm:$0xff] %vm2298, %v4387
      %4421 = vst.msk [vmem:[#allocation2 + $0x78] sm:$0xff] %vm2298, %v4389
      %v4422 = vsel %vm2475, %v3683, 0.0
      %v4423 = vsel %vm2476, %v3682, 0.0
      %v4424 = vsel %vm2477, %v3681, 0.0
      %v4425 = vsel %vm2478, %v3680, 0.0
      %v4426 = vsel %vm2479, %v3679, 0.0
      %v4427 = vsel %vm2480, %v3678, 0.0
      %v4428 = vsel %vm2481, %v3677, 0.0
      %v4429 = vsel %vm2482, %v3676, 0.0
      %v4430 = vsel %vm2483, %v3675, 0.0
      %v4431 = vsel %vm2484, %v3674, 0.0
      %v4432 = vsel %vm2485, %v3673, 0.0
      %v4433 = vsel %vm2486, %v3672, 0.0
      %v4434 = vsel %vm2487, %v3671, 0.0
      %v4435 = vsel %vm2488, %v3670, 0.0
      %v4436 = vsel %vm2489, %v3669, 0.0
      %v4437 = vsel %vm2490, %v3668, 0.0
      %v4438 = vsel %vm2491, %v3667, 0.0
      %v4439 = vsel %vm2492, %v3666, 0.0
      %v4440 = vsel %vm2493, %v3665, 0.0
      %v4441 = vsel %vm2494, %v3664, 0.0
      %v4442 = vsel %vm2495, %v3663, 0.0
      %v4443 = vsel %vm2496, %v3662, 0.0
      %v4444 = vsel %vm2497, %v3661, 0.0
      %v4445 = vsel %vm2498, %v3660, 0.0
      %v4446 = vsel %vm2499, %v3659, 0.0
      %v4447 = vsel %vm2500, %v3658, 0.0
      %v4448 = vsel %vm2501, %v3657, 0.0
      %v4449 = vsel %vm2502, %v3656, 0.0
      %v4450 = vsel %vm2503, %v3655, 0.0
      %v4451 = vsel %vm2504, %v3654, 0.0
      %v4452 = vsel %vm2505, %v3685, 0.0
      %v4453 = vsel %vm2506, %v3684, 0.0
      %v4454 = vpack.c.bf16 %v4423, %v4422
      %v4455 = vpack.c.bf16 %v4425, %v4424
      %v4456 = vpack.c.bf16 %v4427, %v4426
      %v4457 = vpack.c.bf16 %v4429, %v4428
      %v4458 = vpack.c.bf16 %v4431, %v4430
      %v4459 = vpack.c.bf16 %v4433, %v4432
      %v4460 = vpack.c.bf16 %v4435, %v4434
      %v4461 = vpack.c.bf16 %v4437, %v4436
      %v4462 = vpack.c.bf16 %v4439, %v4438
      %v4463 = vpack.c.bf16 %v4441, %v4440
      %v4464 = vpack.c.bf16 %v4443, %v4442
      %v4465 = vpack.c.bf16 %v4445, %v4444
      %v4466 = vpack.c.bf16 %v4447, %v4446
      %v4467 = vpack.c.bf16 %v4449, %v4448
      %v4468 = vpack.c.bf16 %v4451, %v4450
      %v4469 = vpack.c.bf16 %v4453, %v4452
      %4486 = vrot.lane.b32.xlu0 %v4454, 48
      %v4487 = vpop.permute.xlu0 %4486
      %4488 = vrot.lane.b32.xlu0 %v4455, 48
      %v4489 = vpop.permute.xlu0 %4488
      %4490 = vrot.lane.b32.xlu0 %v4456, 48
      %v4491 = vpop.permute.xlu0 %4490
      %4492 = vrot.lane.b32.xlu0 %v4457, 48
      %v4493 = vpop.permute.xlu0 %4492
      %4494 = vrot.lane.b32.xlu0 %v4458, 48
      %v4495 = vpop.permute.xlu0 %4494
      %4496 = vrot.lane.b32.xlu0 %v4459, 48
      %v4497 = vpop.permute.xlu0 %4496
      %4498 = vrot.lane.b32.xlu0 %v4460, 48
      %v4499 = vpop.permute.xlu0 %4498
      %4500 = vrot.lane.b32.xlu0 %v4461, 48
      %v4501 = vpop.permute.xlu0 %4500
      %4502 = vrot.lane.b32.xlu0 %v4462, 48
      %v4503 = vpop.permute.xlu0 %4502
      %4504 = vrot.lane.b32.xlu0 %v4463, 48
      %v4505 = vpop.permute.xlu0 %4504
      %4506 = vrot.lane.b32.xlu0 %v4464, 48
      %v4507 = vpop.permute.xlu0 %4506
      %4508 = vrot.lane.b32.xlu0 %v4465, 48
      %v4509 = vpop.permute.xlu0 %4508
      %4510 = vrot.lane.b32.xlu0 %v4466, 48
      %v4511 = vpop.permute.xlu0 %4510
      %4512 = vrot.lane.b32.xlu0 %v4467, 48
      %v4513 = vpop.permute.xlu0 %4512
      %4514 = vrot.lane.b32.xlu0 %v4468, 48
      %v4515 = vpop.permute.xlu0 %4514
      %4516 = vrot.lane.b32.xlu0 %v4469, 48
      %v4517 = vpop.permute.xlu0 %4516
      %4534 = vst.msk [vmem:[#allocation2] sm:$0xff] %vm2619, %v4487
      %4535 = vst.msk [vmem:[#allocation2 + $0x8] sm:$0xff] %vm2619, %v4489
      %4536 = vst.msk [vmem:[#allocation2 + $0x10] sm:$0xff] %vm2619, %v4491
      %4537 = vst.msk [vmem:[#allocation2 + $0x18] sm:$0xff] %vm2619, %v4493
      %4538 = vst.msk [vmem:[#allocation2 + $0x20] sm:$0xff] %vm2619, %v4495
      %4539 = vst.msk [vmem:[#allocation2 + $0x28] sm:$0xff] %vm2619, %v4497
      %4540 = vst.msk [vmem:[#allocation2 + $0x30] sm:$0xff] %vm2619, %v4499
      %4541 = vst.msk [vmem:[#allocation2 + $0x38] sm:$0xff] %vm2619, %v4501
      %4542 = vst.msk [vmem:[#allocation2 + $0x40] sm:$0xff] %vm2619, %v4503
      %4543 = vst.msk [vmem:[#allocation2 + $0x48] sm:$0xff] %vm2619, %v4505
      %4544 = vst.msk [vmem:[#allocation2 + $0x50] sm:$0xff] %vm2619, %v4507
      %4545 = vst.msk [vmem:[#allocation2 + $0x58] sm:$0xff] %vm2619, %v4509
      %4546 = vst.msk [vmem:[#allocation2 + $0x60] sm:$0xff] %vm2619, %v4511
      %4547 = vst.msk [vmem:[#allocation2 + $0x68] sm:$0xff] %vm2619, %v4513
      %4548 = vst.msk [vmem:[#allocation2 + $0x70] sm:$0xff] %vm2619, %v4515
      %4549 = vst.msk [vmem:[#allocation2 + $0x78] sm:$0xff] %vm2619, %v4517
      %v4550 = vsel %vm2764, %v3592, 0.0
      %v4551 = vsel %vm2765, %v3593, 0.0
      %v4552 = vsel %vm2766, %v3594, 0.0
      %v4553 = vsel %vm2767, %v3595, 0.0
      %v4554 = vsel %vm2768, %v3596, 0.0
      %v4555 = vsel %vm2769, %v3597, 0.0
      %v4556 = vsel %vm2770, %v3598, 0.0
      %v4557 = vsel %vm2771, %v3599, 0.0
      %v4558 = vsel %vm2772, %v3600, 0.0
      %v4559 = vsel %vm2773, %v3601, 0.0
      %v4560 = vsel %vm2774, %v3602, 0.0
      %v4561 = vsel %vm2775, %v3603, 0.0
      %v4562 = vsel %vm2776, %v3604, 0.0
      %v4563 = vsel %vm2777, %v3605, 0.0
      %v4564 = vsel %vm2778, %v3606, 0.0
      %v4565 = vsel %vm2779, %v3607, 0.0
      %v4566 = vsel %vm2780, %v3608, 0.0
      %v4567 = vsel %vm2781, %v3609, 0.0
      %v4568 = vsel %vm2782, %v3610, 0.0
      %v4569 = vsel %vm2783, %v3611, 0.0
      %v4570 = vsel %vm2784, %v3612, 0.0
      %v4571 = vsel %vm2785, %v3613, 0.0
      %v4572 = vsel %vm2786, %v3614, 0.0
      %v4573 = vsel %vm2787, %v3615, 0.0
      %v4574 = vsel %vm2788, %v3616, 0.0
      %v4575 = vsel %vm2789, %v3617, 0.0
      %v4576 = vsel %vm2790, %v3618, 0.0
      %v4577 = vsel %vm2791, %v3619, 0.0
      %v4578 = vsel %vm2792, %v3620, 0.0
      %v4579 = vsel %vm2793, %v3621, 0.0
      %v4580 = vsel %vm2794, %v3590, 0.0
      %v4581 = vsel %vm2795, %v3591, 0.0
      %v4582 = vpack.c.bf16 %v4551, %v4550
      %v4583 = vpack.c.bf16 %v4553, %v4552
      %v4584 = vpack.c.bf16 %v4555, %v4554
      %v4585 = vpack.c.bf16 %v4557, %v4556
      %v4586 = vpack.c.bf16 %v4559, %v4558
      %v4587 = vpack.c.bf16 %v4561, %v4560
      %v4588 = vpack.c.bf16 %v4563, %v4562
      %v4589 = vpack.c.bf16 %v4565, %v4564
      %v4590 = vpack.c.bf16 %v4567, %v4566
      %v4591 = vpack.c.bf16 %v4569, %v4568
      %v4592 = vpack.c.bf16 %v4571, %v4570
      %v4593 = vpack.c.bf16 %v4573, %v4572
      %v4594 = vpack.c.bf16 %v4575, %v4574
      %v4595 = vpack.c.bf16 %v4577, %v4576
      %v4596 = vpack.c.bf16 %v4579, %v4578
      %v4597 = vpack.c.bf16 %v4581, %v4580
      %4614 = vrot.lane.b32.xlu0 %v4582, 56
      %v4615 = vpop.permute.xlu0 %4614
      %4616 = vrot.lane.b32.xlu0 %v4583, 56
      %v4617 = vpop.permute.xlu0 %4616
      %4618 = vrot.lane.b32.xlu0 %v4584, 56
      %v4619 = vpop.permute.xlu0 %4618
      %4620 = vrot.lane.b32.xlu0 %v4585, 56
      %v4621 = vpop.permute.xlu0 %4620
      %4622 = vrot.lane.b32.xlu0 %v4586, 56
      %v4623 = vpop.permute.xlu0 %4622
      %4624 = vrot.lane.b32.xlu0 %v4587, 56
      %v4625 = vpop.permute.xlu0 %4624
      %4626 = vrot.lane.b32.xlu0 %v4588, 56
      %v4627 = vpop.permute.xlu0 %4626
      %4628 = vrot.lane.b32.xlu0 %v4589, 56
      %v4629 = vpop.permute.xlu0 %4628
      %4630 = vrot.lane.b32.xlu0 %v4590, 56
      %v4631 = vpop.permute.xlu0 %4630
      %4632 = vrot.lane.b32.xlu0 %v4591, 56
      %v4633 = vpop.permute.xlu0 %4632
      %4634 = vrot.lane.b32.xlu0 %v4592, 56
      %v4635 = vpop.permute.xlu0 %4634
      %4636 = vrot.lane.b32.xlu0 %v4593, 56
      %v4637 = vpop.permute.xlu0 %4636
      %4638 = vrot.lane.b32.xlu0 %v4594, 56
      %v4639 = vpop.permute.xlu0 %4638
      %4640 = vrot.lane.b32.xlu0 %v4595, 56
      %v4641 = vpop.permute.xlu0 %4640
      %4642 = vrot.lane.b32.xlu0 %v4596, 56
      %v4643 = vpop.permute.xlu0 %4642
      %4644 = vrot.lane.b32.xlu0 %v4597, 56
      %v4645 = vpop.permute.xlu0 %4644
      %4662 = vst.msk [vmem:[#allocation2] sm:$0xff] %vm2908, %v4615
      %4663 = vst.msk [vmem:[#allocation2 + $0x8] sm:$0xff] %vm2908, %v4617
      %4664 = vst.msk [vmem:[#allocation2 + $0x10] sm:$0xff] %vm2908, %v4619
      %4665 = vst.msk [vmem:[#allocation2 + $0x18] sm:$0xff] %vm2908, %v4621
      %4666 = vst.msk [vmem:[#allocation2 + $0x20] sm:$0xff] %vm2908, %v4623
      %4667 = vst.msk [vmem:[#allocation2 + $0x28] sm:$0xff] %vm2908, %v4625
      %4668 = vst.msk [vmem:[#allocation2 + $0x30] sm:$0xff] %vm2908, %v4627
      %4669 = vst.msk [vmem:[#allocation2 + $0x38] sm:$0xff] %vm2908, %v4629
      %4670 = vst.msk [vmem:[#allocation2 + $0x40] sm:$0xff] %vm2908, %v4631
      %4671 = vst.msk [vmem:[#allocation2 + $0x48] sm:$0xff] %vm2908, %v4633
      %4672 = vst.msk [vmem:[#allocation2 + $0x50] sm:$0xff] %vm2908, %v4635
      %4673 = vst.msk [vmem:[#allocation2 + $0x58] sm:$0xff] %vm2908, %v4637
      %4674 = vst.msk [vmem:[#allocation2 + $0x60] sm:$0xff] %vm2908, %v4639
      %4675 = vst.msk [vmem:[#allocation2 + $0x68] sm:$0xff] %vm2908, %v4641
      %4676 = vst.msk [vmem:[#allocation2 + $0x70] sm:$0xff] %vm2908, %v4643
      %4677 = vst.msk [vmem:[#allocation2 + $0x78] sm:$0xff] %vm2908, %v4645
      %v4678 = vsel %vm3085, %v3938, 0.0
      %v4679 = vsel %vm3086, %v3937, 0.0
      %v4680 = vsel %vm3087, %v3936, 0.0
      %v4681 = vsel %vm3088, %v3935, 0.0
      %v4682 = vsel %vm3089, %v3934, 0.0
      %v4683 = vsel %vm3090, %v3933, 0.0
      %v4684 = vsel %vm3091, %v3932, 0.0
      %v4685 = vsel %vm3092, %v3931, 0.0
      %v4686 = vsel %vm3093, %v3930, 0.0
      %v4687 = vsel %vm3094, %v3929, 0.0
      %v4688 = vsel %vm3095, %v3928, 0.0
      %v4689 = vsel %vm3096, %v3927, 0.0
      %v4690 = vsel %vm3097, %v3926, 0.0
      %v4691 = vsel %vm3098, %v3925, 0.0
      %v4692 = vsel %vm3099, %v3924, 0.0
      %v4693 = vsel %vm3100, %v3923, 0.0
      %v4694 = vsel %vm3101, %v3922, 0.0
      %v4695 = vsel %vm3102, %v3921, 0.0
      %v4696 = vsel %vm3103, %v3920, 0.0
      %v4697 = vsel %vm3104, %v3919, 0.0
      %v4698 = vsel %vm3105, %v3918, 0.0
      %v4699 = vsel %vm3106, %v3917, 0.0
      %v4700 = vsel %vm3107, %v3916, 0.0
      %v4701 = vsel %vm3108, %v3915, 0.0
      %v4702 = vsel %vm3109, %v3914, 0.0
      %v4703 = vsel %vm3110, %v3913, 0.0
      %v4704 = vsel %vm3111, %v3912, 0.0
      %v4705 = vsel %vm3112, %v3911, 0.0
      %v4706 = vsel %vm3113, %v3910, 0.0
      %v4707 = vsel %vm3114, %v3941, 0.0
      %v4708 = vsel %vm3115, %v3940, 0.0
      %v4709 = vsel %vm3116, %v3939, 0.0
      %v4710 = vpack.c.bf16 %v4679, %v4678
      %v4711 = vpack.c.bf16 %v4681, %v4680
      %v4712 = vpack.c.bf16 %v4683, %v4682
      %v4713 = vpack.c.bf16 %v4685, %v4684
      %v4714 = vpack.c.bf16 %v4687, %v4686
      %v4715 = vpack.c.bf16 %v4689, %v4688
      %v4716 = vpack.c.bf16 %v4691, %v4690
      %v4717 = vpack.c.bf16 %v4693, %v4692
      %v4718 = vpack.c.bf16 %v4695, %v4694
      %v4719 = vpack.c.bf16 %v4697, %v4696
      %v4720 = vpack.c.bf16 %v4699, %v4698
      %v4721 = vpack.c.bf16 %v4701, %v4700
      %v4722 = vpack.c.bf16 %v4703, %v4702
      %v4723 = vpack.c.bf16 %v4705, %v4704
      %v4724 = vpack.c.bf16 %v4707, %v4706
      %v4725 = vpack.c.bf16 %v4709, %v4708
      %4742 = vrot.lane.b32.xlu0 %v4710, 64
      %v4743 = vpop.permute.xlu0 %4742
      %4744 = vrot.lane.b32.xlu0 %v4711, 64
      %v4745 = vpop.permute.xlu0 %4744
      %4746 = vrot.lane.b32.xlu0 %v4712, 64
      %v4747 = vpop.permute.xlu0 %4746
      %4748 = vrot.lane.b32.xlu0 %v4713, 64
      %v4749 = vpop.permute.xlu0 %4748
      %4750 = vrot.lane.b32.xlu0 %v4714, 64
      %v4751 = vpop.permute.xlu0 %4750
      %4752 = vrot.lane.b32.xlu0 %v4715, 64
      %v4753 = vpop.permute.xlu0 %4752
      %4754 = vrot.lane.b32.xlu0 %v4716, 64
      %v4755 = vpop.permute.xlu0 %4754
      %4756 = vrot.lane.b32.xlu0 %v4717, 64
      %v4757 = vpop.permute.xlu0 %4756
      %4758 = vrot.lane.b32.xlu0 %v4718, 64
      %v4759 = vpop.permute.xlu0 %4758
      %4760 = vrot.lane.b32.xlu0 %v4719, 64
      %v4761 = vpop.permute.xlu0 %4760
      %4762 = vrot.lane.b32.xlu0 %v4720, 64
      %v4763 = vpop.permute.xlu0 %4762
      %4764 = vrot.lane.b32.xlu0 %v4721, 64
      %v4765 = vpop.permute.xlu0 %4764
      %4766 = vrot.lane.b32.xlu0 %v4722, 64
      %v4767 = vpop.permute.xlu0 %4766
      %4768 = vrot.lane.b32.xlu0 %v4723, 64
      %v4769 = vpop.permute.xlu0 %4768
      %4770 = vrot.lane.b32.xlu0 %v4724, 64
      %v4771 = vpop.permute.xlu0 %4770
      %4772 = vrot.lane.b32.xlu0 %v4725, 64
      %v4773 = vpop.permute.xlu0 %4772
      %4790 = vst.msk [vmem:[#allocation2] sm:$0xff] %vm3229, %v4743
      %4791 = vst.msk [vmem:[#allocation2 + $0x8] sm:$0xff] %vm3229, %v4745
      %4792 = vst.msk [vmem:[#allocation2 + $0x10] sm:$0xff] %vm3229, %v4747
      %4793 = vst.msk [vmem:[#allocation2 + $0x18] sm:$0xff] %vm3229, %v4749
      %4794 = vst.msk [vmem:[#allocation2 + $0x20] sm:$0xff] %vm3229, %v4751
      %4795 = vst.msk [vmem:[#allocation2 + $0x28] sm:$0xff] %vm3229, %v4753
      %4796 = vst.msk [vmem:[#allocation2 + $0x30] sm:$0xff] %vm3229, %v4755
      %4797 = vst.msk [vmem:[#allocation2 + $0x38] sm:$0xff] %vm3229, %v4757
      %4798 = vst.msk [vmem:[#allocation2 + $0x40] sm:$0xff] %vm3229, %v4759
      %4799 = vst.msk [vmem:[#allocation2 + $0x48] sm:$0xff] %vm3229, %v4761
      %4800 = vst.msk [vmem:[#allocation2 + $0x50] sm:$0xff] %vm3229, %v4763
      %4801 = vst.msk [vmem:[#allocation2 + $0x58] sm:$0xff] %vm3229, %v4765
      %4802 = vst.msk [vmem:[#allocation2 + $0x60] sm:$0xff] %vm3229, %v4767
      %4803 = vst.msk [vmem:[#allocation2 + $0x68] sm:$0xff] %vm3229, %v4769
      %4804 = vst.msk [vmem:[#allocation2 + $0x70] sm:$0xff] %vm3229, %v4771
      %4805 = vst.msk [vmem:[#allocation2 + $0x78] sm:$0xff] %vm3229, %v4773
      %v4806 = vld [vmem:[#allocation2] sm:$0xff]
      %v4807 = vld [vmem:[#allocation2 + $0x8] sm:$0xff]
      %v4808 = vld [vmem:[#allocation2 + $0x10] sm:$0xff]
      %v4809 = vld [vmem:[#allocation2 + $0x18] sm:$0xff]
      %v4810 = vld [vmem:[#allocation2 + $0x20] sm:$0xff]
      %v4811 = vld [vmem:[#allocation2 + $0x28] sm:$0xff]
      %v4812 = vld [vmem:[#allocation2 + $0x30] sm:$0xff]
      %v4813 = vld [vmem:[#allocation2 + $0x38] sm:$0xff]
      %v4814 = vld [vmem:[#allocation2 + $0x40] sm:$0xff]
      %v4815 = vld [vmem:[#allocation2 + $0x48] sm:$0xff]
      %v4816 = vld [vmem:[#allocation2 + $0x50] sm:$0xff]
      %v4817 = vld [vmem:[#allocation2 + $0x58] sm:$0xff]
      %v4818 = vld [vmem:[#allocation2 + $0x60] sm:$0xff]
      %v4819 = vld [vmem:[#allocation2 + $0x68] sm:$0xff]
      %v4820 = vld [vmem:[#allocation2 + $0x70] sm:$0xff]
      %v4821 = vld [vmem:[#allocation2 + $0x78] sm:$0xff]
      %v4822 = vld [vmem:[%s6] sm:$0xf]
      %v4823 = vld [vmem:[%s6 + $0x4] sm:$0xf]
      %v4824 = vld [vmem:[%s6 + $0x8] sm:$0xf]
      %v4825 = vld [vmem:[%s6 + $0xc] sm:$0xf]
      %v4826 = vld [vmem:[%s6 + $0x10] sm:$0xf]
      %v4827 = vld [vmem:[%s6 + $0x14] sm:$0xf]
      %v4828 = vld [vmem:[%s6 + $0x18] sm:$0xf]
      %v4829 = vld [vmem:[%s6 + $0x1c] sm:$0xf]
      %v4830 = vld [vmem:[%s6 + $0x20] sm:$0xf]
      %v4840 = vunpack.c.l.b16 %v4822
      %v4841 = vunpack.c.l.b16 %v4823
      %v4842 = vunpack.c.l.b16 %v4824
      %v4843 = vunpack.c.l.b16 %v4825
      %v4844 = vunpack.c.l.b16 %v4826
      %v4845 = vunpack.c.l.b16 %v4827
      %v4846 = vunpack.c.l.b16 %v4828
      %v4847 = vunpack.c.l.b16 %v4829
      %v4848 = vunpack.c.l.b16 %v4830
      %v4849 = vpack.c.b16 %v4841, %v4840
      %v4850 = vpack.c.b16 %v4843, %v4842
      %v4851 = vpack.c.b16 %v4845, %v4844
      %v4852 = vpack.c.b16 %v4847, %v4846
      %v4853 = vpack.c.b16 %v4848, %v4848
      %v4859 = vsel %vm3298, %v4806, 0
      %v4862 = vsel %vm3298, %v4807, 0
      %v4865 = vsel %vm3298, %v4808, 0
      %v4868 = vsel %vm3298, %v4809, 0
      %v4871 = vsel %vm3298, %v4810, 0
      %v4874 = vsel %vm3298, %v4811, 0
      %v4877 = vsel %vm3298, %v4812, 0
      %v4880 = vsel %vm3298, %v4813, 0
      %v4883 = vsel %vm3298, %v4814, 0
      %v4886 = vsel %vm3298, %v4815, 0
      %v4889 = vsel %vm3298, %v4816, 0
      %v4892 = vsel %vm3298, %v4817, 0
      %v4895 = vsel %vm3298, %v4818, 0
      %v4898 = vsel %vm3298, %v4819, 0
      %v4901 = vsel %vm3298, %v4820, 0
      %v4904 = vsel %vm3298, %v4821, 0
      %v4907 = vsel %vm3347, %v4853, 0
      %4909 = vmatprep.subr.bf16.mxu0 0
      %4910 = vmatpush1.bf16.msra.mxu0 %v4849
      %4911 = vmatprep.subr.bf16.mxu0 0
      %4912 = vmatpush1.bf16.msra.mxu0 %v4850
      %4913 = vmatprep.subr.bf16.mxu0 0
      %4914 = vmatpush1.bf16.msra.mxu0 %v4851
      %4915 = vmatprep.subr.bf16.mxu0 0
      %4916 = vmatpush1.bf16.msra.mxu0 %v4852
      %4917 = vmatprep.subr.bf16.mxu0 0
      %4918 = vmatpush1.bf16.msra.mxu0 %v4907
      %4919 = vmatprep.subr.bf16.mxu0 0
      %4920 = vmatpush1.bf16.msra.mxu0 0
      %4921 = vmatprep.subr.bf16.mxu0 0
      %4922 = vmatpush1.bf16.msra.mxu0 0
      %4923 = vmatprep.subr.bf16.mxu0 0
      %4924 = vmatpush1.bf16.msra.mxu0 0
      %4925 = vmatprep.subr.bf16.mxu0 0
      %4926 = vmatpush1.bf16.msra.mxu0 0
      %4927 = vmatprep.subr.bf16.mxu0 0
      %4928 = vmatpush1.bf16.msra.mxu0 0
      %4929 = vmatprep.subr.bf16.mxu0 0
      %4930 = vmatpush1.bf16.msra.mxu0 0
      %4931 = vmatprep.subr.bf16.mxu0 0
      %4932 = vmatpush1.bf16.msra.mxu0 0
      %4933 = vmatprep.subr.bf16.mxu0 0
      %4934 = vmatpush1.bf16.msra.mxu0 0
      %4935 = vmatprep.subr.bf16.mxu0 0
      %4936 = vmatpush1.bf16.msra.mxu0 0
      %4937 = vmatprep.subr.bf16.mxu0 0
      %4938 = vmatpush1.bf16.msra.mxu0 0
      %4939 = vmatprep.subr.bf16.mxu0 0
      %4940 = vmatpush1.bf16.msra.mxu0 0
      %4941 = vmatprep.mubr.bf16.mxu0 0
      %4942 = vmatmul.mubr.bf16.gmra.mrb[0].mxu0 %v4859
      %v4943 = vpop.f32.mrb[0].mxu0
      %v4944 = vadd.f32 0.0, %v4943
      %v4945 = vpop.f32.mrb[0].mxu0
      %v4946 = vpop.f32.mrb[0].mxu0
      %v4947 = vadd.f32 0.0, %v4946
      %v4948 = vpop.f32.mrb[0].mxu0
      %4949 = vmatprep.mubr.bf16.mxu0 0
      %4950 = vmatmul.mubr.bf16.gmra.mrb[0].mxu0 %v4862
      %v4951 = vpop.f32.mrb[0].mxu0
      %v4952 = vadd.f32 0.0, %v4951
      %v4953 = vpop.f32.mrb[0].mxu0
      %v4954 = vpop.f32.mrb[0].mxu0
      %v4955 = vadd.f32 0.0, %v4954
      %v4956 = vpop.f32.mrb[0].mxu0
      %4957 = vmatprep.mubr.bf16.mxu0 0
      %4958 = vmatmul.mubr.bf16.gmra.mrb[0].mxu0 %v4865
      %v4959 = vpop.f32.mrb[0].mxu0
      %v4960 = vadd.f32 0.0, %v4959
      %v4961 = vpop.f32.mrb[0].mxu0
      %v4962 = vpop.f32.mrb[0].mxu0
      %v4963 = vadd.f32 0.0, %v4962
      %v4964 = vpop.f32.mrb[0].mxu0
      %4965 = vmatprep.mubr.bf16.mxu0 0
      %4966 = vmatmul.mubr.bf16.gmra.mrb[0].mxu0 %v4868
      %v4967 = vpop.f32.mrb[0].mxu0
      %v4968 = vadd.f32 0.0, %v4967
      %v4969 = vpop.f32.mrb[0].mxu0
      %v4970 = vpop.f32.mrb[0].mxu0
      %v4971 = vadd.f32 0.0, %v4970
      %v4972 = vpop.f32.mrb[0].mxu0
      %4973 = vmatprep.mubr.bf16.mxu0 0
      %4974 = vmatmul.mubr.bf16.gmra.mrb[0].mxu0 %v4871
      %v4975 = vpop.f32.mrb[0].mxu0
      %v4976 = vadd.f32 0.0, %v4975
      %v4977 = vpop.f32.mrb[0].mxu0
      %v4978 = vpop.f32.mrb[0].mxu0
      %v4979 = vadd.f32 0.0, %v4978
      %v4980 = vpop.f32.mrb[0].mxu0
      %4981 = vmatprep.mubr.bf16.mxu0 0
      %4982 = vmatmul.mubr.bf16.gmra.mrb[0].mxu0 %v4874
      %v4983 = vpop.f32.mrb[0].mxu0
      %v4984 = vadd.f32 0.0, %v4983
      %v4985 = vpop.f32.mrb[0].mxu0
      %v4986 = vpop.f32.mrb[0].mxu0
      %v4987 = vadd.f32 0.0, %v4986
      %v4988 = vpop.f32.mrb[0].mxu0
      %4989 = vmatprep.mubr.bf16.mxu0 0
      %4990 = vmatmul.mubr.bf16.gmra.mrb[0].mxu0 %v4877
      %v4991 = vpop.f32.mrb[0].mxu0
      %v4992 = vadd.f32 0.0, %v4991
      %v4993 = vpop.f32.mrb[0].mxu0
      %v4994 = vpop.f32.mrb[0].mxu0
      %v4995 = vadd.f32 0.0, %v4994
      %v4996 = vpop.f32.mrb[0].mxu0
      %4997 = vmatprep.mubr.bf16.mxu0 0
      %4998 = vmatmul.mubr.bf16.gmra.mrb[0].mxu0 %v4880
      %v4999 = vpop.f32.mrb[0].mxu0
      %v5000 = vadd.f32 0.0, %v4999
      %v5001 = vpop.f32.mrb[0].mxu0
      %v5002 = vpop.f32.mrb[0].mxu0
      %v5003 = vadd.f32 0.0, %v5002
      %v5004 = vpop.f32.mrb[0].mxu0
      %5005 = vmatprep.mubr.bf16.mxu0 0
      %5006 = vmatmul.mubr.bf16.gmra.mrb[0].mxu0 %v4883
      %v5007 = vpop.f32.mrb[0].mxu0
      %v5008 = vadd.f32 0.0, %v5007
      %v5009 = vpop.f32.mrb[0].mxu0
      %v5010 = vpop.f32.mrb[0].mxu0
      %v5011 = vadd.f32 0.0, %v5010
      %v5012 = vpop.f32.mrb[0].mxu0
      %5013 = vmatprep.mubr.bf16.mxu0 0
      %5014 = vmatmul.mubr.bf16.gmra.mrb[0].mxu0 %v4886
      %v5015 = vpop.f32.mrb[0].mxu0
      %v5016 = vadd.f32 0.0, %v5015
      %v5017 = vpop.f32.mrb[0].mxu0
      %v5018 = vpop.f32.mrb[0].mxu0
      %v5019 = vadd.f32 0.0, %v5018
      %v5020 = vpop.f32.mrb[0].mxu0
      %5021 = vmatprep.mubr.bf16.mxu0 0
      %5022 = vmatmul.mubr.bf16.gmra.mrb[0].mxu0 %v4889
      %v5023 = vpop.f32.mrb[0].mxu0
      %v5024 = vadd.f32 0.0, %v5023
      %v5025 = vpop.f32.mrb[0].mxu0
      %v5026 = vpop.f32.mrb[0].mxu0
      %v5027 = vadd.f32 0.0, %v5026
      %v5028 = vpop.f32.mrb[0].mxu0
      %5029 = vmatprep.mubr.bf16.mxu0 0
      %5030 = vmatmul.mubr.bf16.gmra.mrb[0].mxu0 %v4892
      %v5031 = vpop.f32.mrb[0].mxu0
      %v5032 = vadd.f32 0.0, %v5031
      %v5033 = vpop.f32.mrb[0].mxu0
      %v5034 = vpop.f32.mrb[0].mxu0
      %v5035 = vadd.f32 0.0, %v5034
      %v5036 = vpop.f32.mrb[0].mxu0
      %5037 = vmatprep.mubr.bf16.mxu0 0
      %5038 = vmatmul.mubr.bf16.gmra.mrb[0].mxu0 %v4895
      %v5039 = vpop.f32.mrb[0].mxu0
      %v5040 = vadd.f32 0.0, %v5039
      %v5041 = vpop.f32.mrb[0].mxu0
      %v5042 = vpop.f32.mrb[0].mxu0
      %v5043 = vadd.f32 0.0, %v5042
      %v5044 = vpop.f32.mrb[0].mxu0
      %5045 = vmatprep.mubr.bf16.mxu0 0
      %5046 = vmatmul.mubr.bf16.gmra.mrb[0].mxu0 %v4898
      %v5047 = vpop.f32.mrb[0].mxu0
      %v5048 = vadd.f32 0.0, %v5047
      %v5049 = vpop.f32.mrb[0].mxu0
      %v5050 = vpop.f32.mrb[0].mxu0
      %v5051 = vadd.f32 0.0, %v5050
      %v5052 = vpop.f32.mrb[0].mxu0
      %5053 = vmatprep.mubr.bf16.mxu0 0
      %5054 = vmatmul.mubr.bf16.gmra.mrb[0].mxu0 %v4901
      %v5055 = vpop.f32.mrb[0].mxu0
      %v5056 = vadd.f32 0.0, %v5055
      %v5057 = vpop.f32.mrb[0].mxu0
      %v5058 = vpop.f32.mrb[0].mxu0
      %v5059 = vadd.f32 0.0, %v5058
      %v5060 = vpop.f32.mrb[0].mxu0
      %5061 = vmatprep.mubr.bf16.mxu0 0
      %5062 = vmatmul.mubr.bf16.gmra.mrb[0].mxu0 %v4904
      %v5063 = vpop.f32.mrb[0].mxu0
      %v5064 = vadd.f32 0.0, %v5063
      %v5065 = vpop.f32.mrb[0].mxu0
      %v5066 = vpop.f32.mrb[0].mxu0
      %v5067 = vadd.f32 0.0, %v5066
      %v5068 = vpop.f32.mrb[0].mxu0
      %5069 = vdwg.mxu0
      %v5070 = vld [vmem:[%s7] sm:$0x1]
      %v5072 = vlaneseq
      %v5073 = vshrl.u32 %v5072, 7
      %v5074 = vsub.s32 0, %v5073
      %v5075 = vrot.slane %v5070, %v5074
      %v5077 = vmul.f32 %v4944, %v5075
      %v5078 = vmul.f32 %v4947, %v5075
      %v5079 = vmul.f32 %v4952, %v5075
      %v5080 = vmul.f32 %v4955, %v5075
      %v5081 = vmul.f32 %v4960, %v5075
      %v5082 = vmul.f32 %v4963, %v5075
      %v5083 = vmul.f32 %v4968, %v5075
      %v5084 = vmul.f32 %v4971, %v5075
      %v5085 = vmul.f32 %v4976, %v5075
      %v5086 = vmul.f32 %v4979, %v5075
      %v5087 = vmul.f32 %v4984, %v5075
      %v5088 = vmul.f32 %v4987, %v5075
      %v5089 = vmul.f32 %v4992, %v5075
      %v5090 = vmul.f32 %v4995, %v5075
      %v5091 = vmul.f32 %v5000, %v5075
      %v5092 = vmul.f32 %v5003, %v5075
      %v5093 = vmul.f32 %v5008, %v5075
      %v5094 = vmul.f32 %v5011, %v5075
      %v5095 = vmul.f32 %v5016, %v5075
      %v5096 = vmul.f32 %v5019, %v5075
      %v5097 = vmul.f32 %v5024, %v5075
      %v5098 = vmul.f32 %v5027, %v5075
      %v5099 = vmul.f32 %v5032, %v5075
      %v5100 = vmul.f32 %v5035, %v5075
      %v5101 = vmul.f32 %v5040, %v5075
      %v5102 = vmul.f32 %v5043, %v5075
      %v5103 = vmul.f32 %v5048, %v5075
      %v5104 = vmul.f32 %v5051, %v5075
      %v5105 = vmul.f32 %v5056, %v5075
      %v5106 = vmul.f32 %v5059, %v5075
      %v5107 = vmul.f32 %v5064, %v5075
      %v5108 = vmul.f32 %v5067, %v5075
      %v5109 = vld [vmem:[%s8] sm:$0x1]
      %v5111 = vlaneseq
      %v5112 = vshrl.u32 %v5111, 7
      %v5113 = vsub.s32 0, %v5112
      %v5114 = vrot.slane %v5109, %v5113
      %v5116 = vadd.f32 %v5077, %v5114
      %v5117 = vadd.f32 %v5078, %v5114
      %v5118 = vadd.f32 %v5079, %v5114
      %v5119 = vadd.f32 %v5080, %v5114
      %v5120 = vadd.f32 %v5081, %v5114
      %v5121 = vadd.f32 %v5082, %v5114
      %v5122 = vadd.f32 %v5083, %v5114
      %v5123 = vadd.f32 %v5084, %v5114
      %v5124 = vadd.f32 %v5085, %v5114
      %v5125 = vadd.f32 %v5086, %v5114
      %v5126 = vadd.f32 %v5087, %v5114
      %v5127 = vadd.f32 %v5088, %v5114
      %v5128 = vadd.f32 %v5089, %v5114
      %v5129 = vadd.f32 %v5090, %v5114
      %v5130 = vadd.f32 %v5091, %v5114
      %v5131 = vadd.f32 %v5092, %v5114
      %v5132 = vadd.f32 %v5093, %v5114
      %v5133 = vadd.f32 %v5094, %v5114
      %v5134 = vadd.f32 %v5095, %v5114
      %v5135 = vadd.f32 %v5096, %v5114
      %v5136 = vadd.f32 %v5097, %v5114
      %v5137 = vadd.f32 %v5098, %v5114
      %v5138 = vadd.f32 %v5099, %v5114
      %v5139 = vadd.f32 %v5100, %v5114
      %v5140 = vadd.f32 %v5101, %v5114
      %v5141 = vadd.f32 %v5102, %v5114
      %v5142 = vadd.f32 %v5103, %v5114
      %v5143 = vadd.f32 %v5104, %v5114
      %v5144 = vadd.f32 %v5105, %v5114
      %v5145 = vadd.f32 %v5106, %v5114
      %v5146 = vadd.f32 %v5107, %v5114
      %v5147 = vadd.f32 %v5108, %v5114
      %v5148 = vadd.f32 %v5116, %v369
      %v5149 = vadd.f32 %v5117, %v370
      %v5150 = vadd.f32 %v5118, %v371
      %v5151 = vadd.f32 %v5119, %v372
      %v5152 = vadd.f32 %v5120, %v373
      %v5153 = vadd.f32 %v5121, %v374
      %v5154 = vadd.f32 %v5122, %v375
      %v5155 = vadd.f32 %v5123, %v376
      %v5156 = vadd.f32 %v5124, %v377
      %v5157 = vadd.f32 %v5125, %v378
      %v5158 = vadd.f32 %v5126, %v379
      %v5159 = vadd.f32 %v5127, %v380
      %v5160 = vadd.f32 %v5128, %v381
      %v5161 = vadd.f32 %v5129, %v382
      %v5162 = vadd.f32 %v5130, %v383
      %v5163 = vadd.f32 %v5131, %v384
      %v5164 = vadd.f32 %v5132, %v385
      %v5165 = vadd.f32 %v5133, %v386
      %v5166 = vadd.f32 %v5134, %v387
      %v5167 = vadd.f32 %v5135, %v388
      %v5168 = vadd.f32 %v5136, %v389
      %v5169 = vadd.f32 %v5137, %v390
      %v5170 = vadd.f32 %v5138, %v391
      %v5171 = vadd.f32 %v5139, %v392
      %v5172 = vadd.f32 %v5140, %v393
      %v5173 = vadd.f32 %v5141, %v394
      %v5174 = vadd.f32 %v5142, %v395
      %v5175 = vadd.f32 %v5143, %v396
      %v5176 = vadd.f32 %v5144, %v397
      %v5177 = vadd.f32 %v5145, %v398
      %v5178 = vadd.f32 %v5146, %v399
      %v5179 = vadd.f32 %v5147, %v400
      %v5180 = vmax.f32 %v5148, 0.0
      %v5181 = vmax.f32 %v5149, 0.0
      %v5182 = vmax.f32 %v5150, 0.0
      %v5183 = vmax.f32 %v5151, 0.0
      %v5184 = vmax.f32 %v5152, 0.0
      %v5185 = vmax.f32 %v5153, 0.0
      %v5186 = vmax.f32 %v5154, 0.0
      %v5187 = vmax.f32 %v5155, 0.0
      %v5188 = vmax.f32 %v5156, 0.0
      %v5189 = vmax.f32 %v5157, 0.0
      %v5190 = vmax.f32 %v5158, 0.0
      %v5191 = vmax.f32 %v5159, 0.0
      %v5192 = vmax.f32 %v5160, 0.0
      %v5193 = vmax.f32 %v5161, 0.0
      %v5194 = vmax.f32 %v5162, 0.0
      %v5195 = vmax.f32 %v5163, 0.0
      %v5196 = vmax.f32 %v5164, 0.0
      %v5197 = vmax.f32 %v5165, 0.0
      %v5198 = vmax.f32 %v5166, 0.0
      %v5199 = vmax.f32 %v5167, 0.0
      %v5200 = vmax.f32 %v5168, 0.0
      %v5201 = vmax.f32 %v5169, 0.0
      %v5202 = vmax.f32 %v5170, 0.0
      %v5203 = vmax.f32 %v5171, 0.0
      %v5204 = vmax.f32 %v5172, 0.0
      %v5205 = vmax.f32 %v5173, 0.0
      %v5206 = vmax.f32 %v5174, 0.0
      %v5207 = vmax.f32 %v5175, 0.0
      %v5208 = vmax.f32 %v5176, 0.0
      %v5209 = vmax.f32 %v5177, 0.0
      %v5210 = vmax.f32 %v5178, 0.0
      %v5211 = vmax.f32 %v5179, 0.0
      %5212 = vst.msk [vmem:[%s334] sm:$0xff] %vm900, %v5180
      %5213 = vst.msk [vmem:[%s334 + $0x8] sm:$0xff] %vm900, %v5181
      %5214 = vst.msk [vmem:[%s334 + $0x10] sm:$0xff] %vm900, %v5182
      %5215 = vst.msk [vmem:[%s334 + $0x18] sm:$0xff] %vm900, %v5183
      %5216 = vst.msk [vmem:[%s334 + $0x20] sm:$0xff] %vm900, %v5184
      %5217 = vst.msk [vmem:[%s334 + $0x28] sm:$0xff] %vm900, %v5185
      %5218 = vst.msk [vmem:[%s334 + $0x30] sm:$0xff] %vm900, %v5186
      %5219 = vst.msk [vmem:[%s334 + $0x38] sm:$0xff] %vm900, %v5187
      %5220 = vst.msk [vmem:[%s334 + $0x40] sm:$0xff] %vm900, %v5188
      %5221 = vst.msk [vmem:[%s334 + $0x48] sm:$0xff] %vm900, %v5189
      %5222 = vst.msk [vmem:[%s334 + $0x50] sm:$0xff] %vm900, %v5190
      %5223 = vst.msk [vmem:[%s334 + $0x58] sm:$0xff] %vm900, %v5191
      %5224 = vst.msk [vmem:[%s334 + $0x60] sm:$0xff] %vm900, %v5192
      %5225 = vst.msk [vmem:[%s334 + $0x68] sm:$0xff] %vm900, %v5193
      %5226 = vst.msk [vmem:[%s334 + $0x70] sm:$0xff] %vm900, %v5194
      %5227 = vst.msk [vmem:[%s334 + $0x78] sm:$0xff] %vm900, %v5195
      %5228 = vst.msk [vmem:[%s334 + $0x80] sm:$0xff] %vm900, %v5196
      %5229 = vst.msk [vmem:[%s334 + $0x88] sm:$0xff] %vm900, %v5197
      %5230 = vst.msk [vmem:[%s334 + $0x90] sm:$0xff] %vm900, %v5198
      %5231 = vst.msk [vmem:[%s334 + $0x98] sm:$0xff] %vm900, %v5199
      %5232 = vst.msk [vmem:[%s334 + $0xa0] sm:$0xff] %vm900, %v5200
      %5233 = vst.msk [vmem:[%s334 + $0xa8] sm:$0xff] %vm900, %v5201
      %5234 = vst.msk [vmem:[%s334 + $0xb0] sm:$0xff] %vm900, %v5202
      %5235 = vst.msk [vmem:[%s334 + $0xb8] sm:$0xff] %vm900, %v5203
      %5236 = vst.msk [vmem:[%s334 + $0xc0] sm:$0xff] %vm900, %v5204
      %5237 = vst.msk [vmem:[%s334 + $0xc8] sm:$0xff] %vm900, %v5205
      %5238 = vst.msk [vmem:[%s334 + $0xd0] sm:$0xff] %vm900, %v5206
      %5239 = vst.msk [vmem:[%s334 + $0xd8] sm:$0xff] %vm900, %v5207
      %5240 = vst.msk [vmem:[%s334 + $0xe0] sm:$0xff] %vm900, %v5208
      %5241 = vst.msk [vmem:[%s334 + $0xe8] sm:$0xff] %vm900, %v5209
      %5242 = vst.msk [vmem:[%s334 + $0xf0] sm:$0xff] %vm900, %v5210
      %5243 = vst.msk [vmem:[%s334 + $0xf8] sm:$0xff] %vm900, %v5211
      %s5244 = smul.u32 32, %s20
      %p5245 = scmp.lt.s32.totalorder %s5244, 63
      %s5246 = scalar_select %p5245, %s5244, 63
      %s5247 = smul.addr %s5246, 8
      %s5248 = scalar_lea.vmem %s9, %s5247
      // Predicated region
      $region57: #{basic_block.1} parent=55 // pred_check
        %p5249 = pneg %p232
      $region58: #{basic_block.1} parent=55 // pred_check_branch
        %5251 = sbr.rel (%p5249) target = $region60
      $region59: #{basic_block.1} parent=55 // pred_region
        %s5252 = smul.u32 32, %s20
      $region60: #{basic_block.1} parent=55 // pred_fallthru
        _
    $region56: #{basic_block.1} parent=5 // pred_fallthru
      _
    %p5253 = scmp.le.s32.totalorder 2, %s15
    // Predicated region
    $region61: #{basic_block.1} parent=5 // pred_check
      %p5254 = pneg %p5253
    $region62: #{basic_block.1} parent=5 // pred_check_branch
      %5256 = sbr.rel (%p5254) target = $region64
    $region63: #{basic_block.1} parent=5 // pred_region
      %s5257 = ssub.s32 %s15, 2
      // Predicated region
      $region65: #{basic_block.1} parent=63 // pred_check
        %p5258 = pneg %p238
      $region66: #{basic_block.1} parent=63 // pred_check_branch
        %5260 = sbr.rel (%p5258) target = $region68
      $region67: #{basic_block.1} parent=63 // pred_region
        %s5261 = smul.u32 32, %s21
        %p5262 = scmp.lt.s32.totalorder %s5261, 63
        %s5263 = scalar_select %p5262, %s5261, 63
        %s5264 = smul.addr %s5263, 8
        %s5265 = scalar_lea.vmem %s9, %s5264
      $region68: #{basic_block.1} parent=63 // pred_fallthru
        _
    $region64: #{basic_block.1} parent=5 // pred_fallthru
      _
  $region6: #{basic_block.1} parent=0 // loop_footer
    %s19 = sadd.s32 1, %s15
  $region7: #{basic_block.1} parent=0 // loop_footer_branch
    %14 = sbr.rel target = $region3
  $region8: #{basic_block.1} parent=0 // loop_exit
    _

</llo_original>
